<compile_context>
chip_gen: v7x
topology: tpu7x:2x2x1
jax: 0.10.0
libtpu: 0.0.40
codegen_flags: <defaults>
</compile_context>

<pallas_src>
import numpy as np
import jax
import jax.numpy as jnp
from jax import lax
from jax.experimental import pallas as pl
from jax.experimental.pallas import tpu as pltpu

# ---- static configuration (small shapes consistent with the module) --------
N = 2          # batch
CF = 4         # channels of f (and of c)
CIN = 2 * CF   # in_ch of conv1 (f and c concatenated on channel dim)
CHID = 8       # hid_ch
H = 16
W = 16
P = H * W
NP = N * P     # lane axis of the conv/scale branch
NH = N * H     # row axis of the spatial (UDf / compose) branch
CW = CF * W    # lane axis of the spatial branch

_TAPS = [(dy, dx) for dy in (-1, 0, 1) for dx in (-1, 0, 1)]


# ---------------------------------------------------------------------------
# Host-precomputed 0/1 constants (hoisted out of the kernel per perf review)
# ---------------------------------------------------------------------------
def _build_constants():
    l = np.arange(NP)
    hh = (l % P) // W          # per-image row of each lane
    ww = l % W                 # per-image col of each lane

    # 9 tap-validity masks, pre-broadcast to the conv activation shape.
    masks = np.empty((9, CHID, NP), np.float32)
    for t, (dy, dx) in enumerate(_TAPS):
        v = (hh + dy >= 0) & (hh + dy < H) & (ww + dx >= 0) & (ww + dx < W)
        masks[t] = np.broadcast_to(v.astype(np.float32), (CHID, NP))

    # scale (1, N*P) -> block-diagonal (N*H, N*H) relayout helpers.
    r = np.arange(NH)
    row_sel = ((l[None, :] // P == r[:, None] // H)
               & ((l[None, :] % P) // W == r[:, None] % H)).astype(np.float32)
    gather_w = ((l[:, None] // P == r[None, :] // H)
                & (l[:, None] % W == r[None, :] % H)).astype(np.float32)

    # maxpool2 + up2 along W: block-diagonal per channel, (CF*W, CF*W).
    wi = np.arange(CW)[:, None]
    wo = np.arange(CW)[None, :]
    same_ch = (wi // W) == (wo // W)
    selw = np.stack([
        (same_ch & (wi % W == 2 * ((wo % W) // 2))).astype(np.float32),
        (same_ch & (wi % W == 2 * ((wo % W) // 2) + 1)).astype(np.float32)])

    # maxpool2 + up2 along H: block-diagonal per batch, (N*H, N*H).
    ho = np.arange(NH)[:, None]
    hi = np.arange(NH)[None, :]
    same_n = (ho // H) == (hi // H)
    selh = np.stack([
        (same_n & (hi % H == 2 * ((ho % H) // 2))).astype(np.float32),
        (same_n & (hi % H == 2 * ((ho % H) // 2) + 1)).astype(np.float32)])

    return masks, row_sel, gather_w, selw, selh


_MASKS, _ROW_SEL, _GATHER_W, _SELW, _SELH = [
    jnp.asarray(a) for a in _build_constants()]


# ---------------------------------------------------------------------------
# Fused kernel: scale branch + UDf + compose, single invocation, all in VMEM.
# ---------------------------------------------------------------------------
def fused_kernel(x_ref, fst_ref, cst_ref,
                 w1t_ref, b1_ref, wres_ref, bres_ref, w2t_ref, b2_ref,
                 masks_ref, rowsel_ref, gather_ref, selw_ref, selh_ref,
                 o_ref):
    f32 = jnp.float32

    def conv3x3(z, conv_idx):
        # zero-padded 3x3 conv on the (CHID, N*P) layout; one MXU dot per dy
        # group so at most 3 rolled+masked (CHID, N*P) tiles are live at once.
        acc = None
        for dyi in range(3):
            cols = []
            for dxi in range(3):
                dy, dx = dyi - 1, dxi - 1
                off = dy * W + dx
                if off == 0:
                    cols.append(z)
                else:
                    zt = pltpu.roll(z, shift=(-off) % NP, axis=1)
                    cols.append(masks_ref[dyi * 3 + dxi] * zt)
            zg = jnp.concatenate(cols, axis=0)                     # (3*CHID, N*P)
            part = jnp.dot(wres_ref[conv_idx, dyi], zg,
                           preferred_element_type=f32)             # (CHID, N*P)
            acc = part if acc is None else acc + part
        return acc + bres_ref[conv_idx]

    # TODO(synk): resBlock is not defined in the provided source; assumed the
    # standard form relu(conv3x3(relu(conv3x3(x))) + x).
    def resblock(z, j):
        y = jnp.maximum(conv3x3(z, 2 * j), 0.0)
        y = conv3x3(y, 2 * j + 1)
        return jnp.maximum(z + y, 0.0)

    # ---- scale branch: conv1 -> res1 -> res2 -> conv2 -> sigmoid, (., N*P) --
    h = jnp.dot(w1t_ref[...], x_ref[...], preferred_element_type=f32) + b1_ref[...]
    h = resblock(h, 0)
    h = resblock(h, 1)
    s = jax.nn.sigmoid(
        jnp.dot(w2t_ref[...], h, preferred_element_type=f32) + b2_ref[...])  # (1, N*P)

    # ---- relayout scale (1, N*P) -> block-diagonal (N*H, N*H) ---------------
    s_rows = rowsel_ref[...] * jnp.broadcast_to(s, (NH, NP))
    scale_bd = jnp.dot(s_rows, gather_ref[...], preferred_element_type=f32)   # (NH, NH)

    # ---- UDf = up2(maxpool2(f)): channel/batch-stacked selection dots -------
    fst = fst_ref[...]                                                        # (NH, CF*W)
    uw = jnp.maximum(jnp.dot(fst, selw_ref[0], preferred_element_type=f32),
                     jnp.dot(fst, selw_ref[1], preferred_element_type=f32))
    udf = jnp.maximum(jnp.dot(selh_ref[0], uw, preferred_element_type=f32),
                      jnp.dot(selh_ref[1], uw, preferred_element_type=f32))

    # ---- compose: out = f + scale @ (c - UDf), one wide dot, one store ------
    d = cst_ref[...] - udf
    o_ref[...] = fst + jnp.dot(scale_bd, d, preferred_element_type=f32)


# ---------------------------------------------------------------------------
# Wrapper
# ---------------------------------------------------------------------------
def scale_compositor(f, c, params):
    (w1, b1, r1wa, r1ba, r1wb, r1bb,
     r2wa, r2ba, r2wb, r2bb, w2, b2) = params

    def pack3(w9):
        # (9, Ci, Co) -> (3, Co, 3*Ci): per-dy weight slabs, column = dx*Ci + i
        m = w9.transpose(2, 0, 1).reshape(CHID, 9 * CHID)
        return m.reshape(CHID, 3, 3 * CHID).transpose(1, 0, 2)

    w1t = w1.T                                                    # (CHID, CIN)
    b1c = b1.reshape(CHID, 1)
    wres = jnp.stack([pack3(r1wa), pack3(r1wb),
                      pack3(r2wa), pack3(r2wb)])                  # (4, 3, CHID, 3*CHID)
    bres = jnp.stack([r1ba.reshape(CHID, 1), r1bb.reshape(CHID, 1),
                      r2ba.reshape(CHID, 1), r2bb.reshape(CHID, 1)])  # (4, CHID, 1)
    w2t = w2.T                                                    # (1, CHID)
    b2c = b2.reshape(1, 1)

    # conv input: channels on sublanes, batch folded into the 512-wide lane axis
    x = (jnp.concatenate([f, c], axis=1).reshape(N, CIN, P)
         .transpose(1, 0, 2).reshape(CIN, NP))
    # spatial tensors: batch*rows on sublanes, channels*cols on lanes (lane-dense)
    fst = f.transpose(0, 2, 1, 3).reshape(NH, CW)
    cst = c.transpose(0, 2, 1, 3).reshape(NH, CW)

    def _spec(shape):
        zeros = (0,) * len(shape)
        return pl.BlockSpec(shape, lambda i: zeros)

    args = (x, fst, cst, w1t, b1c, wres, bres, w2t, b2c,
            _MASKS, _ROW_SEL, _GATHER_W, _SELW, _SELH)

    out = pl.pallas_call(
        fused_kernel,
        grid=(1,),
        in_specs=[_spec(a.shape) for a in args],
        out_specs=_spec((NH, CW)),
        out_shape=jax.ShapeDtypeStruct((NH, CW), jnp.float32),
        compiler_params=pltpu.CompilerParams(
            dimension_semantics=("arbitrary",)),
    )(*args)

    # (N*H, CF*W) -> (N, CF, H, W)
    return out.reshape(N, H, CF, W).transpose(0, 2, 1, 3)


# ---------------------------------------------------------------------------
# Pure-JAX reference (mirrors the PyTorch forward, NCHW) for validation
# ---------------------------------------------------------------------------
def reference(f, c, params):
    (w1, b1, r1wa, r1ba, r1wb, r1bb,
     r2wa, r2ba, r2wb, r2bb, w2, b2) = params
    hp = lax.Precision.HIGHEST

    def conv1x1(z, w, b):
        return jnp.einsum('nchw,co->nohw', z, w, precision=hp) + b[0][None, :, None, None]

    def conv3x3(z, w9, b):
        zp = jnp.pad(z, ((0, 0), (0, 0), (1, 1), (1, 1)))
        out = jnp.zeros((z.shape[0], w9.shape[2], H, W), jnp.float32)
        out = out + b[0][None, :, None, None]
        for t in range(9):
            ky, kx = t // 3, t % 3
            patch = zp[:, :, ky:ky + H, kx:kx + W]
            out = out + jnp.einsum('nchw,co->nohw', patch, w9[t], precision=hp)
        return out

    def resblock(z, wa, ba, wb, bb):
        y = jax.nn.relu(conv3x3(z, wa, ba))
        y = conv3x3(y, wb, bb)
        return jax.nn.relu(z + y)

    x = jnp.concatenate([f, c], axis=1)
    h = conv1x1(x, w1, b1)
    h = resblock(h, r1wa, r1ba, r1wb, r1bb)
    h = resblock(h, r2wa, r2ba, r2wb, r2bb)
    scale = jax.nn.sigmoid(conv1x1(h, w2, b2))                     # (N, 1, H, W)
    m = f.reshape(N, CF, H // 2, 2, W // 2, 2).max(axis=(3, 5))
    udf = jnp.repeat(jnp.repeat(m, 2, axis=2), 2, axis=3)
    return (f - jnp.matmul(scale, udf, precision=hp)
              + jnp.matmul(scale, c, precision=hp))


if __name__ == "__main__":
    key = jax.random.PRNGKey(0)
    ks = jax.random.split(key, 16)

    def nrm(k, shape, s=0.1):
        return (s * jax.random.normal(k, shape)).astype(jnp.float32)

    params = (
        nrm(ks[0], (CIN, CHID)), nrm(ks[1], (1, CHID)),      # conv1
        nrm(ks[2], (9, CHID, CHID)), nrm(ks[3], (1, CHID)),  # resblock1 conv a
        nrm(ks[4], (9, CHID, CHID)), nrm(ks[5], (1, CHID)),  # resblock1 conv b
        nrm(ks[6], (9, CHID, CHID)), nrm(ks[7], (1, CHID)),  # resblock2 conv a
        nrm(ks[8], (9, CHID, CHID)), nrm(ks[9], (1, CHID)),  # resblock2 conv b
        nrm(ks[10], (CHID, 1)), nrm(ks[11], (1, 1)),         # conv2
    )
    f = jax.random.normal(ks[12], (N, CF, H, W), dtype=jnp.float32)
    c = jax.random.normal(ks[13], (N, CF, H, W), dtype=jnp.float32)

    out = scale_compositor(f, c, params)
    out = jax.block_until_ready(out)

    ref = reference(f, c, params)
    assert out.shape == (N, CF, H, W)
    err = float(jnp.max(jnp.abs(out - ref)))
    # All selection matmuls are exact 0/1; residual error is f32 matmul /
    # transcendental rounding only (tightened from 2e-2).
    assert err < 1e-3, f"mismatch vs reference: max abs err = {err}"
    print("KERNEL_OK")
</pallas_src>

<mosaic_0001>
module attributes {stable_mosaic.version = 11 : i64} {
  func.func @fused_kernel(%arg0: i32, %arg1: memref<8x512xf32, #tpu.memory_space<vmem>>, %arg2: memref<32x64xf32, #tpu.memory_space<vmem>>, %arg3: memref<32x64xf32, #tpu.memory_space<vmem>>, %arg4: memref<8x8xf32, #tpu.memory_space<vmem>>, %arg5: memref<8x1xf32, #tpu.memory_space<vmem>>, %arg6: memref<4x3x8x24xf32, #tpu.memory_space<vmem>>, %arg7: memref<4x8x1xf32, #tpu.memory_space<vmem>>, %arg8: memref<1x8xf32, #tpu.memory_space<vmem>>, %arg9: memref<1x1xf32, #tpu.memory_space<vmem>>, %arg10: memref<9x8x512xf32, #tpu.memory_space<vmem>>, %arg11: memref<32x512xf32, #tpu.memory_space<vmem>>, %arg12: memref<512x32xf32, #tpu.memory_space<vmem>>, %arg13: memref<2x64x64xf32, #tpu.memory_space<vmem>>, %arg14: memref<2x32x32xf32, #tpu.memory_space<vmem>>, %arg15: memref<32x64xf32, #tpu.memory_space<vmem>>) attributes {dimension_semantics = [#tpu.dimension_semantics<arbitrary>], iteration_bounds = array<i64: 1>, scalar_prefetch = 0 : i64, scratch_operands = 0 : i64, tpu.core_type = #tpu.core_type<tc>, window_params = [{pipeline_mode = #tpu.pipeline_mode<synchronous>, transform_indices = @transform_0, window_bounds = array<i64: 8, 512>}, {pipeline_mode = #tpu.pipeline_mode<synchronous>, transform_indices = @transform_1, window_bounds = array<i64: 32, 64>}, {pipeline_mode = #tpu.pipeline_mode<synchronous>, transform_indices = @transform_2, window_bounds = array<i64: 32, 64>}, {pipeline_mode = #tpu.pipeline_mode<synchronous>, transform_indices = @transform_3, window_bounds = array<i64: 8, 8>}, {pipeline_mode = #tpu.pipeline_mode<synchronous>, transform_indices = @transform_4, window_bounds = array<i64: 8, 1>}, {pipeline_mode = #tpu.pipeline_mode<synchronous>, transform_indices = @transform_5, window_bounds = array<i64: 4, 3, 8, 24>}, {pipeline_mode = #tpu.pipeline_mode<synchronous>, transform_indices = @transform_6, window_bounds = array<i64: 4, 8, 1>}, {pipeline_mode = #tpu.pipeline_mode<synchronous>, transform_indices = @transform_7, window_bounds = array<i64: 1, 8>}, {pipeline_mode = #tpu.pipeline_mode<synchronous>, transform_indices = @transform_8, window_bounds = array<i64: 1, 1>}, {pipeline_mode = #tpu.pipeline_mode<synchronous>, transform_indices = @transform_9, window_bounds = array<i64: 9, 8, 512>}, {pipeline_mode = #tpu.pipeline_mode<synchronous>, transform_indices = @transform_10, window_bounds = array<i64: 32, 512>}, {pipeline_mode = #tpu.pipeline_mode<synchronous>, transform_indices = @transform_11, window_bounds = array<i64: 512, 32>}, {pipeline_mode = #tpu.pipeline_mode<synchronous>, transform_indices = @transform_12, window_bounds = array<i64: 2, 64, 64>}, {pipeline_mode = #tpu.pipeline_mode<synchronous>, transform_indices = @transform_13, window_bounds = array<i64: 2, 32, 32>}, {pipeline_mode = #tpu.pipeline_mode<synchronous>, transform_indices = @transform_14, window_bounds = array<i64: 32, 64>}]} {
    %c0 = arith.constant 0 : index
    %c0_0 = arith.constant 0 : index
    %0 = vector.load %arg4[%c0, %c0_0] : memref<8x8xf32, #tpu.memory_space<vmem>>, vector<8x8xf32>
    %c0_1 = arith.constant 0 : index
    %c0_2 = arith.constant 0 : index
    %1 = vector.load %arg1[%c0_1, %c0_2] : memref<8x512xf32, #tpu.memory_space<vmem>>, vector<8x512xf32>
    %cst = arith.constant dense<0.000000e+00> : vector<8x512xf32>
    %2 = tpu.matmul %0, %1, %cst {dimension_numbers = #tpu.dot_dimension_numbers<[1], [0], [0], [1], [0, 0, 1, 1], [], []>} : vector<8x8xf32>, vector<8x512xf32>, vector<8x512xf32> -> vector<8x512xf32>
    %c0_3 = arith.constant 0 : index
    %c0_4 = arith.constant 0 : index
    %3 = vector.load %arg5[%c0_3, %c0_4] : memref<8x1xf32, #tpu.memory_space<vmem>>, vector<8x1xf32>
    %4 = vector.broadcast %3 : vector<8x1xf32> to vector<8x512xf32>
    %5 = arith.addf %2, %4 : vector<8x512xf32>
    %c17_i32 = arith.constant 17 : i32
    %6 = tpu.dynamic_rotate %5 by %c17_i32 dim 1 : vector<8x512xf32>, i32 -> vector<8x512xf32>
    %c0_5 = arith.constant 0 : index
    %c0_6 = arith.constant 0 : index
    %c0_7 = arith.constant 0 : index
    %7 = vector.load %arg10[%c0_5, %c0_6, %c0_7] : memref<9x8x512xf32, #tpu.memory_space<vmem>>, vector<1x8x512xf32>
    %8 = vector.shape_cast %7 : vector<1x8x512xf32> to vector<8x512xf32>
    %9 = arith.mulf %8, %6 : vector<8x512xf32>
    %c16_i32 = arith.constant 16 : i32
    %10 = tpu.dynamic_rotate %5 by %c16_i32 dim 1 : vector<8x512xf32>, i32 -> vector<8x512xf32>
    %c1 = arith.constant 1 : index
    %c0_8 = arith.constant 0 : index
    %c0_9 = arith.constant 0 : index
    %11 = vector.load %arg10[%c1, %c0_8, %c0_9] : memref<9x8x512xf32, #tpu.memory_space<vmem>>, vector<1x8x512xf32>
    %12 = vector.shape_cast %11 : vector<1x8x512xf32> to vector<8x512xf32>
    %13 = arith.mulf %12, %10 : vector<8x512xf32>
    %c15_i32 = arith.constant 15 : i32
    %14 = tpu.dynamic_rotate %5 by %c15_i32 dim 1 : vector<8x512xf32>, i32 -> vector<8x512xf32>
    %c2 = arith.constant 2 : index
    %c0_10 = arith.constant 0 : index
    %c0_11 = arith.constant 0 : index
    %15 = vector.load %arg10[%c2, %c0_10, %c0_11] : memref<9x8x512xf32, #tpu.memory_space<vmem>>, vector<1x8x512xf32>
    %16 = vector.shape_cast %15 : vector<1x8x512xf32> to vector<8x512xf32>
    %17 = arith.mulf %16, %14 : vector<8x512xf32>
    %18 = tpu.concatenate %9, %13, %17 in 0 : vector<8x512xf32>, vector<8x512xf32>, vector<8x512xf32> -> vector<24x512xf32>
    %c0_12 = arith.constant 0 : index
    %c0_13 = arith.constant 0 : index
    %c0_14 = arith.constant 0 : index
    %c0_15 = arith.constant 0 : index
    %19 = vector.load %arg6[%c0_12, %c0_13, %c0_14, %c0_15] : memref<4x3x8x24xf32, #tpu.memory_space<vmem>>, vector<1x1x8x24xf32>
    %20 = vector.shape_cast %19 : vector<1x1x8x24xf32> to vector<8x24xf32>
    %cst_16 = arith.constant dense<0.000000e+00> : vector<8x512xf32>
    %21 = tpu.matmul %20, %18, %cst_16 {dimension_numbers = #tpu.dot_dimension_numbers<[1], [0], [0], [1], [0, 0, 1, 1], [], []>} : vector<8x24xf32>, vector<24x512xf32>, vector<8x512xf32> -> vector<8x512xf32>
    %c1_i32 = arith.constant 1 : i32
    %22 = tpu.dynamic_rotate %5 by %c1_i32 dim 1 : vector<8x512xf32>, i32 -> vector<8x512xf32>
    %c3 = arith.constant 3 : index
    %c0_17 = arith.constant 0 : index
    %c0_18 = arith.constant 0 : index
    %23 = vector.load %arg10[%c3, %c0_17, %c0_18] : memref<9x8x512xf32, #tpu.memory_space<vmem>>, vector<1x8x512xf32>
    %24 = vector.shape_cast %23 : vector<1x8x512xf32> to vector<8x512xf32>
    %25 = arith.mulf %24, %22 : vector<8x512xf32>
    %c511_i32 = arith.constant 511 : i32
    %26 = tpu.dynamic_rotate %5 by %c511_i32 dim 1 : vector<8x512xf32>, i32 -> vector<8x512xf32>
    %c5 = arith.constant 5 : index
    %c0_19 = arith.constant 0 : index
    %c0_20 = arith.constant 0 : index
    %27 = vector.load %arg10[%c5, %c0_19, %c0_20] : memref<9x8x512xf32, #tpu.memory_space<vmem>>, vector<1x8x512xf32>
    %28 = vector.shape_cast %27 : vector<1x8x512xf32> to vector<8x512xf32>
    %29 = arith.mulf %28, %26 : vector<8x512xf32>
    %30 = tpu.concatenate %25, %5, %29 in 0 : vector<8x512xf32>, vector<8x512xf32>, vector<8x512xf32> -> vector<24x512xf32>
    %c0_21 = arith.constant 0 : index
    %c1_22 = arith.constant 1 : index
    %c0_23 = arith.constant 0 : index
    %c0_24 = arith.constant 0 : index
    %31 = vector.load %arg6[%c0_21, %c1_22, %c0_23, %c0_24] : memref<4x3x8x24xf32, #tpu.memory_space<vmem>>, vector<1x1x8x24xf32>
    %32 = vector.shape_cast %31 : vector<1x1x8x24xf32> to vector<8x24xf32>
    %cst_25 = arith.constant dense<0.000000e+00> : vector<8x512xf32>
    %33 = tpu.matmul %32, %30, %cst_25 {dimension_numbers = #tpu.dot_dimension_numbers<[1], [0], [0], [1], [0, 0, 1, 1], [], []>} : vector<8x24xf32>, vector<24x512xf32>, vector<8x512xf32> -> vector<8x512xf32>
    %34 = arith.addf %21, %33 : vector<8x512xf32>
    %c497_i32 = arith.constant 497 : i32
    %35 = tpu.dynamic_rotate %5 by %c497_i32 dim 1 : vector<8x512xf32>, i32 -> vector<8x512xf32>
    %c6 = arith.constant 6 : index
    %c0_26 = arith.constant 0 : index
    %c0_27 = arith.constant 0 : index
    %36 = vector.load %arg10[%c6, %c0_26, %c0_27] : memref<9x8x512xf32, #tpu.memory_space<vmem>>, vector<1x8x512xf32>
    %37 = vector.shape_cast %36 : vector<1x8x512xf32> to vector<8x512xf32>
    %38 = arith.mulf %37, %35 : vector<8x512xf32>
    %c496_i32 = arith.constant 496 : i32
    %39 = tpu.dynamic_rotate %5 by %c496_i32 dim 1 : vector<8x512xf32>, i32 -> vector<8x512xf32>
    %c7 = arith.constant 7 : index
    %c0_28 = arith.constant 0 : index
    %c0_29 = arith.constant 0 : index
    %40 = vector.load %arg10[%c7, %c0_28, %c0_29] : memref<9x8x512xf32, #tpu.memory_space<vmem>>, vector<1x8x512xf32>
    %41 = vector.shape_cast %40 : vector<1x8x512xf32> to vector<8x512xf32>
    %42 = arith.mulf %41, %39 : vector<8x512xf32>
    %c495_i32 = arith.constant 495 : i32
    %43 = tpu.dynamic_rotate %5 by %c495_i32 dim 1 : vector<8x512xf32>, i32 -> vector<8x512xf32>
    %c8 = arith.constant 8 : index
    %c0_30 = arith.constant 0 : index
    %c0_31 = arith.constant 0 : index
    %44 = vector.load %arg10[%c8, %c0_30, %c0_31] : memref<9x8x512xf32, #tpu.memory_space<vmem>>, vector<1x8x512xf32>
    %45 = vector.shape_cast %44 : vector<1x8x512xf32> to vector<8x512xf32>
    %46 = arith.mulf %45, %43 : vector<8x512xf32>
    %47 = tpu.concatenate %38, %42, %46 in 0 : vector<8x512xf32>, vector<8x512xf32>, vector<8x512xf32> -> vector<24x512xf32>
    %c0_32 = arith.constant 0 : index
    %c2_33 = arith.constant 2 : index
    %c0_34 = arith.constant 0 : index
    %c0_35 = arith.constant 0 : index
    %48 = vector.load %arg6[%c0_32, %c2_33, %c0_34, %c0_35] : memref<4x3x8x24xf32, #tpu.memory_space<vmem>>, vector<1x1x8x24xf32>
    %49 = vector.shape_cast %48 : vector<1x1x8x24xf32> to vector<8x24xf32>
    %cst_36 = arith.constant dense<0.000000e+00> : vector<8x512xf32>
    %50 = tpu.matmul %49, %47, %cst_36 {dimension_numbers = #tpu.dot_dimension_numbers<[1], [0], [0], [1], [0, 0, 1, 1], [], []>} : vector<8x24xf32>, vector<24x512xf32>, vector<8x512xf32> -> vector<8x512xf32>
    %51 = arith.addf %34, %50 : vector<8x512xf32>
    %c0_37 = arith.constant 0 : index
    %c0_38 = arith.constant 0 : index
    %c0_39 = arith.constant 0 : index
    %52 = vector.load %arg7[%c0_37, %c0_38, %c0_39] : memref<4x8x1xf32, #tpu.memory_space<vmem>>, vector<1x8x1xf32>
    %53 = vector.shape_cast %52 : vector<1x8x1xf32> to vector<8x1xf32>
    %54 = vector.broadcast %53 : vector<8x1xf32> to vector<8x512xf32>
    %55 = arith.addf %51, %54 : vector<8x512xf32>
    %cst_40 = arith.constant 0.000000e+00 : f32
    %56 = vector.broadcast %cst_40 : f32 to vector<8x512xf32>
    %57 = arith.maximumf %55, %56 : vector<8x512xf32>
    %c17_i32_41 = arith.constant 17 : i32
    %58 = tpu.dynamic_rotate %57 by %c17_i32_41 dim 1 : vector<8x512xf32>, i32 -> vector<8x512xf32>
    %c0_42 = arith.constant 0 : index
    %c0_43 = arith.constant 0 : index
    %c0_44 = arith.constant 0 : index
    %59 = vector.load %arg10[%c0_42, %c0_43, %c0_44] : memref<9x8x512xf32, #tpu.memory_space<vmem>>, vector<1x8x512xf32>
    %60 = vector.shape_cast %59 : vector<1x8x512xf32> to vector<8x512xf32>
    %61 = arith.mulf %60, %58 : vector<8x512xf32>
    %c16_i32_45 = arith.constant 16 : i32
    %62 = tpu.dynamic_rotate %57 by %c16_i32_45 dim 1 : vector<8x512xf32>, i32 -> vector<8x512xf32>
    %c1_46 = arith.constant 1 : index
    %c0_47 = arith.constant 0 : index
    %c0_48 = arith.constant 0 : index
    %63 = vector.load %arg10[%c1_46, %c0_47, %c0_48] : memref<9x8x512xf32, #tpu.memory_space<vmem>>, vector<1x8x512xf32>
    %64 = vector.shape_cast %63 : vector<1x8x512xf32> to vector<8x512xf32>
    %65 = arith.mulf %64, %62 : vector<8x512xf32>
    %c15_i32_49 = arith.constant 15 : i32
    %66 = tpu.dynamic_rotate %57 by %c15_i32_49 dim 1 : vector<8x512xf32>, i32 -> vector<8x512xf32>
    %c2_50 = arith.constant 2 : index
    %c0_51 = arith.constant 0 : index
    %c0_52 = arith.constant 0 : index
    %67 = vector.load %arg10[%c2_50, %c0_51, %c0_52] : memref<9x8x512xf32, #tpu.memory_space<vmem>>, vector<1x8x512xf32>
    %68 = vector.shape_cast %67 : vector<1x8x512xf32> to vector<8x512xf32>
    %69 = arith.mulf %68, %66 : vector<8x512xf32>
    %70 = tpu.concatenate %61, %65, %69 in 0 : vector<8x512xf32>, vector<8x512xf32>, vector<8x512xf32> -> vector<24x512xf32>
    %c1_53 = arith.constant 1 : index
    %c0_54 = arith.constant 0 : index
    %c0_55 = arith.constant 0 : index
    %c0_56 = arith.constant 0 : index
    %71 = vector.load %arg6[%c1_53, %c0_54, %c0_55, %c0_56] : memref<4x3x8x24xf32, #tpu.memory_space<vmem>>, vector<1x1x8x24xf32>
    %72 = vector.shape_cast %71 : vector<1x1x8x24xf32> to vector<8x24xf32>
    %cst_57 = arith.constant dense<0.000000e+00> : vector<8x512xf32>
    %73 = tpu.matmul %72, %70, %cst_57 {dimension_numbers = #tpu.dot_dimension_numbers<[1], [0], [0], [1], [0, 0, 1, 1], [], []>} : vector<8x24xf32>, vector<24x512xf32>, vector<8x512xf32> -> vector<8x512xf32>
    %c1_i32_58 = arith.constant 1 : i32
    %74 = tpu.dynamic_rotate %57 by %c1_i32_58 dim 1 : vector<8x512xf32>, i32 -> vector<8x512xf32>
    %c3_59 = arith.constant 3 : index
    %c0_60 = arith.constant 0 : index
    %c0_61 = arith.constant 0 : index
    %75 = vector.load %arg10[%c3_59, %c0_60, %c0_61] : memref<9x8x512xf32, #tpu.memory_space<vmem>>, vector<1x8x512xf32>
    %76 = vector.shape_cast %75 : vector<1x8x512xf32> to vector<8x512xf32>
    %77 = arith.mulf %76, %74 : vector<8x512xf32>
    %c511_i32_62 = arith.constant 511 : i32
    %78 = tpu.dynamic_rotate %57 by %c511_i32_62 dim 1 : vector<8x512xf32>, i32 -> vector<8x512xf32>
    %c5_63 = arith.constant 5 : index
    %c0_64 = arith.constant 0 : index
    %c0_65 = arith.constant 0 : index
    %79 = vector.load %arg10[%c5_63, %c0_64, %c0_65] : memref<9x8x512xf32, #tpu.memory_space<vmem>>, vector<1x8x512xf32>
    %80 = vector.shape_cast %79 : vector<1x8x512xf32> to vector<8x512xf32>
    %81 = arith.mulf %80, %78 : vector<8x512xf32>
    %82 = tpu.concatenate %77, %57, %81 in 0 : vector<8x512xf32>, vector<8x512xf32>, vector<8x512xf32> -> vector<24x512xf32>
    %c1_66 = arith.constant 1 : index
    %c1_67 = arith.constant 1 : index
    %c0_68 = arith.constant 0 : index
    %c0_69 = arith.constant 0 : index
    %83 = vector.load %arg6[%c1_66, %c1_67, %c0_68, %c0_69] : memref<4x3x8x24xf32, #tpu.memory_space<vmem>>, vector<1x1x8x24xf32>
    %84 = vector.shape_cast %83 : vector<1x1x8x24xf32> to vector<8x24xf32>
    %cst_70 = arith.constant dense<0.000000e+00> : vector<8x512xf32>
    %85 = tpu.matmul %84, %82, %cst_70 {dimension_numbers = #tpu.dot_dimension_numbers<[1], [0], [0], [1], [0, 0, 1, 1], [], []>} : vector<8x24xf32>, vector<24x512xf32>, vector<8x512xf32> -> vector<8x512xf32>
    %86 = arith.addf %73, %85 : vector<8x512xf32>
    %c497_i32_71 = arith.constant 497 : i32
    %87 = tpu.dynamic_rotate %57 by %c497_i32_71 dim 1 : vector<8x512xf32>, i32 -> vector<8x512xf32>
    %c6_72 = arith.constant 6 : index
    %c0_73 = arith.constant 0 : index
    %c0_74 = arith.constant 0 : index
    %88 = vector.load %arg10[%c6_72, %c0_73, %c0_74] : memref<9x8x512xf32, #tpu.memory_space<vmem>>, vector<1x8x512xf32>
    %89 = vector.shape_cast %88 : vector<1x8x512xf32> to vector<8x512xf32>
    %90 = arith.mulf %89, %87 : vector<8x512xf32>
    %c496_i32_75 = arith.constant 496 : i32
    %91 = tpu.dynamic_rotate %57 by %c496_i32_75 dim 1 : vector<8x512xf32>, i32 -> vector<8x512xf32>
    %c7_76 = arith.constant 7 : index
    %c0_77 = arith.constant 0 : index
    %c0_78 = arith.constant 0 : index
    %92 = vector.load %arg10[%c7_76, %c0_77, %c0_78] : memref<9x8x512xf32, #tpu.memory_space<vmem>>, vector<1x8x512xf32>
    %93 = vector.shape_cast %92 : vector<1x8x512xf32> to vector<8x512xf32>
    %94 = arith.mulf %93, %91 : vector<8x512xf32>
    %c495_i32_79 = arith.constant 495 : i32
    %95 = tpu.dynamic_rotate %57 by %c495_i32_79 dim 1 : vector<8x512xf32>, i32 -> vector<8x512xf32>
    %c8_80 = arith.constant 8 : index
    %c0_81 = arith.constant 0 : index
    %c0_82 = arith.constant 0 : index
    %96 = vector.load %arg10[%c8_80, %c0_81, %c0_82] : memref<9x8x512xf32, #tpu.memory_space<vmem>>, vector<1x8x512xf32>
    %97 = vector.shape_cast %96 : vector<1x8x512xf32> to vector<8x512xf32>
    %98 = arith.mulf %97, %95 : vector<8x512xf32>
    %99 = tpu.concatenate %90, %94, %98 in 0 : vector<8x512xf32>, vector<8x512xf32>, vector<8x512xf32> -> vector<24x512xf32>
    %c1_83 = arith.constant 1 : index
    %c2_84 = arith.constant 2 : index
    %c0_85 = arith.constant 0 : index
    %c0_86 = arith.constant 0 : index
    %100 = vector.load %arg6[%c1_83, %c2_84, %c0_85, %c0_86] : memref<4x3x8x24xf32, #tpu.memory_space<vmem>>, vector<1x1x8x24xf32>
    %101 = vector.shape_cast %100 : vector<1x1x8x24xf32> to vector<8x24xf32>
    %cst_87 = arith.constant dense<0.000000e+00> : vector<8x512xf32>
    %102 = tpu.matmul %101, %99, %cst_87 {dimension_numbers = #tpu.dot_dimension_numbers<[1], [0], [0], [1], [0, 0, 1, 1], [], []>} : vector<8x24xf32>, vector<24x512xf32>, vector<8x512xf32> -> vector<8x512xf32>
    %103 = arith.addf %86, %102 : vector<8x512xf32>
    %c1_88 = arith.constant 1 : index
    %c0_89 = arith.constant 0 : index
    %c0_90 = arith.constant 0 : index
    %104 = vector.load %arg7[%c1_88, %c0_89, %c0_90] : memref<4x8x1xf32, #tpu.memory_space<vmem>>, vector<1x8x1xf32>
    %105 = vector.shape_cast %104 : vector<1x8x1xf32> to vector<8x1xf32>
    %106 = vector.broadcast %105 : vector<8x1xf32> to vector<8x512xf32>
    %107 = arith.addf %103, %106 : vector<8x512xf32>
    %108 = arith.addf %5, %107 : vector<8x512xf32>
    %cst_91 = arith.constant 0.000000e+00 : f32
    %109 = vector.broadcast %cst_91 : f32 to vector<8x512xf32>
    %110 = arith.maximumf %108, %109 : vector<8x512xf32>
    %c17_i32_92 = arith.constant 17 : i32
    %111 = tpu.dynamic_rotate %110 by %c17_i32_92 dim 1 : vector<8x512xf32>, i32 -> vector<8x512xf32>
    %c0_93 = arith.constant 0 : index
    %c0_94 = arith.constant 0 : index
    %c0_95 = arith.constant 0 : index
    %112 = vector.load %arg10[%c0_93, %c0_94, %c0_95] : memref<9x8x512xf32, #tpu.memory_space<vmem>>, vector<1x8x512xf32>
    %113 = vector.shape_cast %112 : vector<1x8x512xf32> to vector<8x512xf32>
    %114 = arith.mulf %113, %111 : vector<8x512xf32>
    %c16_i32_96 = arith.constant 16 : i32
    %115 = tpu.dynamic_rotate %110 by %c16_i32_96 dim 1 : vector<8x512xf32>, i32 -> vector<8x512xf32>
    %c1_97 = arith.constant 1 : index
    %c0_98 = arith.constant 0 : index
    %c0_99 = arith.constant 0 : index
    %116 = vector.load %arg10[%c1_97, %c0_98, %c0_99] : memref<9x8x512xf32, #tpu.memory_space<vmem>>, vector<1x8x512xf32>
    %117 = vector.shape_cast %116 : vector<1x8x512xf32> to vector<8x512xf32>
    %118 = arith.mulf %117, %115 : vector<8x512xf32>
    %c15_i32_100 = arith.constant 15 : i32
    %119 = tpu.dynamic_rotate %110 by %c15_i32_100 dim 1 : vector<8x512xf32>, i32 -> vector<8x512xf32>
    %c2_101 = arith.constant 2 : index
    %c0_102 = arith.constant 0 : index
    %c0_103 = arith.constant 0 : index
    %120 = vector.load %arg10[%c2_101, %c0_102, %c0_103] : memref<9x8x512xf32, #tpu.memory_space<vmem>>, vector<1x8x512xf32>
    %121 = vector.shape_cast %120 : vector<1x8x512xf32> to vector<8x512xf32>
    %122 = arith.mulf %121, %119 : vector<8x512xf32>
    %123 = tpu.concatenate %114, %118, %122 in 0 : vector<8x512xf32>, vector<8x512xf32>, vector<8x512xf32> -> vector<24x512xf32>
    %c2_104 = arith.constant 2 : index
    %c0_105 = arith.constant 0 : index
    %c0_106 = arith.constant 0 : index
    %c0_107 = arith.constant 0 : index
    %124 = vector.load %arg6[%c2_104, %c0_105, %c0_106, %c0_107] : memref<4x3x8x24xf32, #tpu.memory_space<vmem>>, vector<1x1x8x24xf32>
    %125 = vector.shape_cast %124 : vector<1x1x8x24xf32> to vector<8x24xf32>
    %cst_108 = arith.constant dense<0.000000e+00> : vector<8x512xf32>
    %126 = tpu.matmul %125, %123, %cst_108 {dimension_numbers = #tpu.dot_dimension_numbers<[1], [0], [0], [1], [0, 0, 1, 1], [], []>} : vector<8x24xf32>, vector<24x512xf32>, vector<8x512xf32> -> vector<8x512xf32>
    %c1_i32_109 = arith.constant 1 : i32
    %127 = tpu.dynamic_rotate %110 by %c1_i32_109 dim 1 : vector<8x512xf32>, i32 -> vector<8x512xf32>
    %c3_110 = arith.constant 3 : index
    %c0_111 = arith.constant 0 : index
    %c0_112 = arith.constant 0 : index
    %128 = vector.load %arg10[%c3_110, %c0_111, %c0_112] : memref<9x8x512xf32, #tpu.memory_space<vmem>>, vector<1x8x512xf32>
    %129 = vector.shape_cast %128 : vector<1x8x512xf32> to vector<8x512xf32>
    %130 = arith.mulf %129, %127 : vector<8x512xf32>
    %c511_i32_113 = arith.constant 511 : i32
    %131 = tpu.dynamic_rotate %110 by %c511_i32_113 dim 1 : vector<8x512xf32>, i32 -> vector<8x512xf32>
    %c5_114 = arith.constant 5 : index
    %c0_115 = arith.constant 0 : index
    %c0_116 = arith.constant 0 : index
    %132 = vector.load %arg10[%c5_114, %c0_115, %c0_116] : memref<9x8x512xf32, #tpu.memory_space<vmem>>, vector<1x8x512xf32>
    %133 = vector.shape_cast %132 : vector<1x8x512xf32> to vector<8x512xf32>
    %134 = arith.mulf %133, %131 : vector<8x512xf32>
    %135 = tpu.concatenate %130, %110, %134 in 0 : vector<8x512xf32>, vector<8x512xf32>, vector<8x512xf32> -> vector<24x512xf32>
    %c2_117 = arith.constant 2 : index
    %c1_118 = arith.constant 1 : index
    %c0_119 = arith.constant 0 : index
    %c0_120 = arith.constant 0 : index
    %136 = vector.load %arg6[%c2_117, %c1_118, %c0_119, %c0_120] : memref<4x3x8x24xf32, #tpu.memory_space<vmem>>, vector<1x1x8x24xf32>
    %137 = vector.shape_cast %136 : vector<1x1x8x24xf32> to vector<8x24xf32>
    %cst_121 = arith.constant dense<0.000000e+00> : vector<8x512xf32>
    %138 = tpu.matmul %137, %135, %cst_121 {dimension_numbers = #tpu.dot_dimension_numbers<[1], [0], [0], [1], [0, 0, 1, 1], [], []>} : vector<8x24xf32>, vector<24x512xf32>, vector<8x512xf32> -> vector<8x512xf32>
    %139 = arith.addf %126, %138 : vector<8x512xf32>
    %c497_i32_122 = arith.constant 497 : i32
    %140 = tpu.dynamic_rotate %110 by %c497_i32_122 dim 1 : vector<8x512xf32>, i32 -> vector<8x512xf32>
    %c6_123 = arith.constant 6 : index
    %c0_124 = arith.constant 0 : index
    %c0_125 = arith.constant 0 : index
    %141 = vector.load %arg10[%c6_123, %c0_124, %c0_125] : memref<9x8x512xf32, #tpu.memory_space<vmem>>, vector<1x8x512xf32>
    %142 = vector.shape_cast %141 : vector<1x8x512xf32> to vector<8x512xf32>
    %143 = arith.mulf %142, %140 : vector<8x512xf32>
    %c496_i32_126 = arith.constant 496 : i32
    %144 = tpu.dynamic_rotate %110 by %c496_i32_126 dim 1 : vector<8x512xf32>, i32 -> vector<8x512xf32>
    %c7_127 = arith.constant 7 : index
    %c0_128 = arith.constant 0 : index
    %c0_129 = arith.constant 0 : index
    %145 = vector.load %arg10[%c7_127, %c0_128, %c0_129] : memref<9x8x512xf32, #tpu.memory_space<vmem>>, vector<1x8x512xf32>
    %146 = vector.shape_cast %145 : vector<1x8x512xf32> to vector<8x512xf32>
    %147 = arith.mulf %146, %144 : vector<8x512xf32>
    %c495_i32_130 = arith.constant 495 : i32
    %148 = tpu.dynamic_rotate %110 by %c495_i32_130 dim 1 : vector<8x512xf32>, i32 -> vector<8x512xf32>
    %c8_131 = arith.constant 8 : index
    %c0_132 = arith.constant 0 : index
    %c0_133 = arith.constant 0 : index
    %149 = vector.load %arg10[%c8_131, %c0_132, %c0_133] : memref<9x8x512xf32, #tpu.memory_space<vmem>>, vector<1x8x512xf32>
    %150 = vector.shape_cast %149 : vector<1x8x512xf32> to vector<8x512xf32>
    %151 = arith.mulf %150, %148 : vector<8x512xf32>
    %152 = tpu.concatenate %143, %147, %151 in 0 : vector<8x512xf32>, vector<8x512xf32>, vector<8x512xf32> -> vector<24x512xf32>
    %c2_134 = arith.constant 2 : index
    %c2_135 = arith.constant 2 : index
    %c0_136 = arith.constant 0 : index
    %c0_137 = arith.constant 0 : index
    %153 = vector.load %arg6[%c2_134, %c2_135, %c0_136, %c0_137] : memref<4x3x8x24xf32, #tpu.memory_space<vmem>>, vector<1x1x8x24xf32>
    %154 = vector.shape_cast %153 : vector<1x1x8x24xf32> to vector<8x24xf32>
    %cst_138 = arith.constant dense<0.000000e+00> : vector<8x512xf32>
    %155 = tpu.matmul %154, %152, %cst_138 {dimension_numbers = #tpu.dot_dimension_numbers<[1], [0], [0], [1], [0, 0, 1, 1], [], []>} : vector<8x24xf32>, vector<24x512xf32>, vector<8x512xf32> -> vector<8x512xf32>
    %156 = arith.addf %139, %155 : vector<8x512xf32>
    %c2_139 = arith.constant 2 : index
    %c0_140 = arith.constant 0 : index
    %c0_141 = arith.constant 0 : index
    %157 = vector.load %arg7[%c2_139, %c0_140, %c0_141] : memref<4x8x1xf32, #tpu.memory_space<vmem>>, vector<1x8x1xf32>
    %158 = vector.shape_cast %157 : vector<1x8x1xf32> to vector<8x1xf32>
    %159 = vector.broadcast %158 : vector<8x1xf32> to vector<8x512xf32>
    %160 = arith.addf %156, %159 : vector<8x512xf32>
    %cst_142 = arith.constant 0.000000e+00 : f32
    %161 = vector.broadcast %cst_142 : f32 to vector<8x512xf32>
    %162 = arith.maximumf %160, %161 : vector<8x512xf32>
    %c17_i32_143 = arith.constant 17 : i32
    %163 = tpu.dynamic_rotate %162 by %c17_i32_143 dim 1 : vector<8x512xf32>, i32 -> vector<8x512xf32>
    %c0_144 = arith.constant 0 : index
    %c0_145 = arith.constant 0 : index
    %c0_146 = arith.constant 0 : index
    %164 = vector.load %arg10[%c0_144, %c0_145, %c0_146] : memref<9x8x512xf32, #tpu.memory_space<vmem>>, vector<1x8x512xf32>
    %165 = vector.shape_cast %164 : vector<1x8x512xf32> to vector<8x512xf32>
    %166 = arith.mulf %165, %163 : vector<8x512xf32>
    %c16_i32_147 = arith.constant 16 : i32
    %167 = tpu.dynamic_rotate %162 by %c16_i32_147 dim 1 : vector<8x512xf32>, i32 -> vector<8x512xf32>
    %c1_148 = arith.constant 1 : index
    %c0_149 = arith.constant 0 : index
    %c0_150 = arith.constant 0 : index
    %168 = vector.load %arg10[%c1_148, %c0_149, %c0_150] : memref<9x8x512xf32, #tpu.memory_space<vmem>>, vector<1x8x512xf32>
    %169 = vector.shape_cast %168 : vector<1x8x512xf32> to vector<8x512xf32>
    %170 = arith.mulf %169, %167 : vector<8x512xf32>
    %c15_i32_151 = arith.constant 15 : i32
    %171 = tpu.dynamic_rotate %162 by %c15_i32_151 dim 1 : vector<8x512xf32>, i32 -> vector<8x512xf32>
    %c2_152 = arith.constant 2 : index
    %c0_153 = arith.constant 0 : index
    %c0_154 = arith.constant 0 : index
    %172 = vector.load %arg10[%c2_152, %c0_153, %c0_154] : memref<9x8x512xf32, #tpu.memory_space<vmem>>, vector<1x8x512xf32>
    %173 = vector.shape_cast %172 : vector<1x8x512xf32> to vector<8x512xf32>
    %174 = arith.mulf %173, %171 : vector<8x512xf32>
    %175 = tpu.concatenate %166, %170, %174 in 0 : vector<8x512xf32>, vector<8x512xf32>, vector<8x512xf32> -> vector<24x512xf32>
    %c3_155 = arith.constant 3 : index
    %c0_156 = arith.constant 0 : index
    %c0_157 = arith.constant 0 : index
    %c0_158 = arith.constant 0 : index
    %176 = vector.load %arg6[%c3_155, %c0_156, %c0_157, %c0_158] : memref<4x3x8x24xf32, #tpu.memory_space<vmem>>, vector<1x1x8x24xf32>
    %177 = vector.shape_cast %176 : vector<1x1x8x24xf32> to vector<8x24xf32>
    %cst_159 = arith.constant dense<0.000000e+00> : vector<8x512xf32>
    %178 = tpu.matmul %177, %175, %cst_159 {dimension_numbers = #tpu.dot_dimension_numbers<[1], [0], [0], [1], [0, 0, 1, 1], [], []>} : vector<8x24xf32>, vector<24x512xf32>, vector<8x512xf32> -> vector<8x512xf32>
    %c1_i32_160 = arith.constant 1 : i32
    %179 = tpu.dynamic_rotate %162 by %c1_i32_160 dim 1 : vector<8x512xf32>, i32 -> vector<8x512xf32>
    %c3_161 = arith.constant 3 : index
    %c0_162 = arith.constant 0 : index
    %c0_163 = arith.constant 0 : index
    %180 = vector.load %arg10[%c3_161, %c0_162, %c0_163] : memref<9x8x512xf32, #tpu.memory_space<vmem>>, vector<1x8x512xf32>
    %181 = vector.shape_cast %180 : vector<1x8x512xf32> to vector<8x512xf32>
    %182 = arith.mulf %181, %179 : vector<8x512xf32>
    %c511_i32_164 = arith.constant 511 : i32
    %183 = tpu.dynamic_rotate %162 by %c511_i32_164 dim 1 : vector<8x512xf32>, i32 -> vector<8x512xf32>
    %c5_165 = arith.constant 5 : index
    %c0_166 = arith.constant 0 : index
    %c0_167 = arith.constant 0 : index
    %184 = vector.load %arg10[%c5_165, %c0_166, %c0_167] : memref<9x8x512xf32, #tpu.memory_space<vmem>>, vector<1x8x512xf32>
    %185 = vector.shape_cast %184 : vector<1x8x512xf32> to vector<8x512xf32>
    %186 = arith.mulf %185, %183 : vector<8x512xf32>
    %187 = tpu.concatenate %182, %162, %186 in 0 : vector<8x512xf32>, vector<8x512xf32>, vector<8x512xf32> -> vector<24x512xf32>
    %c3_168 = arith.constant 3 : index
    %c1_169 = arith.constant 1 : index
    %c0_170 = arith.constant 0 : index
    %c0_171 = arith.constant 0 : index
    %188 = vector.load %arg6[%c3_168, %c1_169, %c0_170, %c0_171] : memref<4x3x8x24xf32, #tpu.memory_space<vmem>>, vector<1x1x8x24xf32>
    %189 = vector.shape_cast %188 : vector<1x1x8x24xf32> to vector<8x24xf32>
    %cst_172 = arith.constant dense<0.000000e+00> : vector<8x512xf32>
    %190 = tpu.matmul %189, %187, %cst_172 {dimension_numbers = #tpu.dot_dimension_numbers<[1], [0], [0], [1], [0, 0, 1, 1], [], []>} : vector<8x24xf32>, vector<24x512xf32>, vector<8x512xf32> -> vector<8x512xf32>
    %191 = arith.addf %178, %190 : vector<8x512xf32>
    %c497_i32_173 = arith.constant 497 : i32
    %192 = tpu.dynamic_rotate %162 by %c497_i32_173 dim 1 : vector<8x512xf32>, i32 -> vector<8x512xf32>
    %c6_174 = arith.constant 6 : index
    %c0_175 = arith.constant 0 : index
    %c0_176 = arith.constant 0 : index
    %193 = vector.load %arg10[%c6_174, %c0_175, %c0_176] : memref<9x8x512xf32, #tpu.memory_space<vmem>>, vector<1x8x512xf32>
    %194 = vector.shape_cast %193 : vector<1x8x512xf32> to vector<8x512xf32>
    %195 = arith.mulf %194, %192 : vector<8x512xf32>
    %c496_i32_177 = arith.constant 496 : i32
    %196 = tpu.dynamic_rotate %162 by %c496_i32_177 dim 1 : vector<8x512xf32>, i32 -> vector<8x512xf32>
    %c7_178 = arith.constant 7 : index
    %c0_179 = arith.constant 0 : index
    %c0_180 = arith.constant 0 : index
    %197 = vector.load %arg10[%c7_178, %c0_179, %c0_180] : memref<9x8x512xf32, #tpu.memory_space<vmem>>, vector<1x8x512xf32>
    %198 = vector.shape_cast %197 : vector<1x8x512xf32> to vector<8x512xf32>
    %199 = arith.mulf %198, %196 : vector<8x512xf32>
    %c495_i32_181 = arith.constant 495 : i32
    %200 = tpu.dynamic_rotate %162 by %c495_i32_181 dim 1 : vector<8x512xf32>, i32 -> vector<8x512xf32>
    %c8_182 = arith.constant 8 : index
    %c0_183 = arith.constant 0 : index
    %c0_184 = arith.constant 0 : index
    %201 = vector.load %arg10[%c8_182, %c0_183, %c0_184] : memref<9x8x512xf32, #tpu.memory_space<vmem>>, vector<1x8x512xf32>
    %202 = vector.shape_cast %201 : vector<1x8x512xf32> to vector<8x512xf32>
    %203 = arith.mulf %202, %200 : vector<8x512xf32>
    %204 = tpu.concatenate %195, %199, %203 in 0 : vector<8x512xf32>, vector<8x512xf32>, vector<8x512xf32> -> vector<24x512xf32>
    %c3_185 = arith.constant 3 : index
    %c2_186 = arith.constant 2 : index
    %c0_187 = arith.constant 0 : index
    %c0_188 = arith.constant 0 : index
    %205 = vector.load %arg6[%c3_185, %c2_186, %c0_187, %c0_188] : memref<4x3x8x24xf32, #tpu.memory_space<vmem>>, vector<1x1x8x24xf32>
    %206 = vector.shape_cast %205 : vector<1x1x8x24xf32> to vector<8x24xf32>
    %cst_189 = arith.constant dense<0.000000e+00> : vector<8x512xf32>
    %207 = tpu.matmul %206, %204, %cst_189 {dimension_numbers = #tpu.dot_dimension_numbers<[1], [0], [0], [1], [0, 0, 1, 1], [], []>} : vector<8x24xf32>, vector<24x512xf32>, vector<8x512xf32> -> vector<8x512xf32>
    %208 = arith.addf %191, %207 : vector<8x512xf32>
    %c3_190 = arith.constant 3 : index
    %c0_191 = arith.constant 0 : index
    %c0_192 = arith.constant 0 : index
    %209 = vector.load %arg7[%c3_190, %c0_191, %c0_192] : memref<4x8x1xf32, #tpu.memory_space<vmem>>, vector<1x8x1xf32>
    %210 = vector.shape_cast %209 : vector<1x8x1xf32> to vector<8x1xf32>
    %211 = vector.broadcast %210 : vector<8x1xf32> to vector<8x512xf32>
    %212 = arith.addf %208, %211 : vector<8x512xf32>
    %213 = arith.addf %110, %212 : vector<8x512xf32>
    %cst_193 = arith.constant 0.000000e+00 : f32
    %214 = vector.broadcast %cst_193 : f32 to vector<8x512xf32>
    %215 = arith.maximumf %213, %214 : vector<8x512xf32>
    %c0_194 = arith.constant 0 : index
    %c0_195 = arith.constant 0 : index
    %216 = vector.load %arg8[%c0_194, %c0_195] : memref<1x8xf32, #tpu.memory_space<vmem>>, vector<1x8xf32>
    %cst_196 = arith.constant dense<0.000000e+00> : vector<1x512xf32>
    %217 = tpu.matmul %216, %215, %cst_196 {dimension_numbers = #tpu.dot_dimension_numbers<[1], [0], [0], [1], [0, 0, 1, 1], [], []>} : vector<1x8xf32>, vector<8x512xf32>, vector<1x512xf32> -> vector<1x512xf32>
    %c0_197 = arith.constant 0 : index
    %c0_198 = arith.constant 0 : index
    %218 = vector.load %arg9[%c0_197, %c0_198] : memref<1x1xf32, #tpu.memory_space<vmem>>, vector<1x1xf32>
    %219 = vector.broadcast %218 : vector<1x1xf32> to vector<1x512xf32>
    %220 = arith.addf %217, %219 : vector<1x512xf32>
    %221 = arith.negf %220 : vector<1x512xf32>
    %222 = math.exp %221 : vector<1x512xf32>
    %cst_199 = arith.constant 1.000000e+00 : f32
    %223 = vector.broadcast %cst_199 : f32 to vector<1x512xf32>
    %224 = arith.addf %223, %222 : vector<1x512xf32>
    %225 = arith.divf %223, %224 : vector<1x512xf32>
    %c0_200 = arith.constant 0 : index
    %c0_201 = arith.constant 0 : index
    %226 = vector.load %arg11[%c0_200, %c0_201] : memref<32x512xf32, #tpu.memory_space<vmem>>, vector<32x512xf32>
    %227 = vector.shape_cast %225 : vector<1x512xf32> to vector<1x512xf32>
    %228 = vector.broadcast %227 : vector<1x512xf32> to vector<32x512xf32>
    %229 = arith.mulf %226, %228 : vector<32x512xf32>
    %c0_202 = arith.constant 0 : index
    %c0_203 = arith.constant 0 : index
    %230 = vector.load %arg12[%c0_202, %c0_203] : memref<512x32xf32, #tpu.memory_space<vmem>>, vector<512x32xf32>
    %cst_204 = arith.constant dense<0.000000e+00> : vector<32x32xf32>
    %231 = tpu.matmul %229, %230, %cst_204 {dimension_numbers = #tpu.dot_dimension_numbers<[1], [0], [0], [1], [0, 0, 1, 1], [], []>} : vector<32x512xf32>, vector<512x32xf32>, vector<32x32xf32> -> vector<32x32xf32>
    %c0_205 = arith.constant 0 : index
    %c0_206 = arith.constant 0 : index
    %232 = vector.load %arg2[%c0_205, %c0_206] : memref<32x64xf32, #tpu.memory_space<vmem>>, vector<32x64xf32>
    %c0_207 = arith.constant 0 : index
    %c0_208 = arith.constant 0 : index
    %c0_209 = arith.constant 0 : index
    %233 = vector.load %arg13[%c0_207, %c0_208, %c0_209] : memref<2x64x64xf32, #tpu.memory_space<vmem>>, vector<1x64x64xf32>
    %234 = vector.shape_cast %233 : vector<1x64x64xf32> to vector<64x64xf32>
    %cst_210 = arith.constant dense<0.000000e+00> : vector<32x64xf32>
    %235 = tpu.matmul %232, %234, %cst_210 {dimension_numbers = #tpu.dot_dimension_numbers<[1], [0], [0], [1], [0, 0, 1, 1], [], []>} : vector<32x64xf32>, vector<64x64xf32>, vector<32x64xf32> -> vector<32x64xf32>
    %c1_211 = arith.constant 1 : index
    %c0_212 = arith.constant 0 : index
    %c0_213 = arith.constant 0 : index
    %236 = vector.load %arg13[%c1_211, %c0_212, %c0_213] : memref<2x64x64xf32, #tpu.memory_space<vmem>>, vector<1x64x64xf32>
    %237 = vector.shape_cast %236 : vector<1x64x64xf32> to vector<64x64xf32>
    %cst_214 = arith.constant dense<0.000000e+00> : vector<32x64xf32>
    %238 = tpu.matmul %232, %237, %cst_214 {dimension_numbers = #tpu.dot_dimension_numbers<[1], [0], [0], [1], [0, 0, 1, 1], [], []>} : vector<32x64xf32>, vector<64x64xf32>, vector<32x64xf32> -> vector<32x64xf32>
    %239 = arith.maximumf %235, %238 : vector<32x64xf32>
    %c0_215 = arith.constant 0 : index
    %c0_216 = arith.constant 0 : index
    %c0_217 = arith.constant 0 : index
    %240 = vector.load %arg14[%c0_215, %c0_216, %c0_217] : memref<2x32x32xf32, #tpu.memory_space<vmem>>, vector<1x32x32xf32>
    %241 = vector.shape_cast %240 : vector<1x32x32xf32> to vector<32x32xf32>
    %cst_218 = arith.constant dense<0.000000e+00> : vector<32x64xf32>
    %242 = tpu.matmul %241, %239, %cst_218 {dimension_numbers = #tpu.dot_dimension_numbers<[1], [0], [0], [1], [0, 0, 1, 1], [], []>} : vector<32x32xf32>, vector<32x64xf32>, vector<32x64xf32> -> vector<32x64xf32>
    %c1_219 = arith.constant 1 : index
    %c0_220 = arith.constant 0 : index
    %c0_221 = arith.constant 0 : index
    %243 = vector.load %arg14[%c1_219, %c0_220, %c0_221] : memref<2x32x32xf32, #tpu.memory_space<vmem>>, vector<1x32x32xf32>
    %244 = vector.shape_cast %243 : vector<1x32x32xf32> to vector<32x32xf32>
    %cst_222 = arith.constant dense<0.000000e+00> : vector<32x64xf32>
    %245 = tpu.matmul %244, %239, %cst_222 {dimension_numbers = #tpu.dot_dimension_numbers<[1], [0], [0], [1], [0, 0, 1, 1], [], []>} : vector<32x32xf32>, vector<32x64xf32>, vector<32x64xf32> -> vector<32x64xf32>
    %246 = arith.maximumf %242, %245 : vector<32x64xf32>
    %c0_223 = arith.constant 0 : index
    %c0_224 = arith.constant 0 : index
    %247 = vector.load %arg3[%c0_223, %c0_224] : memref<32x64xf32, #tpu.memory_space<vmem>>, vector<32x64xf32>
    %248 = arith.subf %247, %246 : vector<32x64xf32>
    %cst_225 = arith.constant dense<0.000000e+00> : vector<32x64xf32>
    %249 = tpu.matmul %231, %248, %cst_225 {dimension_numbers = #tpu.dot_dimension_numbers<[1], [0], [0], [1], [0, 0, 1, 1], [], []>} : vector<32x32xf32>, vector<32x64xf32>, vector<32x64xf32> -> vector<32x64xf32>
    %250 = arith.addf %232, %249 : vector<32x64xf32>
    %c0_226 = arith.constant 0 : index
    %c0_227 = arith.constant 0 : index
    %251 = vector.load %arg15[%c0_226, %c0_227] : memref<32x64xf32, #tpu.memory_space<vmem>>, vector<32x64xf32>
    tpu.vector_store %arg15[%c0_226, %c0_227], %250 {strides = array<i32>} : memref<32x64xf32, #tpu.memory_space<vmem>>, vector<32x64xf32>,
    return
  }
  func.func @transform_0(%arg0: i32) -> (i32, i32) {
    %c0_i32 = arith.constant 0 : i32
    %c0_i32_0 = arith.constant 0 : i32
    %c0_i32_1 = arith.constant 0 : i32
    return %c0_i32, %c0_i32_0 : i32, i32
  }
  func.func @transform_1(%arg0: i32) -> (i32, i32) {
    %c0_i32 = arith.constant 0 : i32
    %c0_i32_0 = arith.constant 0 : i32
    %c0_i32_1 = arith.constant 0 : i32
    return %c0_i32, %c0_i32_0 : i32, i32
  }
  func.func @transform_2(%arg0: i32) -> (i32, i32) {
    %c0_i32 = arith.constant 0 : i32
    %c0_i32_0 = arith.constant 0 : i32
    %c0_i32_1 = arith.constant 0 : i32
    return %c0_i32, %c0_i32_0 : i32, i32
  }
  func.func @transform_3(%arg0: i32) -> (i32, i32) {
    %c0_i32 = arith.constant 0 : i32
    %c0_i32_0 = arith.constant 0 : i32
    %c0_i32_1 = arith.constant 0 : i32
    return %c0_i32, %c0_i32_0 : i32, i32
  }
  func.func @transform_4(%arg0: i32) -> (i32, i32) {
    %c0_i32 = arith.constant 0 : i32
    %c0_i32_0 = arith.constant 0 : i32
    %c0_i32_1 = arith.constant 0 : i32
    return %c0_i32, %c0_i32_0 : i32, i32
  }
  func.func @transform_5(%arg0: i32) -> (i32, i32, i32, i32) {
    %c0_i32 = arith.constant 0 : i32
    %c0_i32_0 = arith.constant 0 : i32
    %c0_i32_1 = arith.constant 0 : i32
    %c0_i32_2 = arith.constant 0 : i32
    %c0_i32_3 = arith.constant 0 : i32
    return %c0_i32, %c0_i32_0, %c0_i32_1, %c0_i32_2 : i32, i32, i32, i32
  }
  func.func @transform_6(%arg0: i32) -> (i32, i32, i32) {
    %c0_i32 = arith.constant 0 : i32
    %c0_i32_0 = arith.constant 0 : i32
    %c0_i32_1 = arith.constant 0 : i32
    %c0_i32_2 = arith.constant 0 : i32
    return %c0_i32, %c0_i32_0, %c0_i32_1 : i32, i32, i32
  }
  func.func @transform_7(%arg0: i32) -> (i32, i32) {
    %c0_i32 = arith.constant 0 : i32
    %c0_i32_0 = arith.constant 0 : i32
    %c0_i32_1 = arith.constant 0 : i32
    return %c0_i32, %c0_i32_0 : i32, i32
  }
  func.func @transform_8(%arg0: i32) -> (i32, i32) {
    %c0_i32 = arith.constant 0 : i32
    %c0_i32_0 = arith.constant 0 : i32
    %c0_i32_1 = arith.constant 0 : i32
    return %c0_i32, %c0_i32_0 : i32, i32
  }
  func.func @transform_9(%arg0: i32) -> (i32, i32, i32) {
    %c0_i32 = arith.constant 0 : i32
    %c0_i32_0 = arith.constant 0 : i32
    %c0_i32_1 = arith.constant 0 : i32
    %c0_i32_2 = arith.constant 0 : i32
    return %c0_i32, %c0_i32_0, %c0_i32_1 : i32, i32, i32
  }
  func.func @transform_10(%arg0: i32) -> (i32, i32) {
    %c0_i32 = arith.constant 0 : i32
    %c0_i32_0 = arith.constant 0 : i32
    %c0_i32_1 = arith.constant 0 : i32
    return %c0_i32, %c0_i32_0 : i32, i32
  }
  func.func @transform_11(%arg0: i32) -> (i32, i32) {
    %c0_i32 = arith.constant 0 : i32
    %c0_i32_0 = arith.constant 0 : i32
    %c0_i32_1 = arith.constant 0 : i32
    return %c0_i32, %c0_i32_0 : i32, i32
  }
  func.func @transform_12(%arg0: i32) -> (i32, i32, i32) {
    %c0_i32 = arith.constant 0 : i32
    %c0_i32_0 = arith.constant 0 : i32
    %c0_i32_1 = arith.constant 0 : i32
    %c0_i32_2 = arith.constant 0 : i32
    return %c0_i32, %c0_i32_0, %c0_i32_1 : i32, i32, i32
  }
  func.func @transform_13(%arg0: i32) -> (i32, i32, i32) {
    %c0_i32 = arith.constant 0 : i32
    %c0_i32_0 = arith.constant 0 : i32
    %c0_i32_1 = arith.constant 0 : i32
    %c0_i32_2 = arith.constant 0 : i32
    return %c0_i32, %c0_i32_0, %c0_i32_1 : i32, i32, i32
  }
  func.func @transform_14(%arg0: i32) -> (i32, i32) {
    %c0_i32 = arith.constant 0 : i32
    %c0_i32_0 = arith.constant 0 : i32
    %c0_i32_1 = arith.constant 0 : i32
    return %c0_i32, %c0_i32_0 : i32, i32
  }
}

</mosaic_0001>

<llo_original>
// kernel: tpu_custom_call.1
$region0: #{tpu_custom_call.1}
  #allocation0 [shape = 'u32[]', space=smem, size = 0x4, offset = 0x4, fixed_abs, tag = 'smem constant byte address 0x4 - core index']
  #allocation1 [shape = 'u32[144,128]{1,0:T(1,128)}', space=vmem, size = 0x12000, scoped, tag = 'internal scratch']
  #allocation2 [shape = 'f32[1,1]{1,0:T(1,128)S(1)}', space=vmem, size = 0x200, scoped, tag = 'scoped memory for tpu_custom_call.1']
  %s0 = inlined_call_operand.hbm [shape: f32[8,512], index: 0, kind: input, shape index: {}]
  %s1 = inlined_call_operand.hbm [shape: f32[32,64], index: 1, kind: input, shape index: {}]
  %s2 = inlined_call_operand.hbm [shape: f32[32,64], index: 2, kind: input, shape index: {}]
  %s3 = inlined_call_operand.hbm [shape: f32[8,8], index: 3, kind: input, shape index: {}]
  %s4 = inlined_call_operand.vmem [shape: f32[8,1], index: 4, kind: input, shape index: {}]
  %s5 = inlined_call_operand.vmem [shape: f32[4,3,8,24], index: 5, kind: input, shape index: {}]
  %s6 = inlined_call_operand.vmem [shape: f32[4,8,1], index: 6, kind: input, shape index: {}]
  %s7 = inlined_call_operand.vmem [shape: f32[1,8], index: 7, kind: input, shape index: {}]
  %s8 = inlined_call_operand.<no memory space> [shape: f32[1,1], index: 8, kind: input, shape index: {}]
  %s9 = inlined_call_operand.vmem [shape: f32[9,8,512], index: 9, kind: input, shape index: {}]
  %s10 = inlined_call_operand.vmem [shape: f32[32,512], index: 10, kind: input, shape index: {}]
  %s11 = inlined_call_operand.vmem [shape: f32[512,32], index: 11, kind: input, shape index: {}]
  %s12 = inlined_call_operand.vmem [shape: f32[2,64,64], index: 12, kind: input, shape index: {}]
  %s13 = inlined_call_operand.vmem [shape: f32[2,32,32], index: 13, kind: input, shape index: {}]
  %s14 = inlined_call_operand.hbm [shape: f32[32,64], index: 14, kind: output, shape index: {}]
  %s15 = sld [smem:[#allocation0]]
  $region82: #{tpu_custom_call.1} parent=0
    _
  %s17 = ssub.s32 1, %s15
  %s18 = scalar_select 0, %s17, %s15
  %v19 = vstv %s8
  %20 = vst [vmem:[#allocation2] sm:$0x1] %v19
  $region1: #{tpu_custom_call.1} parent=0
    #allocation3 [shape = 'u8[16384]{0}', space=vmem, size = 0x4000, scoped, tag = 'input window, operand 0, single buffered']
    #allocation4 [shape = 's32[1]{0}', space=sflag, size = 0x4, scoped, tag = 'scoped memory for tpu_custom_call.1']
    #allocation5 [shape = 's32[1]{0}', space=sflag, size = 0x4, scoped, tag = 'scoped memory for tpu_custom_call.1']
    #allocation6 [shape = 'u8[16384]{0}', space=vmem, size = 0x4000, scoped, tag = 'input window, operand 1, single buffered']
    #allocation7 [shape = 's32[1]{0}', space=sflag, size = 0x4, scoped, tag = 'scoped memory for tpu_custom_call.1']
    #allocation8 [shape = 'u8[16384]{0}', space=vmem, size = 0x4000, scoped, tag = 'input window, operand 2, single buffered']
    #allocation9 [shape = 'u8[4096]{0}', space=vmem, size = 0x1000, scoped, tag = 'input window, operand 3, single buffered']
    #allocation10 [shape = 's32[1]{0}', space=sflag, size = 0x4, scoped, tag = 'scoped memory for tpu_custom_call.1']
    #allocation11 [shape = 'u8[16384]{0}', space=vmem, size = 0x4000, scoped, tag = 'output window, operand 0, single buffered']
    %21 = vsyncpa [#allocation4], 0
    %22 = vsyncpa [#allocation7], 0
    %23 = vsyncpa [#allocation10], 0
    %24 = vsyncpa [#allocation5], 0
    // Predicated region
    $region2: #{tpu_custom_call.1} parent=1 // pred_check
      _
    $region3: #{tpu_custom_call.1} parent=1 // pred_check_branch
      %26 = sbr.rel (0) target = $region5
    $region4: #{tpu_custom_call.1} parent=1 // pred_region
      %s28 = ssub.s32 512, 512
      %29 = vsyncadd [#allocation4], %s28
      %s31 = sshll.u32 [#allocation3], 4
      %s32 = int_to_ptr.vmem [resolvable:$true] %s31
      %34 = dma.hbm_to_vmem [thread:$0]  %s0, 512, %s32, [#allocation4]
    $region5: #{tpu_custom_call.1} parent=1 // pred_fallthru
      _
    // Predicated region
    $region6: #{tpu_custom_call.1} parent=1 // pred_check
      _
    $region7: #{tpu_custom_call.1} parent=1 // pred_check_branch
      %36 = sbr.rel (0) target = $region9
    $region8: #{tpu_custom_call.1} parent=1 // pred_region
      %s38 = ssub.s32 512, 512
      %39 = vsyncadd [#allocation7], %s38
      %s40 = sshll.u32 [#allocation6], 4
      %s41 = int_to_ptr.vmem [resolvable:$true] %s40
      %46 = dma.hbm_to_vmem [thread:$0]  %s1, 512, %s41, [#allocation7], 128, 128, 8
    $region9: #{tpu_custom_call.1} parent=1 // pred_fallthru
      _
    // Predicated region
    $region10: #{tpu_custom_call.1} parent=1 // pred_check
      _
    $region11: #{tpu_custom_call.1} parent=1 // pred_check_branch
      %48 = sbr.rel (0) target = $region13
    $region12: #{tpu_custom_call.1} parent=1 // pred_region
      %s50 = ssub.s32 512, 512
      %51 = vsyncadd [#allocation7], %s50
      %s52 = sshll.u32 [#allocation8], 4
      %s53 = int_to_ptr.vmem [resolvable:$true] %s52
      %58 = dma.hbm_to_vmem [thread:$0]  %s2, 512, %s53, [#allocation7], 128, 128, 8
    $region13: #{tpu_custom_call.1} parent=1 // pred_fallthru
      _
    // Predicated region
    $region14: #{tpu_custom_call.1} parent=1 // pred_check
      _
    $region15: #{tpu_custom_call.1} parent=1 // pred_check_branch
      %60 = sbr.rel (0) target = $region17
    $region16: #{tpu_custom_call.1} parent=1 // pred_region
      %s62 = ssub.s32 128, 128
      %63 = vsyncadd [#allocation10], %s62
      %s65 = sshll.u32 [#allocation9], 4
      %s66 = int_to_ptr.vmem [resolvable:$true] %s65
      %68 = dma.hbm_to_vmem [thread:$0]  %s3, 128, %s66, [#allocation10]
    $region17: #{tpu_custom_call.1} parent=1 // pred_fallthru
      _
    // Predicated region
    $region18: #{tpu_custom_call.1} parent=1 // pred_check
      _
    $region19: #{tpu_custom_call.1} parent=1 // pred_check_branch
      %70 = sbr.rel (0) target = $region21
    $region20: #{tpu_custom_call.1} parent=1 // pred_region
      _
    $region21: #{tpu_custom_call.1} parent=1 // pred_fallthru
      _
    // Predicated region
    $region22: #{tpu_custom_call.1} parent=1 // pred_check
      _
    $region23: #{tpu_custom_call.1} parent=1 // pred_check_branch
      %72 = sbr.rel (0) target = $region25
    $region24: #{tpu_custom_call.1} parent=1 // pred_region
      _
    $region25: #{tpu_custom_call.1} parent=1 // pred_fallthru
      _
    // Predicated region
    $region26: #{tpu_custom_call.1} parent=1 // pred_check
      _
    $region27: #{tpu_custom_call.1} parent=1 // pred_check_branch
      %74 = sbr.rel (0) target = $region29
    $region28: #{tpu_custom_call.1} parent=1 // pred_region
      _
    $region29: #{tpu_custom_call.1} parent=1 // pred_fallthru
      _
    // Predicated region
    $region30: #{tpu_custom_call.1} parent=1 // pred_check
      _
    $region31: #{tpu_custom_call.1} parent=1 // pred_check_branch
      %76 = sbr.rel (0) target = $region33
    $region32: #{tpu_custom_call.1} parent=1 // pred_region
      _
    $region33: #{tpu_custom_call.1} parent=1 // pred_fallthru
      _
    // Predicated region
    $region34: #{tpu_custom_call.1} parent=1 // pred_check
      _
    $region35: #{tpu_custom_call.1} parent=1 // pred_check_branch
      %78 = sbr.rel (0) target = $region37
    $region36: #{tpu_custom_call.1} parent=1 // pred_region
      _
    $region37: #{tpu_custom_call.1} parent=1 // pred_fallthru
      _
    // Predicated region
    $region38: #{tpu_custom_call.1} parent=1 // pred_check
      _
    $region39: #{tpu_custom_call.1} parent=1 // pred_check_branch
      %80 = sbr.rel (0) target = $region41
    $region40: #{tpu_custom_call.1} parent=1 // pred_region
      _
    $region41: #{tpu_custom_call.1} parent=1 // pred_fallthru
      _
    // Predicated region
    $region42: #{tpu_custom_call.1} parent=1 // pred_check
      _
    $region43: #{tpu_custom_call.1} parent=1 // pred_check_branch
      %82 = sbr.rel (0) target = $region45
    $region44: #{tpu_custom_call.1} parent=1 // pred_region
      _
    $region45: #{tpu_custom_call.1} parent=1 // pred_fallthru
      _
    // Predicated region
    $region46: #{tpu_custom_call.1} parent=1 // pred_check
      _
    $region47: #{tpu_custom_call.1} parent=1 // pred_check_branch
      %84 = sbr.rel (0) target = $region49
    $region48: #{tpu_custom_call.1} parent=1 // pred_region
      _
    $region49: #{tpu_custom_call.1} parent=1 // pred_fallthru
      _
    // Predicated region
    $region50: #{tpu_custom_call.1} parent=1 // pred_check
      _
    $region51: #{tpu_custom_call.1} parent=1 // pred_check_branch
      %86 = sbr.rel (0) target = $region53
    $region52: #{tpu_custom_call.1} parent=1 // pred_region
      _
    $region53: #{tpu_custom_call.1} parent=1 // pred_fallthru
      _
    // Predicated region
    $region54: #{tpu_custom_call.1} parent=1 // pred_check
      _
    $region55: #{tpu_custom_call.1} parent=1 // pred_check_branch
      %88 = sbr.rel (0) target = $region57
    $region56: #{tpu_custom_call.1} parent=1 // pred_region
      _
    $region57: #{tpu_custom_call.1} parent=1 // pred_fallthru
      _
    // Predicated region
    $region58: #{tpu_custom_call.1} parent=1 // pred_check
      _
    $region59: #{tpu_custom_call.1} parent=1 // pred_check_branch
      %90 = sbr.rel (0) target = $region61
    $region60: #{tpu_custom_call.1} parent=1 // pred_region
      %91 = dma.done [#allocation4], 512
    $region61: #{tpu_custom_call.1} parent=1 // pred_fallthru
      _
    // Predicated region
    $region62: #{tpu_custom_call.1} parent=1 // pred_check
      _
    $region63: #{tpu_custom_call.1} parent=1 // pred_check_branch
      %93 = sbr.rel (0) target = $region65
    $region64: #{tpu_custom_call.1} parent=1 // pred_region
      %94 = dma.done [#allocation7], 512
    $region65: #{tpu_custom_call.1} parent=1 // pred_fallthru
      _
    // Predicated region
    $region66: #{tpu_custom_call.1} parent=1 // pred_check
      _
    $region67: #{tpu_custom_call.1} parent=1 // pred_check_branch
      %96 = sbr.rel (0) target = $region69
    $region68: #{tpu_custom_call.1} parent=1 // pred_region
      %97 = dma.done [#allocation7], 512
    $region69: #{tpu_custom_call.1} parent=1 // pred_fallthru
      _
    // Predicated region
    $region70: #{tpu_custom_call.1} parent=1 // pred_check
      _
    $region71: #{tpu_custom_call.1} parent=1 // pred_check_branch
      %99 = sbr.rel (0) target = $region73
    $region72: #{tpu_custom_call.1} parent=1 // pred_region
      %100 = dma.done [#allocation10], 128
    $region73: #{tpu_custom_call.1} parent=1 // pred_fallthru
      _
    %v101 = vld [vmem:[#allocation9] sm:$0xff]
    %v102 = vld [vmem:[#allocation3] sm:$0xff]
    %v103 = vld [vmem:[#allocation3 + $0x8] sm:$0xff]
    %v104 = vld [vmem:[#allocation3 + $0x10] sm:$0xff]
    %v105 = vld [vmem:[#allocation3 + $0x18] sm:$0xff]
    %v106 = vld [vmem:[%s4] sm:$0xff]
    %108 = vset.pattern.permute.xlu0 0
    %109 = vperm.xlu0 %108, %v106
    %v110 = vpop.permute.xlu0 %109
    %vm112 = vcmask 64512
    %v114 = vsel %vm112, %v101, 0
    %116 = vmatprep.subr.mxu0 %v103
    %117 = vmatpush1.msra.mxu0 %v102
    %118 = vmatprep.subr.mxu0 0.0
    %119 = vmatpush1.msra.mxu0 0.0
    %120 = vmatprep.subr.mxu0 0.0
    %121 = vmatpush1.msra.mxu0 0.0
    %122 = vmatprep.subr.mxu0 0.0
    %123 = vmatpush1.msra.mxu0 0.0
    %124 = vmatprep.subr.mxu0 0.0
    %125 = vmatpush1.msra.mxu0 0.0
    %126 = vmatprep.subr.mxu0 0.0
    %127 = vmatpush1.msra.mxu0 0.0
    %128 = vmatprep.subr.mxu0 0.0
    %129 = vmatpush1.msra.mxu0 0.0
    %130 = vmatprep.subr.mxu0 0.0
    %131 = vmatpush1.msra.mxu0 0.0
    %132 = vmatprep.subr.mxu0 0.0
    %133 = vmatpush1.msra.mxu0 0.0
    %134 = vmatprep.subr.mxu0 0.0
    %135 = vmatpush1.msra.mxu0 0.0
    %136 = vmatprep.subr.mxu0 0.0
    %137 = vmatpush1.msra.mxu0 0.0
    %138 = vmatprep.subr.mxu0 0.0
    %139 = vmatpush1.msra.mxu0 0.0
    %140 = vmatprep.subr.mxu0 0.0
    %141 = vmatpush1.msra.mxu0 0.0
    %142 = vmatprep.subr.mxu0 0.0
    %143 = vmatpush1.msra.mxu0 0.0
    %144 = vmatprep.subr.mxu0 0.0
    %145 = vmatpush1.msra.mxu0 0.0
    %146 = vmatprep.subr.mxu0 0.0
    %147 = vmatpush1.msra.mxu0 0.0
    %148 = vmatprep.subr.mxu0 0.0
    %149 = vmatpush1.msra.mxu0 0.0
    %150 = vmatprep.subr.mxu0 0.0
    %151 = vmatpush1.msra.mxu0 0.0
    %152 = vmatprep.subr.mxu0 0.0
    %153 = vmatpush1.msra.mxu0 0.0
    %154 = vmatprep.subr.mxu0 0.0
    %155 = vmatpush1.msra.mxu0 0.0
    %156 = vmatprep.subr.mxu0 0.0
    %157 = vmatpush1.msra.mxu0 0.0
    %158 = vmatprep.subr.mxu0 0.0
    %159 = vmatpush1.msra.mxu0 0.0
    %160 = vmatprep.subr.mxu0 0.0
    %161 = vmatpush1.msra.mxu0 0.0
    %162 = vmatprep.subr.mxu0 0.0
    %163 = vmatpush1.msra.mxu0 0.0
    %164 = vmatprep.subr.mxu0 0.0
    %165 = vmatpush1.msra.mxu0 0.0
    %166 = vmatprep.subr.mxu0 0.0
    %167 = vmatpush1.msra.mxu0 0.0
    %168 = vmatprep.subr.mxu0 0.0
    %169 = vmatpush1.msra.mxu0 0.0
    %170 = vmatprep.subr.mxu0 0.0
    %171 = vmatpush1.msra.mxu0 0.0
    %172 = vmatprep.subr.mxu0 0.0
    %173 = vmatpush1.msra.mxu0 0.0
    %174 = vmatprep.subr.mxu0 0.0
    %175 = vmatpush1.msra.mxu0 0.0
    %176 = vmatprep.subr.mxu0 0.0
    %177 = vmatpush1.msra.mxu0 0.0
    %178 = vmatprep.subr.mxu0 0.0
    %179 = vmatpush1.msra.mxu0 0.0
    %180 = vmatprep.mubr.f32.mxu0 0.0
    %181 = vmatmul.mubr.f32.gmra.mrb[0].mxu0 %v114
    %v182 = vpop.f32.mrb[0].mxu0
    %v183 = vadd.f32 %v110, %v182
    %v184 = vpop.f32.mrb[0].mxu0
    %v185 = vadd.f32 %v110, %v184
    %186 = vdwg.mxu0
    %187 = vmatprep.subr.mxu0 %v105
    %188 = vmatpush1.msra.mxu0 %v104
    %189 = vmatprep.subr.mxu0 0.0
    %190 = vmatpush1.msra.mxu0 0.0
    %191 = vmatprep.subr.mxu0 0.0
    %192 = vmatpush1.msra.mxu0 0.0
    %193 = vmatprep.subr.mxu0 0.0
    %194 = vmatpush1.msra.mxu0 0.0
    %195 = vmatprep.subr.mxu0 0.0
    %196 = vmatpush1.msra.mxu0 0.0
    %197 = vmatprep.subr.mxu0 0.0
    %198 = vmatpush1.msra.mxu0 0.0
    %199 = vmatprep.subr.mxu0 0.0
    %200 = vmatpush1.msra.mxu0 0.0
    %201 = vmatprep.subr.mxu0 0.0
    %202 = vmatpush1.msra.mxu0 0.0
    %203 = vmatprep.subr.mxu0 0.0
    %204 = vmatpush1.msra.mxu0 0.0
    %205 = vmatprep.subr.mxu0 0.0
    %206 = vmatpush1.msra.mxu0 0.0
    %207 = vmatprep.subr.mxu0 0.0
    %208 = vmatpush1.msra.mxu0 0.0
    %209 = vmatprep.subr.mxu0 0.0
    %210 = vmatpush1.msra.mxu0 0.0
    %211 = vmatprep.subr.mxu0 0.0
    %212 = vmatpush1.msra.mxu0 0.0
    %213 = vmatprep.subr.mxu0 0.0
    %214 = vmatpush1.msra.mxu0 0.0
    %215 = vmatprep.subr.mxu0 0.0
    %216 = vmatpush1.msra.mxu0 0.0
    %217 = vmatprep.subr.mxu0 0.0
    %218 = vmatpush1.msra.mxu0 0.0
    %219 = vmatprep.subr.mxu0 0.0
    %220 = vmatpush1.msra.mxu0 0.0
    %221 = vmatprep.subr.mxu0 0.0
    %222 = vmatpush1.msra.mxu0 0.0
    %223 = vmatprep.subr.mxu0 0.0
    %224 = vmatpush1.msra.mxu0 0.0
    %225 = vmatprep.subr.mxu0 0.0
    %226 = vmatpush1.msra.mxu0 0.0
    %227 = vmatprep.subr.mxu0 0.0
    %228 = vmatpush1.msra.mxu0 0.0
    %229 = vmatprep.subr.mxu0 0.0
    %230 = vmatpush1.msra.mxu0 0.0
    %231 = vmatprep.subr.mxu0 0.0
    %232 = vmatpush1.msra.mxu0 0.0
    %233 = vmatprep.subr.mxu0 0.0
    %234 = vmatpush1.msra.mxu0 0.0
    %235 = vmatprep.subr.mxu0 0.0
    %236 = vmatpush1.msra.mxu0 0.0
    %237 = vmatprep.subr.mxu0 0.0
    %238 = vmatpush1.msra.mxu0 0.0
    %239 = vmatprep.subr.mxu0 0.0
    %240 = vmatpush1.msra.mxu0 0.0
    %241 = vmatprep.subr.mxu0 0.0
    %242 = vmatpush1.msra.mxu0 0.0
    %243 = vmatprep.subr.mxu0 0.0
    %244 = vmatpush1.msra.mxu0 0.0
    %245 = vmatprep.subr.mxu0 0.0
    %246 = vmatpush1.msra.mxu0 0.0
    %247 = vmatprep.subr.mxu0 0.0
    %248 = vmatpush1.msra.mxu0 0.0
    %249 = vmatprep.subr.mxu0 0.0
    %250 = vmatpush1.msra.mxu0 0.0
    %251 = vmatprep.mubr.f32.mxu0 0.0
    %252 = vmatmul.mubr.f32.gmra.mrb[0].mxu0 %v114
    %v253 = vpop.f32.mrb[0].mxu0
    %v254 = vadd.f32 %v110, %v253
    %v255 = vpop.f32.mrb[0].mxu0
    %v256 = vadd.f32 %v110, %v255
    %257 = vdwg.mxu0
    %258 = vrot.lane.b32.xlu0 %v183, 17
    %v259 = vpop.permute.xlu0 %258
    %260 = vrot.lane.b32.xlu0 %v185, 17
    %v261 = vpop.permute.xlu0 %260
    %262 = vrot.lane.b32.xlu0 %v254, 17
    %v263 = vpop.permute.xlu0 %262
    %264 = vrot.lane.b32.xlu0 %v256, 17
    %v265 = vpop.permute.xlu0 %264
    %v266 = vlaneseq
    %v267 = vand.u32 %v266, 127
    %vm268 = vcmp.lt.s32.totalorder %v267, 17
    %v269 = vsel %vm268, %v263, %v265
    %v270 = vsel %vm268, %v261, %v263
    %v271 = vsel %vm268, %v259, %v261
    %v272 = vsel %vm268, %v265, %v259
    %v273 = vld [vmem:[%s9] sm:$0xff]
    %v274 = vld [vmem:[%s9 + $0x8] sm:$0xff]
    %v275 = vld [vmem:[%s9 + $0x10] sm:$0xff]
    %v276 = vld [vmem:[%s9 + $0x18] sm:$0xff]
    %v277 = vmul.f32 %v273, %v272
    %v278 = vmul.f32 %v274, %v271
    %v279 = vmul.f32 %v275, %v270
    %v280 = vmul.f32 %v276, %v269
    %281 = vrot.lane.b32.xlu0 %v183, 16
    %v282 = vpop.permute.xlu0 %281
    %283 = vrot.lane.b32.xlu0 %v185, 16
    %v284 = vpop.permute.xlu0 %283
    %285 = vrot.lane.b32.xlu0 %v254, 16
    %v286 = vpop.permute.xlu0 %285
    %287 = vrot.lane.b32.xlu0 %v256, 16
    %v288 = vpop.permute.xlu0 %287
    %vm289 = vcmp.lt.s32.totalorder %v267, 16
    %v290 = vsel %vm289, %v286, %v288
    %v291 = vsel %vm289, %v284, %v286
    %v292 = vsel %vm289, %v282, %v284
    %v293 = vsel %vm289, %v288, %v282
    %s294 = scalar_lea.vmem %s9, 32
    %v295 = vld [vmem:[%s294] sm:$0xff]
    %v296 = vld [vmem:[%s294 + $0x8] sm:$0xff]
    %v297 = vld [vmem:[%s294 + $0x10] sm:$0xff]
    %v298 = vld [vmem:[%s294 + $0x18] sm:$0xff]
    %v299 = vmul.f32 %v295, %v293
    %v300 = vmul.f32 %v296, %v292
    %v301 = vmul.f32 %v297, %v291
    %v302 = vmul.f32 %v298, %v290
    %303 = vrot.lane.b32.xlu0 %v183, 15
    %v304 = vpop.permute.xlu0 %303
    %305 = vrot.lane.b32.xlu0 %v185, 15
    %v306 = vpop.permute.xlu0 %305
    %307 = vrot.lane.b32.xlu0 %v254, 15
    %v308 = vpop.permute.xlu0 %307
    %309 = vrot.lane.b32.xlu0 %v256, 15
    %v310 = vpop.permute.xlu0 %309
    %vm311 = vcmp.lt.s32.totalorder %v267, 15
    %v312 = vsel %vm311, %v308, %v310
    %v313 = vsel %vm311, %v306, %v308
    %v314 = vsel %vm311, %v304, %v306
    %v315 = vsel %vm311, %v310, %v304
    %s316 = scalar_lea.vmem %s9, 64
    %v317 = vld [vmem:[%s316] sm:$0xff]
    %v318 = vld [vmem:[%s316 + $0x8] sm:$0xff]
    %v319 = vld [vmem:[%s316 + $0x10] sm:$0xff]
    %v320 = vld [vmem:[%s316 + $0x18] sm:$0xff]
    %v321 = vmul.f32 %v317, %v315
    %v322 = vmul.f32 %v318, %v314
    %v323 = vmul.f32 %v319, %v313
    %v324 = vmul.f32 %v320, %v312
    %v325 = vld [vmem:[%s5] sm:$0xff]
    %326 = vrot.lane.b32.xlu0 %v183, 1
    %v327 = vpop.permute.xlu0 %326
    %328 = vrot.lane.b32.xlu0 %v185, 1
    %v329 = vpop.permute.xlu0 %328
    %330 = vrot.lane.b32.xlu0 %v254, 1
    %v331 = vpop.permute.xlu0 %330
    %332 = vrot.lane.b32.xlu0 %v256, 1
    %v333 = vpop.permute.xlu0 %332
    %vm334 = vcmp.lt.s32.totalorder %v267, 1
    %v335 = vsel %vm334, %v331, %v333
    %v336 = vsel %vm334, %v329, %v331
    %v337 = vsel %vm334, %v327, %v329
    %v338 = vsel %vm334, %v333, %v327
    %s339 = scalar_lea.vmem %s9, 96
    %v340 = vld [vmem:[%s339] sm:$0xff]
    %v341 = vld [vmem:[%s339 + $0x8] sm:$0xff]
    %v342 = vld [vmem:[%s339 + $0x10] sm:$0xff]
    %v343 = vld [vmem:[%s339 + $0x18] sm:$0xff]
    %v344 = vmul.f32 %v340, %v338
    %v345 = vmul.f32 %v341, %v337
    %v346 = vmul.f32 %v342, %v336
    %v347 = vmul.f32 %v343, %v335
    %348 = vrot.lane.b32.xlu0 %v183, 127
    %v349 = vpop.permute.xlu0 %348
    %350 = vrot.lane.b32.xlu0 %v185, 127
    %v351 = vpop.permute.xlu0 %350
    %352 = vrot.lane.b32.xlu0 %v254, 127
    %v353 = vpop.permute.xlu0 %352
    %354 = vrot.lane.b32.xlu0 %v256, 127
    %v355 = vpop.permute.xlu0 %354
    %vm356 = vcmp.lt.s32.totalorder %v267, 127
    %v357 = vsel %vm356, %v353, %v355
    %v358 = vsel %vm356, %v351, %v353
    %v359 = vsel %vm356, %v349, %v351
    %v360 = vsel %vm356, %v355, %v349
    %s361 = scalar_lea.vmem %s9, 160
    %v362 = vld [vmem:[%s361] sm:$0xff]
    %v363 = vld [vmem:[%s361 + $0x8] sm:$0xff]
    %v364 = vld [vmem:[%s361 + $0x10] sm:$0xff]
    %v365 = vld [vmem:[%s361 + $0x18] sm:$0xff]
    %v366 = vmul.f32 %v362, %v359
    %v367 = vmul.f32 %v363, %v358
    %v368 = vmul.f32 %v364, %v357
    %v369 = vmul.f32 %v365, %v360
    %s370 = scalar_lea.vmem %s5, 8
    %v371 = vld [vmem:[%s370] sm:$0xff]
    %vm372 = vcmask 195584
    %v374 = vsel %vm372, %v371, 0
    %376 = vmatprep.subr.mxu0 %v345
    %377 = vmatpush1.msra.mxu0 %v344
    %378 = vmatprep.subr.mxu0 %v185
    %379 = vmatpush1.msra.mxu0 %v183
    %380 = vmatprep.subr.mxu0 %v367
    %381 = vmatpush1.msra.mxu0 %v366
    %382 = vmatprep.subr.mxu0 0.0
    %383 = vmatpush1.msra.mxu0 0.0
    %384 = vmatprep.subr.mxu0 0.0
    %385 = vmatpush1.msra.mxu0 0.0
    %386 = vmatprep.subr.mxu0 0.0
    %387 = vmatpush1.msra.mxu0 0.0
    %388 = vmatprep.subr.mxu0 0.0
    %389 = vmatpush1.msra.mxu0 0.0
    %390 = vmatprep.subr.mxu0 0.0
    %391 = vmatpush1.msra.mxu0 0.0
    %392 = vmatprep.subr.mxu0 0.0
    %393 = vmatpush1.msra.mxu0 0.0
    %394 = vmatprep.subr.mxu0 0.0
    %395 = vmatpush1.msra.mxu0 0.0
    %396 = vmatprep.subr.mxu0 0.0
    %397 = vmatpush1.msra.mxu0 0.0
    %398 = vmatprep.subr.mxu0 0.0
    %399 = vmatpush1.msra.mxu0 0.0
    %400 = vmatprep.subr.mxu0 0.0
    %401 = vmatpush1.msra.mxu0 0.0
    %402 = vmatprep.subr.mxu0 0.0
    %403 = vmatpush1.msra.mxu0 0.0
    %404 = vmatprep.subr.mxu0 0.0
    %405 = vmatpush1.msra.mxu0 0.0
    %406 = vmatprep.subr.mxu0 0.0
    %407 = vmatpush1.msra.mxu0 0.0
    %408 = vmatprep.subr.mxu0 0.0
    %409 = vmatpush1.msra.mxu0 0.0
    %410 = vmatprep.subr.mxu0 0.0
    %411 = vmatpush1.msra.mxu0 0.0
    %412 = vmatprep.subr.mxu0 0.0
    %413 = vmatpush1.msra.mxu0 0.0
    %414 = vmatprep.subr.mxu0 0.0
    %415 = vmatpush1.msra.mxu0 0.0
    %416 = vmatprep.subr.mxu0 0.0
    %417 = vmatpush1.msra.mxu0 0.0
    %418 = vmatprep.subr.mxu0 0.0
    %419 = vmatpush1.msra.mxu0 0.0
    %420 = vmatprep.subr.mxu0 0.0
    %421 = vmatpush1.msra.mxu0 0.0
    %422 = vmatprep.subr.mxu0 0.0
    %423 = vmatpush1.msra.mxu0 0.0
    %424 = vmatprep.subr.mxu0 0.0
    %425 = vmatpush1.msra.mxu0 0.0
    %426 = vmatprep.subr.mxu0 0.0
    %427 = vmatpush1.msra.mxu0 0.0
    %428 = vmatprep.subr.mxu0 0.0
    %429 = vmatpush1.msra.mxu0 0.0
    %430 = vmatprep.subr.mxu0 0.0
    %431 = vmatpush1.msra.mxu0 0.0
    %432 = vmatprep.subr.mxu0 0.0
    %433 = vmatpush1.msra.mxu0 0.0
    %434 = vmatprep.subr.mxu0 0.0
    %435 = vmatpush1.msra.mxu0 0.0
    %436 = vmatprep.subr.mxu0 0.0
    %437 = vmatpush1.msra.mxu0 0.0
    %438 = vmatprep.subr.mxu0 0.0
    %439 = vmatpush1.msra.mxu0 0.0
    %440 = vmatprep.mubr.f32.mxu0 0.0
    %441 = vmatmul.mubr.f32.gmra.mrb[0].mxu0 %v374
    %v442 = vpop.f32.mrb[0].mxu0
    %v443 = vadd.f32 0.0, %v442
    %v444 = vpop.f32.mrb[0].mxu0
    %v445 = vadd.f32 0.0, %v444
    %446 = vdwg.mxu0
    %447 = vmatprep.subr.mxu0 %v347
    %448 = vmatpush1.msra.mxu0 %v346
    %449 = vmatprep.subr.mxu0 %v256
    %450 = vmatpush1.msra.mxu0 %v254
    %451 = vmatprep.subr.mxu0 %v369
    %452 = vmatpush1.msra.mxu0 %v368
    %453 = vmatprep.subr.mxu0 0.0
    %454 = vmatpush1.msra.mxu0 0.0
    %455 = vmatprep.subr.mxu0 0.0
    %456 = vmatpush1.msra.mxu0 0.0
    %457 = vmatprep.subr.mxu0 0.0
    %458 = vmatpush1.msra.mxu0 0.0
    %459 = vmatprep.subr.mxu0 0.0
    %460 = vmatpush1.msra.mxu0 0.0
    %461 = vmatprep.subr.mxu0 0.0
    %462 = vmatpush1.msra.mxu0 0.0
    %463 = vmatprep.subr.mxu0 0.0
    %464 = vmatpush1.msra.mxu0 0.0
    %465 = vmatprep.subr.mxu0 0.0
    %466 = vmatpush1.msra.mxu0 0.0
    %467 = vmatprep.subr.mxu0 0.0
    %468 = vmatpush1.msra.mxu0 0.0
    %469 = vmatprep.subr.mxu0 0.0
    %470 = vmatpush1.msra.mxu0 0.0
    %471 = vmatprep.subr.mxu0 0.0
    %472 = vmatpush1.msra.mxu0 0.0
    %473 = vmatprep.subr.mxu0 0.0
    %474 = vmatpush1.msra.mxu0 0.0
    %475 = vmatprep.subr.mxu0 0.0
    %476 = vmatpush1.msra.mxu0 0.0
    %477 = vmatprep.subr.mxu0 0.0
    %478 = vmatpush1.msra.mxu0 0.0
    %479 = vmatprep.subr.mxu0 0.0
    %480 = vmatpush1.msra.mxu0 0.0
    %481 = vmatprep.subr.mxu0 0.0
    %482 = vmatpush1.msra.mxu0 0.0
    %483 = vmatprep.subr.mxu0 0.0
    %484 = vmatpush1.msra.mxu0 0.0
    %485 = vmatprep.subr.mxu0 0.0
    %486 = vmatpush1.msra.mxu0 0.0
    %487 = vmatprep.subr.mxu0 0.0
    %488 = vmatpush1.msra.mxu0 0.0
    %489 = vmatprep.subr.mxu0 0.0
    %490 = vmatpush1.msra.mxu0 0.0
    %491 = vmatprep.subr.mxu0 0.0
    %492 = vmatpush1.msra.mxu0 0.0
    %493 = vmatprep.subr.mxu0 0.0
    %494 = vmatpush1.msra.mxu0 0.0
    %495 = vmatprep.subr.mxu0 0.0
    %496 = vmatpush1.msra.mxu0 0.0
    %497 = vmatprep.subr.mxu0 0.0
    %498 = vmatpush1.msra.mxu0 0.0
    %499 = vmatprep.subr.mxu0 0.0
    %500 = vmatpush1.msra.mxu0 0.0
    %501 = vmatprep.subr.mxu0 0.0
    %502 = vmatpush1.msra.mxu0 0.0
    %503 = vmatprep.subr.mxu0 0.0
    %504 = vmatpush1.msra.mxu0 0.0
    %505 = vmatprep.subr.mxu0 0.0
    %506 = vmatpush1.msra.mxu0 0.0
    %507 = vmatprep.subr.mxu0 0.0
    %508 = vmatpush1.msra.mxu0 0.0
    %509 = vmatprep.subr.mxu0 0.0
    %510 = vmatpush1.msra.mxu0 0.0
    %511 = vmatprep.mubr.f32.mxu0 0.0
    %512 = vmatmul.mubr.f32.gmra.mrb[0].mxu0 %v374
    %v513 = vpop.f32.mrb[0].mxu0
    %v514 = vadd.f32 0.0, %v513
    %v515 = vpop.f32.mrb[0].mxu0
    %v516 = vadd.f32 0.0, %v515
    %517 = vdwg.mxu0
    %v519 = vsel %vm372, %v325, 0
    %521 = vmatprep.subr.mxu0 %v278
    %522 = vmatpush1.msra.mxu0 %v277
    %523 = vmatprep.subr.mxu0 %v300
    %524 = vmatpush1.msra.mxu0 %v299
    %525 = vmatprep.subr.mxu0 %v322
    %526 = vmatpush1.msra.mxu0 %v321
    %527 = vmatprep.subr.mxu0 0.0
    %528 = vmatpush1.msra.mxu0 0.0
    %529 = vmatprep.subr.mxu0 0.0
    %530 = vmatpush1.msra.mxu0 0.0
    %531 = vmatprep.subr.mxu0 0.0
    %532 = vmatpush1.msra.mxu0 0.0
    %533 = vmatprep.subr.mxu0 0.0
    %534 = vmatpush1.msra.mxu0 0.0
    %535 = vmatprep.subr.mxu0 0.0
    %536 = vmatpush1.msra.mxu0 0.0
    %537 = vmatprep.subr.mxu0 0.0
    %538 = vmatpush1.msra.mxu0 0.0
    %539 = vmatprep.subr.mxu0 0.0
    %540 = vmatpush1.msra.mxu0 0.0
    %541 = vmatprep.subr.mxu0 0.0
    %542 = vmatpush1.msra.mxu0 0.0
    %543 = vmatprep.subr.mxu0 0.0
    %544 = vmatpush1.msra.mxu0 0.0
    %545 = vmatprep.subr.mxu0 0.0
    %546 = vmatpush1.msra.mxu0 0.0
    %547 = vmatprep.subr.mxu0 0.0
    %548 = vmatpush1.msra.mxu0 0.0
    %549 = vmatprep.subr.mxu0 0.0
    %550 = vmatpush1.msra.mxu0 0.0
    %551 = vmatprep.subr.mxu0 0.0
    %552 = vmatpush1.msra.mxu0 0.0
    %553 = vmatprep.subr.mxu0 0.0
    %554 = vmatpush1.msra.mxu0 0.0
    %555 = vmatprep.subr.mxu0 0.0
    %556 = vmatpush1.msra.mxu0 0.0
    %557 = vmatprep.subr.mxu0 0.0
    %558 = vmatpush1.msra.mxu0 0.0
    %559 = vmatprep.subr.mxu0 0.0
    %560 = vmatpush1.msra.mxu0 0.0
    %561 = vmatprep.subr.mxu0 0.0
    %562 = vmatpush1.msra.mxu0 0.0
    %563 = vmatprep.subr.mxu0 0.0
    %564 = vmatpush1.msra.mxu0 0.0
    %565 = vmatprep.subr.mxu0 0.0
    %566 = vmatpush1.msra.mxu0 0.0
    %567 = vmatprep.subr.mxu0 0.0
    %568 = vmatpush1.msra.mxu0 0.0
    %569 = vmatprep.subr.mxu0 0.0
    %570 = vmatpush1.msra.mxu0 0.0
    %571 = vmatprep.subr.mxu0 0.0
    %572 = vmatpush1.msra.mxu0 0.0
    %573 = vmatprep.subr.mxu0 0.0
    %574 = vmatpush1.msra.mxu0 0.0
    %575 = vmatprep.subr.mxu0 0.0
    %576 = vmatpush1.msra.mxu0 0.0
    %577 = vmatprep.subr.mxu0 0.0
    %578 = vmatpush1.msra.mxu0 0.0
    %579 = vmatprep.subr.mxu0 0.0
    %580 = vmatpush1.msra.mxu0 0.0
    %581 = vmatprep.subr.mxu0 0.0
    %582 = vmatpush1.msra.mxu0 0.0
    %583 = vmatprep.subr.mxu0 0.0
    %584 = vmatpush1.msra.mxu0 0.0
    %585 = vmatprep.mubr.f32.mxu0 0.0
    %586 = vmatmul.mubr.f32.gmra.mrb[0].mxu0 %v519
    %v587 = vpop.f32.mrb[0].mxu0
    %v588 = vadd.f32 %v443, %v587
    %v589 = vpop.f32.mrb[0].mxu0
    %v590 = vadd.f32 %v445, %v589
    %591 = vdwg.mxu0
    %592 = vmatprep.subr.mxu0 %v280
    %593 = vmatpush1.msra.mxu0 %v279
    %594 = vmatprep.subr.mxu0 %v302
    %595 = vmatpush1.msra.mxu0 %v301
    %596 = vmatprep.subr.mxu0 %v324
    %597 = vmatpush1.msra.mxu0 %v323
    %598 = vmatprep.subr.mxu0 0.0
    %599 = vmatpush1.msra.mxu0 0.0
    %600 = vmatprep.subr.mxu0 0.0
    %601 = vmatpush1.msra.mxu0 0.0
    %602 = vmatprep.subr.mxu0 0.0
    %603 = vmatpush1.msra.mxu0 0.0
    %604 = vmatprep.subr.mxu0 0.0
    %605 = vmatpush1.msra.mxu0 0.0
    %606 = vmatprep.subr.mxu0 0.0
    %607 = vmatpush1.msra.mxu0 0.0
    %608 = vmatprep.subr.mxu0 0.0
    %609 = vmatpush1.msra.mxu0 0.0
    %610 = vmatprep.subr.mxu0 0.0
    %611 = vmatpush1.msra.mxu0 0.0
    %612 = vmatprep.subr.mxu0 0.0
    %613 = vmatpush1.msra.mxu0 0.0
    %614 = vmatprep.subr.mxu0 0.0
    %615 = vmatpush1.msra.mxu0 0.0
    %616 = vmatprep.subr.mxu0 0.0
    %617 = vmatpush1.msra.mxu0 0.0
    %618 = vmatprep.subr.mxu0 0.0
    %619 = vmatpush1.msra.mxu0 0.0
    %620 = vmatprep.subr.mxu0 0.0
    %621 = vmatpush1.msra.mxu0 0.0
    %622 = vmatprep.subr.mxu0 0.0
    %623 = vmatpush1.msra.mxu0 0.0
    %624 = vmatprep.subr.mxu0 0.0
    %625 = vmatpush1.msra.mxu0 0.0
    %626 = vmatprep.subr.mxu0 0.0
    %627 = vmatpush1.msra.mxu0 0.0
    %628 = vmatprep.subr.mxu0 0.0
    %629 = vmatpush1.msra.mxu0 0.0
    %630 = vmatprep.subr.mxu0 0.0
    %631 = vmatpush1.msra.mxu0 0.0
    %632 = vmatprep.subr.mxu0 0.0
    %633 = vmatpush1.msra.mxu0 0.0
    %634 = vmatprep.subr.mxu0 0.0
    %635 = vmatpush1.msra.mxu0 0.0
    %636 = vmatprep.subr.mxu0 0.0
    %637 = vmatpush1.msra.mxu0 0.0
    %638 = vmatprep.subr.mxu0 0.0
    %639 = vmatpush1.msra.mxu0 0.0
    %640 = vmatprep.subr.mxu0 0.0
    %641 = vmatpush1.msra.mxu0 0.0
    %642 = vmatprep.subr.mxu0 0.0
    %643 = vmatpush1.msra.mxu0 0.0
    %644 = vmatprep.subr.mxu0 0.0
    %645 = vmatpush1.msra.mxu0 0.0
    %646 = vmatprep.subr.mxu0 0.0
    %647 = vmatpush1.msra.mxu0 0.0
    %648 = vmatprep.subr.mxu0 0.0
    %649 = vmatpush1.msra.mxu0 0.0
    %650 = vmatprep.subr.mxu0 0.0
    %651 = vmatpush1.msra.mxu0 0.0
    %652 = vmatprep.subr.mxu0 0.0
    %653 = vmatpush1.msra.mxu0 0.0
    %654 = vmatprep.subr.mxu0 0.0
    %655 = vmatpush1.msra.mxu0 0.0
    %656 = vmatprep.mubr.f32.mxu0 0.0
    %657 = vmatmul.mubr.f32.gmra.mrb[0].mxu0 %v519
    %v658 = vpop.f32.mrb[0].mxu0
    %v659 = vadd.f32 %v514, %v658
    %v660 = vpop.f32.mrb[0].mxu0
    %v661 = vadd.f32 %v516, %v660
    %662 = vdwg.mxu0
    %663 = vrot.lane.b32.xlu0 %v183, 113
    %v664 = vpop.permute.xlu0 %663
    %665 = vrot.lane.b32.xlu0 %v185, 113
    %v666 = vpop.permute.xlu0 %665
    %667 = vrot.lane.b32.xlu0 %v254, 113
    %v668 = vpop.permute.xlu0 %667
    %669 = vrot.lane.b32.xlu0 %v256, 113
    %v670 = vpop.permute.xlu0 %669
    %vm671 = vcmp.lt.s32.totalorder %v267, 113
    %v672 = vsel %vm671, %v668, %v670
    %v673 = vsel %vm671, %v666, %v668
    %v674 = vsel %vm671, %v664, %v666
    %v675 = vsel %vm671, %v670, %v664
    %s676 = scalar_lea.vmem %s9, 192
    %v677 = vld [vmem:[%s676] sm:$0xff]
    %v678 = vld [vmem:[%s676 + $0x8] sm:$0xff]
    %v679 = vld [vmem:[%s676 + $0x10] sm:$0xff]
    %v680 = vld [vmem:[%s676 + $0x18] sm:$0xff]
    %v681 = vmul.f32 %v677, %v674
    %v682 = vmul.f32 %v678, %v673
    %v683 = vmul.f32 %v679, %v672
    %v684 = vmul.f32 %v680, %v675
    %685 = vrot.lane.b32.xlu0 %v183, 112
    %v686 = vpop.permute.xlu0 %685
    %687 = vrot.lane.b32.xlu0 %v185, 112
    %v688 = vpop.permute.xlu0 %687
    %689 = vrot.lane.b32.xlu0 %v254, 112
    %v690 = vpop.permute.xlu0 %689
    %691 = vrot.lane.b32.xlu0 %v256, 112
    %v692 = vpop.permute.xlu0 %691
    %vm693 = vcmp.lt.s32.totalorder %v267, 112
    %v694 = vsel %vm693, %v690, %v692
    %v695 = vsel %vm693, %v688, %v690
    %v696 = vsel %vm693, %v686, %v688
    %v697 = vsel %vm693, %v692, %v686
    %s698 = scalar_lea.vmem %s9, 224
    %v699 = vld [vmem:[%s698] sm:$0xff]
    %v700 = vld [vmem:[%s698 + $0x8] sm:$0xff]
    %v701 = vld [vmem:[%s698 + $0x10] sm:$0xff]
    %v702 = vld [vmem:[%s698 + $0x18] sm:$0xff]
    %v703 = vmul.f32 %v699, %v696
    %v704 = vmul.f32 %v700, %v695
    %v705 = vmul.f32 %v701, %v694
    %v706 = vmul.f32 %v702, %v697
    %707 = vrot.lane.b32.xlu0 %v183, 111
    %v708 = vpop.permute.xlu0 %707
    %709 = vrot.lane.b32.xlu0 %v185, 111
    %v710 = vpop.permute.xlu0 %709
    %711 = vrot.lane.b32.xlu0 %v254, 111
    %v712 = vpop.permute.xlu0 %711
    %713 = vrot.lane.b32.xlu0 %v256, 111
    %v714 = vpop.permute.xlu0 %713
    %vm715 = vcmp.lt.s32.totalorder %v267, 111
    %v716 = vsel %vm715, %v712, %v714
    %v717 = vsel %vm715, %v710, %v712
    %v718 = vsel %vm715, %v708, %v710
    %v719 = vsel %vm715, %v714, %v708
    %s720 = scalar_lea.vmem %s9, 256
    %v721 = vld [vmem:[%s720] sm:$0xff]
    %v722 = vld [vmem:[%s720 + $0x8] sm:$0xff]
    %v723 = vld [vmem:[%s720 + $0x10] sm:$0xff]
    %v724 = vld [vmem:[%s720 + $0x18] sm:$0xff]
    %v725 = vmul.f32 %v721, %v718
    %v726 = vmul.f32 %v722, %v717
    %v727 = vmul.f32 %v723, %v716
    %v728 = vmul.f32 %v724, %v719
    %s729 = scalar_lea.vmem %s5, 16
    %v730 = vld [vmem:[%s729] sm:$0xff]
    %v732 = vsel %vm372, %v730, 0
    %734 = vmatprep.subr.mxu0 %v682
    %735 = vmatpush1.msra.mxu0 %v681
    %736 = vmatprep.subr.mxu0 %v704
    %737 = vmatpush1.msra.mxu0 %v703
    %738 = vmatprep.subr.mxu0 %v726
    %739 = vmatpush1.msra.mxu0 %v725
    %740 = vmatprep.subr.mxu0 0.0
    %741 = vmatpush1.msra.mxu0 0.0
    %742 = vmatprep.subr.mxu0 0.0
    %743 = vmatpush1.msra.mxu0 0.0
    %744 = vmatprep.subr.mxu0 0.0
    %745 = vmatpush1.msra.mxu0 0.0
    %746 = vmatprep.subr.mxu0 0.0
    %747 = vmatpush1.msra.mxu0 0.0
    %748 = vmatprep.subr.mxu0 0.0
    %749 = vmatpush1.msra.mxu0 0.0
    %750 = vmatprep.subr.mxu0 0.0
    %751 = vmatpush1.msra.mxu0 0.0
    %752 = vmatprep.subr.mxu0 0.0
    %753 = vmatpush1.msra.mxu0 0.0
    %754 = vmatprep.subr.mxu0 0.0
    %755 = vmatpush1.msra.mxu0 0.0
    %756 = vmatprep.subr.mxu0 0.0
    %757 = vmatpush1.msra.mxu0 0.0
    %758 = vmatprep.subr.mxu0 0.0
    %759 = vmatpush1.msra.mxu0 0.0
    %760 = vmatprep.subr.mxu0 0.0
    %761 = vmatpush1.msra.mxu0 0.0
    %762 = vmatprep.subr.mxu0 0.0
    %763 = vmatpush1.msra.mxu0 0.0
    %764 = vmatprep.subr.mxu0 0.0
    %765 = vmatpush1.msra.mxu0 0.0
    %766 = vmatprep.subr.mxu0 0.0
    %767 = vmatpush1.msra.mxu0 0.0
    %768 = vmatprep.subr.mxu0 0.0
    %769 = vmatpush1.msra.mxu0 0.0
    %770 = vmatprep.subr.mxu0 0.0
    %771 = vmatpush1.msra.mxu0 0.0
    %772 = vmatprep.subr.mxu0 0.0
    %773 = vmatpush1.msra.mxu0 0.0
    %774 = vmatprep.subr.mxu0 0.0
    %775 = vmatpush1.msra.mxu0 0.0
    %776 = vmatprep.subr.mxu0 0.0
    %777 = vmatpush1.msra.mxu0 0.0
    %778 = vmatprep.subr.mxu0 0.0
    %779 = vmatpush1.msra.mxu0 0.0
    %780 = vmatprep.subr.mxu0 0.0
    %781 = vmatpush1.msra.mxu0 0.0
    %782 = vmatprep.subr.mxu0 0.0
    %783 = vmatpush1.msra.mxu0 0.0
    %784 = vmatprep.subr.mxu0 0.0
    %785 = vmatpush1.msra.mxu0 0.0
    %786 = vmatprep.subr.mxu0 0.0
    %787 = vmatpush1.msra.mxu0 0.0
    %788 = vmatprep.subr.mxu0 0.0
    %789 = vmatpush1.msra.mxu0 0.0
    %790 = vmatprep.subr.mxu0 0.0
    %791 = vmatpush1.msra.mxu0 0.0
    %792 = vmatprep.subr.mxu0 0.0
    %793 = vmatpush1.msra.mxu0 0.0
    %794 = vmatprep.subr.mxu0 0.0
    %795 = vmatpush1.msra.mxu0 0.0
    %796 = vmatprep.subr.mxu0 0.0
    %797 = vmatpush1.msra.mxu0 0.0
    %798 = vmatprep.mubr.f32.mxu0 0.0
    %799 = vmatmul.mubr.f32.gmra.mrb[0].mxu0 %v732
    %v800 = vpop.f32.mrb[0].mxu0
    %v801 = vadd.f32 0.0, %v800
    %v802 = vpop.f32.mrb[0].mxu0
    %v803 = vadd.f32 0.0, %v802
    %804 = vdwg.mxu0
    %805 = vmatprep.subr.mxu0 %v684
    %806 = vmatpush1.msra.mxu0 %v683
    %807 = vmatprep.subr.mxu0 %v706
    %808 = vmatpush1.msra.mxu0 %v705
    %809 = vmatprep.subr.mxu0 %v728
    %810 = vmatpush1.msra.mxu0 %v727
    %811 = vmatprep.subr.mxu0 0.0
    %812 = vmatpush1.msra.mxu0 0.0
    %813 = vmatprep.subr.mxu0 0.0
    %814 = vmatpush1.msra.mxu0 0.0
    %815 = vmatprep.subr.mxu0 0.0
    %816 = vmatpush1.msra.mxu0 0.0
    %817 = vmatprep.subr.mxu0 0.0
    %818 = vmatpush1.msra.mxu0 0.0
    %819 = vmatprep.subr.mxu0 0.0
    %820 = vmatpush1.msra.mxu0 0.0
    %821 = vmatprep.subr.mxu0 0.0
    %822 = vmatpush1.msra.mxu0 0.0
    %823 = vmatprep.subr.mxu0 0.0
    %824 = vmatpush1.msra.mxu0 0.0
    %825 = vmatprep.subr.mxu0 0.0
    %826 = vmatpush1.msra.mxu0 0.0
    %827 = vmatprep.subr.mxu0 0.0
    %828 = vmatpush1.msra.mxu0 0.0
    %829 = vmatprep.subr.mxu0 0.0
    %830 = vmatpush1.msra.mxu0 0.0
    %831 = vmatprep.subr.mxu0 0.0
    %832 = vmatpush1.msra.mxu0 0.0
    %833 = vmatprep.subr.mxu0 0.0
    %834 = vmatpush1.msra.mxu0 0.0
    %835 = vmatprep.subr.mxu0 0.0
    %836 = vmatpush1.msra.mxu0 0.0
    %837 = vmatprep.subr.mxu0 0.0
    %838 = vmatpush1.msra.mxu0 0.0
    %839 = vmatprep.subr.mxu0 0.0
    %840 = vmatpush1.msra.mxu0 0.0
    %841 = vmatprep.subr.mxu0 0.0
    %842 = vmatpush1.msra.mxu0 0.0
    %843 = vmatprep.subr.mxu0 0.0
    %844 = vmatpush1.msra.mxu0 0.0
    %845 = vmatprep.subr.mxu0 0.0
    %846 = vmatpush1.msra.mxu0 0.0
    %847 = vmatprep.subr.mxu0 0.0
    %848 = vmatpush1.msra.mxu0 0.0
    %849 = vmatprep.subr.mxu0 0.0
    %850 = vmatpush1.msra.mxu0 0.0
    %851 = vmatprep.subr.mxu0 0.0
    %852 = vmatpush1.msra.mxu0 0.0
    %853 = vmatprep.subr.mxu0 0.0
    %854 = vmatpush1.msra.mxu0 0.0
    %855 = vmatprep.subr.mxu0 0.0
    %856 = vmatpush1.msra.mxu0 0.0
    %857 = vmatprep.subr.mxu0 0.0
    %858 = vmatpush1.msra.mxu0 0.0
    %859 = vmatprep.subr.mxu0 0.0
    %860 = vmatpush1.msra.mxu0 0.0
    %861 = vmatprep.subr.mxu0 0.0
    %862 = vmatpush1.msra.mxu0 0.0
    %863 = vmatprep.subr.mxu0 0.0
    %864 = vmatpush1.msra.mxu0 0.0
    %865 = vmatprep.subr.mxu0 0.0
    %866 = vmatpush1.msra.mxu0 0.0
    %867 = vmatprep.subr.mxu0 0.0
    %868 = vmatpush1.msra.mxu0 0.0
    %869 = vmatprep.mubr.f32.mxu0 0.0
    %870 = vmatmul.mubr.f32.gmra.mrb[0].mxu0 %v732
    %v871 = vpop.f32.mrb[0].mxu0
    %v872 = vadd.f32 0.0, %v871
    %v873 = vpop.f32.mrb[0].mxu0
    %v874 = vadd.f32 0.0, %v873
    %875 = vdwg.mxu0
    %v876 = vadd.f32 %v588, %v801
    %v877 = vadd.f32 %v590, %v803
    %v878 = vadd.f32 %v659, %v872
    %v879 = vadd.f32 %v661, %v874
    %v880 = vld [vmem:[%s6] sm:$0xff]
    %882 = vset.pattern.permute.xlu0 0
    %883 = vperm.xlu0 %882, %v880
    %v884 = vpop.permute.xlu0 %883
    %v886 = vadd.f32 %v876, %v884
    %v887 = vadd.f32 %v877, %v884
    %v888 = vadd.f32 %v878, %v884
    %v889 = vadd.f32 %v879, %v884
    %v890 = vmax.f32 %v886, 0.0
    %v891 = vmax.f32 %v887, 0.0
    %v892 = vmax.f32 %v888, 0.0
    %v893 = vmax.f32 %v889, 0.0
    %894 = vrot.lane.b32.xlu0 %v890, 17
    %v895 = vpop.permute.xlu0 %894
    %896 = vrot.lane.b32.xlu0 %v891, 17
    %v897 = vpop.permute.xlu0 %896
    %898 = vrot.lane.b32.xlu0 %v892, 17
    %v899 = vpop.permute.xlu0 %898
    %900 = vrot.lane.b32.xlu0 %v893, 17
    %v901 = vpop.permute.xlu0 %900
    %v902 = vsel %vm268, %v899, %v901
    %v903 = vsel %vm268, %v897, %v899
    %v904 = vsel %vm268, %v895, %v897
    %v905 = vsel %vm268, %v901, %v895
    %v906 = vmul.f32 %v273, %v905
    %v907 = vmul.f32 %v274, %v904
    %v908 = vmul.f32 %v275, %v903
    %v909 = vmul.f32 %v276, %v902
    %910 = vrot.lane.b32.xlu0 %v890, 16
    %v911 = vpop.permute.xlu0 %910
    %912 = vrot.lane.b32.xlu0 %v891, 16
    %v913 = vpop.permute.xlu0 %912
    %914 = vrot.lane.b32.xlu0 %v892, 16
    %v915 = vpop.permute.xlu0 %914
    %916 = vrot.lane.b32.xlu0 %v893, 16
    %v917 = vpop.permute.xlu0 %916
    %v918 = vsel %vm289, %v915, %v917
    %v919 = vsel %vm289, %v913, %v915
    %v920 = vsel %vm289, %v911, %v913
    %v921 = vsel %vm289, %v917, %v911
    %v922 = vmul.f32 %v295, %v921
    %v923 = vmul.f32 %v296, %v920
    %v924 = vmul.f32 %v297, %v919
    %v925 = vmul.f32 %v298, %v918
    %926 = vrot.lane.b32.xlu0 %v890, 15
    %v927 = vpop.permute.xlu0 %926
    %928 = vrot.lane.b32.xlu0 %v891, 15
    %v929 = vpop.permute.xlu0 %928
    %930 = vrot.lane.b32.xlu0 %v892, 15
    %v931 = vpop.permute.xlu0 %930
    %932 = vrot.lane.b32.xlu0 %v893, 15
    %v933 = vpop.permute.xlu0 %932
    %v934 = vsel %vm311, %v931, %v933
    %v935 = vsel %vm311, %v929, %v931
    %v936 = vsel %vm311, %v927, %v929
    %v937 = vsel %vm311, %v933, %v927
    %v938 = vmul.f32 %v317, %v937
    %v939 = vmul.f32 %v318, %v936
    %v940 = vmul.f32 %v319, %v935
    %v941 = vmul.f32 %v320, %v934
    %s942 = scalar_lea.vmem %s5, 24
    %v943 = vld [vmem:[%s942] sm:$0xff]
    %944 = vrot.lane.b32.xlu0 %v890, 1
    %v945 = vpop.permute.xlu0 %944
    %946 = vrot.lane.b32.xlu0 %v891, 1
    %v947 = vpop.permute.xlu0 %946
    %948 = vrot.lane.b32.xlu0 %v892, 1
    %v949 = vpop.permute.xlu0 %948
    %950 = vrot.lane.b32.xlu0 %v893, 1
    %v951 = vpop.permute.xlu0 %950
    %v952 = vsel %vm334, %v949, %v951
    %v953 = vsel %vm334, %v947, %v949
    %v954 = vsel %vm334, %v945, %v947
    %v955 = vsel %vm334, %v951, %v945
    %v956 = vmul.f32 %v340, %v955
    %v957 = vmul.f32 %v341, %v954
    %v958 = vmul.f32 %v342, %v953
    %v959 = vmul.f32 %v343, %v952
    %960 = vrot.lane.b32.xlu0 %v890, 127
    %v961 = vpop.permute.xlu0 %960
    %962 = vrot.lane.b32.xlu0 %v891, 127
    %v963 = vpop.permute.xlu0 %962
    %964 = vrot.lane.b32.xlu0 %v892, 127
    %v965 = vpop.permute.xlu0 %964
    %966 = vrot.lane.b32.xlu0 %v893, 127
    %v967 = vpop.permute.xlu0 %966
    %v968 = vsel %vm356, %v965, %v967
    %v969 = vsel %vm356, %v963, %v965
    %v970 = vsel %vm356, %v961, %v963
    %v971 = vsel %vm356, %v967, %v961
    %v972 = vmul.f32 %v362, %v970
    %v973 = vmul.f32 %v363, %v969
    %v974 = vmul.f32 %v364, %v968
    %v975 = vmul.f32 %v365, %v971
    %s976 = scalar_lea.vmem %s5, 32
    %v977 = vld [vmem:[%s976] sm:$0xff]
    %v979 = vsel %vm372, %v977, 0
    %981 = vmatprep.subr.mxu0 %v957
    %982 = vmatpush1.msra.mxu0 %v956
    %983 = vmatprep.subr.mxu0 %v891
    %984 = vmatpush1.msra.mxu0 %v890
    %985 = vmatprep.subr.mxu0 %v973
    %986 = vmatpush1.msra.mxu0 %v972
    %987 = vmatprep.subr.mxu0 0.0
    %988 = vmatpush1.msra.mxu0 0.0
    %989 = vmatprep.subr.mxu0 0.0
    %990 = vmatpush1.msra.mxu0 0.0
    %991 = vmatprep.subr.mxu0 0.0
    %992 = vmatpush1.msra.mxu0 0.0
    %993 = vmatprep.subr.mxu0 0.0
    %994 = vmatpush1.msra.mxu0 0.0
    %995 = vmatprep.subr.mxu0 0.0
    %996 = vmatpush1.msra.mxu0 0.0
    %997 = vmatprep.subr.mxu0 0.0
    %998 = vmatpush1.msra.mxu0 0.0
    %999 = vmatprep.subr.mxu0 0.0
    %1000 = vmatpush1.msra.mxu0 0.0
    %1001 = vmatprep.subr.mxu0 0.0
    %1002 = vmatpush1.msra.mxu0 0.0
    %1003 = vmatprep.subr.mxu0 0.0
    %1004 = vmatpush1.msra.mxu0 0.0
    %1005 = vmatprep.subr.mxu0 0.0
    %1006 = vmatpush1.msra.mxu0 0.0
    %1007 = vmatprep.subr.mxu0 0.0
    %1008 = vmatpush1.msra.mxu0 0.0
    %1009 = vmatprep.subr.mxu0 0.0
    %1010 = vmatpush1.msra.mxu0 0.0
    %1011 = vmatprep.subr.mxu0 0.0
    %1012 = vmatpush1.msra.mxu0 0.0
    %1013 = vmatprep.subr.mxu0 0.0
    %1014 = vmatpush1.msra.mxu0 0.0
    %1015 = vmatprep.subr.mxu0 0.0
    %1016 = vmatpush1.msra.mxu0 0.0
    %1017 = vmatprep.subr.mxu0 0.0
    %1018 = vmatpush1.msra.mxu0 0.0
    %1019 = vmatprep.subr.mxu0 0.0
    %1020 = vmatpush1.msra.mxu0 0.0
    %1021 = vmatprep.subr.mxu0 0.0
    %1022 = vmatpush1.msra.mxu0 0.0
    %1023 = vmatprep.subr.mxu0 0.0
    %1024 = vmatpush1.msra.mxu0 0.0
    %1025 = vmatprep.subr.mxu0 0.0
    %1026 = vmatpush1.msra.mxu0 0.0
    %1027 = vmatprep.subr.mxu0 0.0
    %1028 = vmatpush1.msra.mxu0 0.0
    %1029 = vmatprep.subr.mxu0 0.0
    %1030 = vmatpush1.msra.mxu0 0.0
    %1031 = vmatprep.subr.mxu0 0.0
    %1032 = vmatpush1.msra.mxu0 0.0
    %1033 = vmatprep.subr.mxu0 0.0
    %1034 = vmatpush1.msra.mxu0 0.0
    %1035 = vmatprep.subr.mxu0 0.0
    %1036 = vmatpush1.msra.mxu0 0.0
    %1037 = vmatprep.subr.mxu0 0.0
    %1038 = vmatpush1.msra.mxu0 0.0
    %1039 = vmatprep.subr.mxu0 0.0
    %1040 = vmatpush1.msra.mxu0 0.0
    %1041 = vmatprep.subr.mxu0 0.0
    %1042 = vmatpush1.msra.mxu0 0.0
    %1043 = vmatprep.subr.mxu0 0.0
    %1044 = vmatpush1.msra.mxu0 0.0
    %1045 = vmatprep.mubr.f32.mxu0 0.0
    %1046 = vmatmul.mubr.f32.gmra.mrb[0].mxu0 %v979
    %v1047 = vpop.f32.mrb[0].mxu0
    %v1048 = vadd.f32 0.0, %v1047
    %v1049 = vpop.f32.mrb[0].mxu0
    %v1050 = vadd.f32 0.0, %v1049
    %1051 = vdwg.mxu0
    %1052 = vmatprep.subr.mxu0 %v959
    %1053 = vmatpush1.msra.mxu0 %v958
    %1054 = vmatprep.subr.mxu0 %v893
    %1055 = vmatpush1.msra.mxu0 %v892
    %1056 = vmatprep.subr.mxu0 %v975
    %1057 = vmatpush1.msra.mxu0 %v974
    %1058 = vmatprep.subr.mxu0 0.0
    %1059 = vmatpush1.msra.mxu0 0.0
    %1060 = vmatprep.subr.mxu0 0.0
    %1061 = vmatpush1.msra.mxu0 0.0
    %1062 = vmatprep.subr.mxu0 0.0
    %1063 = vmatpush1.msra.mxu0 0.0
    %1064 = vmatprep.subr.mxu0 0.0
    %1065 = vmatpush1.msra.mxu0 0.0
    %1066 = vmatprep.subr.mxu0 0.0
    %1067 = vmatpush1.msra.mxu0 0.0
    %1068 = vmatprep.subr.mxu0 0.0
    %1069 = vmatpush1.msra.mxu0 0.0
    %1070 = vmatprep.subr.mxu0 0.0
    %1071 = vmatpush1.msra.mxu0 0.0
    %1072 = vmatprep.subr.mxu0 0.0
    %1073 = vmatpush1.msra.mxu0 0.0
    %1074 = vmatprep.subr.mxu0 0.0
    %1075 = vmatpush1.msra.mxu0 0.0
    %1076 = vmatprep.subr.mxu0 0.0
    %1077 = vmatpush1.msra.mxu0 0.0
    %1078 = vmatprep.subr.mxu0 0.0
    %1079 = vmatpush1.msra.mxu0 0.0
    %1080 = vmatprep.subr.mxu0 0.0
    %1081 = vmatpush1.msra.mxu0 0.0
    %1082 = vmatprep.subr.mxu0 0.0
    %1083 = vmatpush1.msra.mxu0 0.0
    %1084 = vmatprep.subr.mxu0 0.0
    %1085 = vmatpush1.msra.mxu0 0.0
    %1086 = vmatprep.subr.mxu0 0.0
    %1087 = vmatpush1.msra.mxu0 0.0
    %1088 = vmatprep.subr.mxu0 0.0
    %1089 = vmatpush1.msra.mxu0 0.0
    %1090 = vmatprep.subr.mxu0 0.0
    %1091 = vmatpush1.msra.mxu0 0.0
    %1092 = vmatprep.subr.mxu0 0.0
    %1093 = vmatpush1.msra.mxu0 0.0
    %1094 = vmatprep.subr.mxu0 0.0
    %1095 = vmatpush1.msra.mxu0 0.0
    %1096 = vmatprep.subr.mxu0 0.0
    %1097 = vmatpush1.msra.mxu0 0.0
    %1098 = vmatprep.subr.mxu0 0.0
    %1099 = vmatpush1.msra.mxu0 0.0
    %1100 = vmatprep.subr.mxu0 0.0
    %1101 = vmatpush1.msra.mxu0 0.0
    %1102 = vmatprep.subr.mxu0 0.0
    %1103 = vmatpush1.msra.mxu0 0.0
    %1104 = vmatprep.subr.mxu0 0.0
    %1105 = vmatpush1.msra.mxu0 0.0
    %1106 = vmatprep.subr.mxu0 0.0
    %1107 = vmatpush1.msra.mxu0 0.0
    %1108 = vmatprep.subr.mxu0 0.0
    %1109 = vmatpush1.msra.mxu0 0.0
    %1110 = vmatprep.subr.mxu0 0.0
    %1111 = vmatpush1.msra.mxu0 0.0
    %1112 = vmatprep.subr.mxu0 0.0
    %1113 = vmatpush1.msra.mxu0 0.0
    %1114 = vmatprep.subr.mxu0 0.0
    %1115 = vmatpush1.msra.mxu0 0.0
    %1116 = vmatprep.mubr.f32.mxu0 0.0
    %1117 = vmatmul.mubr.f32.gmra.mrb[0].mxu0 %v979
    %v1118 = vpop.f32.mrb[0].mxu0
    %v1119 = vadd.f32 0.0, %v1118
    %v1120 = vpop.f32.mrb[0].mxu0
    %v1121 = vadd.f32 0.0, %v1120
    %1122 = vdwg.mxu0
    %v1124 = vsel %vm372, %v943, 0
    %1126 = vmatprep.subr.mxu0 %v907
    %1127 = vmatpush1.msra.mxu0 %v906
    %1128 = vmatprep.subr.mxu0 %v923
    %1129 = vmatpush1.msra.mxu0 %v922
    %1130 = vmatprep.subr.mxu0 %v939
    %1131 = vmatpush1.msra.mxu0 %v938
    %1132 = vmatprep.subr.mxu0 0.0
    %1133 = vmatpush1.msra.mxu0 0.0
    %1134 = vmatprep.subr.mxu0 0.0
    %1135 = vmatpush1.msra.mxu0 0.0
    %1136 = vmatprep.subr.mxu0 0.0
    %1137 = vmatpush1.msra.mxu0 0.0
    %1138 = vmatprep.subr.mxu0 0.0
    %1139 = vmatpush1.msra.mxu0 0.0
    %1140 = vmatprep.subr.mxu0 0.0
    %1141 = vmatpush1.msra.mxu0 0.0
    %1142 = vmatprep.subr.mxu0 0.0
    %1143 = vmatpush1.msra.mxu0 0.0
    %1144 = vmatprep.subr.mxu0 0.0
    %1145 = vmatpush1.msra.mxu0 0.0
    %1146 = vmatprep.subr.mxu0 0.0
    %1147 = vmatpush1.msra.mxu0 0.0
    %1148 = vmatprep.subr.mxu0 0.0
    %1149 = vmatpush1.msra.mxu0 0.0
    %1150 = vmatprep.subr.mxu0 0.0
    %1151 = vmatpush1.msra.mxu0 0.0
    %1152 = vmatprep.subr.mxu0 0.0
    %1153 = vmatpush1.msra.mxu0 0.0
    %1154 = vmatprep.subr.mxu0 0.0
    %1155 = vmatpush1.msra.mxu0 0.0
    %1156 = vmatprep.subr.mxu0 0.0
    %1157 = vmatpush1.msra.mxu0 0.0
    %1158 = vmatprep.subr.mxu0 0.0
    %1159 = vmatpush1.msra.mxu0 0.0
    %1160 = vmatprep.subr.mxu0 0.0
    %1161 = vmatpush1.msra.mxu0 0.0
    %1162 = vmatprep.subr.mxu0 0.0
    %1163 = vmatpush1.msra.mxu0 0.0
    %1164 = vmatprep.subr.mxu0 0.0
    %1165 = vmatpush1.msra.mxu0 0.0
    %1166 = vmatprep.subr.mxu0 0.0
    %1167 = vmatpush1.msra.mxu0 0.0
    %1168 = vmatprep.subr.mxu0 0.0
    %1169 = vmatpush1.msra.mxu0 0.0
    %1170 = vmatprep.subr.mxu0 0.0
    %1171 = vmatpush1.msra.mxu0 0.0
    %1172 = vmatprep.subr.mxu0 0.0
    %1173 = vmatpush1.msra.mxu0 0.0
    %1174 = vmatprep.subr.mxu0 0.0
    %1175 = vmatpush1.msra.mxu0 0.0
    %1176 = vmatprep.subr.mxu0 0.0
    %1177 = vmatpush1.msra.mxu0 0.0
    %1178 = vmatprep.subr.mxu0 0.0
    %1179 = vmatpush1.msra.mxu0 0.0
    %1180 = vmatprep.subr.mxu0 0.0
    %1181 = vmatpush1.msra.mxu0 0.0
    %1182 = vmatprep.subr.mxu0 0.0
    %1183 = vmatpush1.msra.mxu0 0.0
    %1184 = vmatprep.subr.mxu0 0.0
    %1185 = vmatpush1.msra.mxu0 0.0
    %1186 = vmatprep.subr.mxu0 0.0
    %1187 = vmatpush1.msra.mxu0 0.0
    %1188 = vmatprep.subr.mxu0 0.0
    %1189 = vmatpush1.msra.mxu0 0.0
    %1190 = vmatprep.mubr.f32.mxu0 0.0
    %1191 = vmatmul.mubr.f32.gmra.mrb[0].mxu0 %v1124
    %v1192 = vpop.f32.mrb[0].mxu0
    %v1193 = vadd.f32 %v1048, %v1192
    %v1194 = vpop.f32.mrb[0].mxu0
    %v1195 = vadd.f32 %v1050, %v1194
    %1196 = vdwg.mxu0
    %1197 = vmatprep.subr.mxu0 %v909
    %1198 = vmatpush1.msra.mxu0 %v908
    %1199 = vmatprep.subr.mxu0 %v925
    %1200 = vmatpush1.msra.mxu0 %v924
    %1201 = vmatprep.subr.mxu0 %v941
    %1202 = vmatpush1.msra.mxu0 %v940
    %1203 = vmatprep.subr.mxu0 0.0
    %1204 = vmatpush1.msra.mxu0 0.0
    %1205 = vmatprep.subr.mxu0 0.0
    %1206 = vmatpush1.msra.mxu0 0.0
    %1207 = vmatprep.subr.mxu0 0.0
    %1208 = vmatpush1.msra.mxu0 0.0
    %1209 = vmatprep.subr.mxu0 0.0
    %1210 = vmatpush1.msra.mxu0 0.0
    %1211 = vmatprep.subr.mxu0 0.0
    %1212 = vmatpush1.msra.mxu0 0.0
    %1213 = vmatprep.subr.mxu0 0.0
    %1214 = vmatpush1.msra.mxu0 0.0
    %1215 = vmatprep.subr.mxu0 0.0
    %1216 = vmatpush1.msra.mxu0 0.0
    %1217 = vmatprep.subr.mxu0 0.0
    %1218 = vmatpush1.msra.mxu0 0.0
    %1219 = vmatprep.subr.mxu0 0.0
    %1220 = vmatpush1.msra.mxu0 0.0
    %1221 = vmatprep.subr.mxu0 0.0
    %1222 = vmatpush1.msra.mxu0 0.0
    %1223 = vmatprep.subr.mxu0 0.0
    %1224 = vmatpush1.msra.mxu0 0.0
    %1225 = vmatprep.subr.mxu0 0.0
    %1226 = vmatpush1.msra.mxu0 0.0
    %1227 = vmatprep.subr.mxu0 0.0
    %1228 = vmatpush1.msra.mxu0 0.0
    %1229 = vmatprep.subr.mxu0 0.0
    %1230 = vmatpush1.msra.mxu0 0.0
    %1231 = vmatprep.subr.mxu0 0.0
    %1232 = vmatpush1.msra.mxu0 0.0
    %1233 = vmatprep.subr.mxu0 0.0
    %1234 = vmatpush1.msra.mxu0 0.0
    %1235 = vmatprep.subr.mxu0 0.0
    %1236 = vmatpush1.msra.mxu0 0.0
    %1237 = vmatprep.subr.mxu0 0.0
    %1238 = vmatpush1.msra.mxu0 0.0
    %1239 = vmatprep.subr.mxu0 0.0
    %1240 = vmatpush1.msra.mxu0 0.0
    %1241 = vmatprep.subr.mxu0 0.0
    %1242 = vmatpush1.msra.mxu0 0.0
    %1243 = vmatprep.subr.mxu0 0.0
    %1244 = vmatpush1.msra.mxu0 0.0
    %1245 = vmatprep.subr.mxu0 0.0
    %1246 = vmatpush1.msra.mxu0 0.0
    %1247 = vmatprep.subr.mxu0 0.0
    %1248 = vmatpush1.msra.mxu0 0.0
    %1249 = vmatprep.subr.mxu0 0.0
    %1250 = vmatpush1.msra.mxu0 0.0
    %1251 = vmatprep.subr.mxu0 0.0
    %1252 = vmatpush1.msra.mxu0 0.0
    %1253 = vmatprep.subr.mxu0 0.0
    %1254 = vmatpush1.msra.mxu0 0.0
    %1255 = vmatprep.subr.mxu0 0.0
    %1256 = vmatpush1.msra.mxu0 0.0
    %1257 = vmatprep.subr.mxu0 0.0
    %1258 = vmatpush1.msra.mxu0 0.0
    %1259 = vmatprep.subr.mxu0 0.0
    %1260 = vmatpush1.msra.mxu0 0.0
    %1261 = vmatprep.mubr.f32.mxu0 0.0
    %1262 = vmatmul.mubr.f32.gmra.mrb[0].mxu0 %v1124
    %v1263 = vpop.f32.mrb[0].mxu0
    %v1264 = vadd.f32 %v1119, %v1263
    %v1265 = vpop.f32.mrb[0].mxu0
    %v1266 = vadd.f32 %v1121, %v1265
    %1267 = vdwg.mxu0
    %1268 = vrot.lane.b32.xlu0 %v890, 113
    %v1269 = vpop.permute.xlu0 %1268
    %1270 = vrot.lane.b32.xlu0 %v891, 113
    %v1271 = vpop.permute.xlu0 %1270
    %1272 = vrot.lane.b32.xlu0 %v892, 113
    %v1273 = vpop.permute.xlu0 %1272
    %1274 = vrot.lane.b32.xlu0 %v893, 113
    %v1275 = vpop.permute.xlu0 %1274
    %v1276 = vsel %vm671, %v1273, %v1275
    %v1277 = vsel %vm671, %v1271, %v1273
    %v1278 = vsel %vm671, %v1269, %v1271
    %v1279 = vsel %vm671, %v1275, %v1269
    %v1280 = vmul.f32 %v677, %v1278
    %v1281 = vmul.f32 %v678, %v1277
    %v1282 = vmul.f32 %v679, %v1276
    %v1283 = vmul.f32 %v680, %v1279
    %1284 = vrot.lane.b32.xlu0 %v890, 112
    %v1285 = vpop.permute.xlu0 %1284
    %1286 = vrot.lane.b32.xlu0 %v891, 112
    %v1287 = vpop.permute.xlu0 %1286
    %1288 = vrot.lane.b32.xlu0 %v892, 112
    %v1289 = vpop.permute.xlu0 %1288
    %1290 = vrot.lane.b32.xlu0 %v893, 112
    %v1291 = vpop.permute.xlu0 %1290
    %v1292 = vsel %vm693, %v1289, %v1291
    %v1293 = vsel %vm693, %v1287, %v1289
    %v1294 = vsel %vm693, %v1285, %v1287
    %v1295 = vsel %vm693, %v1291, %v1285
    %v1296 = vmul.f32 %v699, %v1294
    %v1297 = vmul.f32 %v700, %v1293
    %v1298 = vmul.f32 %v701, %v1292
    %v1299 = vmul.f32 %v702, %v1295
    %1300 = vrot.lane.b32.xlu0 %v890, 111
    %v1301 = vpop.permute.xlu0 %1300
    %1302 = vrot.lane.b32.xlu0 %v891, 111
    %v1303 = vpop.permute.xlu0 %1302
    %1304 = vrot.lane.b32.xlu0 %v892, 111
    %v1305 = vpop.permute.xlu0 %1304
    %1306 = vrot.lane.b32.xlu0 %v893, 111
    %v1307 = vpop.permute.xlu0 %1306
    %v1308 = vsel %vm715, %v1305, %v1307
    %v1309 = vsel %vm715, %v1303, %v1305
    %v1310 = vsel %vm715, %v1301, %v1303
    %v1311 = vsel %vm715, %v1307, %v1301
    %v1312 = vmul.f32 %v721, %v1310
    %v1313 = vmul.f32 %v722, %v1309
    %v1314 = vmul.f32 %v723, %v1308
    %v1315 = vmul.f32 %v724, %v1311
    %s1316 = scalar_lea.vmem %s5, 40
    %v1317 = vld [vmem:[%s1316] sm:$0xff]
    %v1319 = vsel %vm372, %v1317, 0
    %1321 = vmatprep.subr.mxu0 %v1281
    %1322 = vmatpush1.msra.mxu0 %v1280
    %1323 = vmatprep.subr.mxu0 %v1297
    %1324 = vmatpush1.msra.mxu0 %v1296
    %1325 = vmatprep.subr.mxu0 %v1313
    %1326 = vmatpush1.msra.mxu0 %v1312
    %1327 = vmatprep.subr.mxu0 0.0
    %1328 = vmatpush1.msra.mxu0 0.0
    %1329 = vmatprep.subr.mxu0 0.0
    %1330 = vmatpush1.msra.mxu0 0.0
    %1331 = vmatprep.subr.mxu0 0.0
    %1332 = vmatpush1.msra.mxu0 0.0
    %1333 = vmatprep.subr.mxu0 0.0
    %1334 = vmatpush1.msra.mxu0 0.0
    %1335 = vmatprep.subr.mxu0 0.0
    %1336 = vmatpush1.msra.mxu0 0.0
    %1337 = vmatprep.subr.mxu0 0.0
    %1338 = vmatpush1.msra.mxu0 0.0
    %1339 = vmatprep.subr.mxu0 0.0
    %1340 = vmatpush1.msra.mxu0 0.0
    %1341 = vmatprep.subr.mxu0 0.0
    %1342 = vmatpush1.msra.mxu0 0.0
    %1343 = vmatprep.subr.mxu0 0.0
    %1344 = vmatpush1.msra.mxu0 0.0
    %1345 = vmatprep.subr.mxu0 0.0
    %1346 = vmatpush1.msra.mxu0 0.0
    %1347 = vmatprep.subr.mxu0 0.0
    %1348 = vmatpush1.msra.mxu0 0.0
    %1349 = vmatprep.subr.mxu0 0.0
    %1350 = vmatpush1.msra.mxu0 0.0
    %1351 = vmatprep.subr.mxu0 0.0
    %1352 = vmatpush1.msra.mxu0 0.0
    %1353 = vmatprep.subr.mxu0 0.0
    %1354 = vmatpush1.msra.mxu0 0.0
    %1355 = vmatprep.subr.mxu0 0.0
    %1356 = vmatpush1.msra.mxu0 0.0
    %1357 = vmatprep.subr.mxu0 0.0
    %1358 = vmatpush1.msra.mxu0 0.0
    %1359 = vmatprep.subr.mxu0 0.0
    %1360 = vmatpush1.msra.mxu0 0.0
    %1361 = vmatprep.subr.mxu0 0.0
    %1362 = vmatpush1.msra.mxu0 0.0
    %1363 = vmatprep.subr.mxu0 0.0
    %1364 = vmatpush1.msra.mxu0 0.0
    %1365 = vmatprep.subr.mxu0 0.0
    %1366 = vmatpush1.msra.mxu0 0.0
    %1367 = vmatprep.subr.mxu0 0.0
    %1368 = vmatpush1.msra.mxu0 0.0
    %1369 = vmatprep.subr.mxu0 0.0
    %1370 = vmatpush1.msra.mxu0 0.0
    %1371 = vmatprep.subr.mxu0 0.0
    %1372 = vmatpush1.msra.mxu0 0.0
    %1373 = vmatprep.subr.mxu0 0.0
    %1374 = vmatpush1.msra.mxu0 0.0
    %1375 = vmatprep.subr.mxu0 0.0
    %1376 = vmatpush1.msra.mxu0 0.0
    %1377 = vmatprep.subr.mxu0 0.0
    %1378 = vmatpush1.msra.mxu0 0.0
    %1379 = vmatprep.subr.mxu0 0.0
    %1380 = vmatpush1.msra.mxu0 0.0
    %1381 = vmatprep.subr.mxu0 0.0
    %1382 = vmatpush1.msra.mxu0 0.0
    %1383 = vmatprep.subr.mxu0 0.0
    %1384 = vmatpush1.msra.mxu0 0.0
    %1385 = vmatprep.mubr.f32.mxu0 0.0
    %1386 = vmatmul.mubr.f32.gmra.mrb[0].mxu0 %v1319
    %v1387 = vpop.f32.mrb[0].mxu0
    %v1388 = vadd.f32 0.0, %v1387
    %v1389 = vpop.f32.mrb[0].mxu0
    %v1390 = vadd.f32 0.0, %v1389
    %1391 = vdwg.mxu0
    %1392 = vmatprep.subr.mxu0 %v1283
    %1393 = vmatpush1.msra.mxu0 %v1282
    %1394 = vmatprep.subr.mxu0 %v1299
    %1395 = vmatpush1.msra.mxu0 %v1298
    %1396 = vmatprep.subr.mxu0 %v1315
    %1397 = vmatpush1.msra.mxu0 %v1314
    %1398 = vmatprep.subr.mxu0 0.0
    %1399 = vmatpush1.msra.mxu0 0.0
    %1400 = vmatprep.subr.mxu0 0.0
    %1401 = vmatpush1.msra.mxu0 0.0
    %1402 = vmatprep.subr.mxu0 0.0
    %1403 = vmatpush1.msra.mxu0 0.0
    %1404 = vmatprep.subr.mxu0 0.0
    %1405 = vmatpush1.msra.mxu0 0.0
    %1406 = vmatprep.subr.mxu0 0.0
    %1407 = vmatpush1.msra.mxu0 0.0
    %1408 = vmatprep.subr.mxu0 0.0
    %1409 = vmatpush1.msra.mxu0 0.0
    %1410 = vmatprep.subr.mxu0 0.0
    %1411 = vmatpush1.msra.mxu0 0.0
    %1412 = vmatprep.subr.mxu0 0.0
    %1413 = vmatpush1.msra.mxu0 0.0
    %1414 = vmatprep.subr.mxu0 0.0
    %1415 = vmatpush1.msra.mxu0 0.0
    %1416 = vmatprep.subr.mxu0 0.0
    %1417 = vmatpush1.msra.mxu0 0.0
    %1418 = vmatprep.subr.mxu0 0.0
    %1419 = vmatpush1.msra.mxu0 0.0
    %1420 = vmatprep.subr.mxu0 0.0
    %1421 = vmatpush1.msra.mxu0 0.0
    %1422 = vmatprep.subr.mxu0 0.0
    %1423 = vmatpush1.msra.mxu0 0.0
    %1424 = vmatprep.subr.mxu0 0.0
    %1425 = vmatpush1.msra.mxu0 0.0
    %1426 = vmatprep.subr.mxu0 0.0
    %1427 = vmatpush1.msra.mxu0 0.0
    %1428 = vmatprep.subr.mxu0 0.0
    %1429 = vmatpush1.msra.mxu0 0.0
    %1430 = vmatprep.subr.mxu0 0.0
    %1431 = vmatpush1.msra.mxu0 0.0
    %1432 = vmatprep.subr.mxu0 0.0
    %1433 = vmatpush1.msra.mxu0 0.0
    %1434 = vmatprep.subr.mxu0 0.0
    %1435 = vmatpush1.msra.mxu0 0.0
    %1436 = vmatprep.subr.mxu0 0.0
    %1437 = vmatpush1.msra.mxu0 0.0
    %1438 = vmatprep.subr.mxu0 0.0
    %1439 = vmatpush1.msra.mxu0 0.0
    %1440 = vmatprep.subr.mxu0 0.0
    %1441 = vmatpush1.msra.mxu0 0.0
    %1442 = vmatprep.subr.mxu0 0.0
    %1443 = vmatpush1.msra.mxu0 0.0
    %1444 = vmatprep.subr.mxu0 0.0
    %1445 = vmatpush1.msra.mxu0 0.0
    %1446 = vmatprep.subr.mxu0 0.0
    %1447 = vmatpush1.msra.mxu0 0.0
    %1448 = vmatprep.subr.mxu0 0.0
    %1449 = vmatpush1.msra.mxu0 0.0
    %1450 = vmatprep.subr.mxu0 0.0
    %1451 = vmatpush1.msra.mxu0 0.0
    %1452 = vmatprep.subr.mxu0 0.0
    %1453 = vmatpush1.msra.mxu0 0.0
    %1454 = vmatprep.subr.mxu0 0.0
    %1455 = vmatpush1.msra.mxu0 0.0
    %1456 = vmatprep.mubr.f32.mxu0 0.0
    %1457 = vmatmul.mubr.f32.gmra.mrb[0].mxu0 %v1319
    %v1458 = vpop.f32.mrb[0].mxu0
    %v1459 = vadd.f32 0.0, %v1458
    %v1460 = vpop.f32.mrb[0].mxu0
    %v1461 = vadd.f32 0.0, %v1460
    %1462 = vdwg.mxu0
    %v1463 = vadd.f32 %v1193, %v1388
    %v1464 = vadd.f32 %v1195, %v1390
    %v1465 = vadd.f32 %v1264, %v1459
    %v1466 = vadd.f32 %v1266, %v1461
    %s1467 = scalar_lea.vmem %s6, 8
    %v1468 = vld [vmem:[%s1467] sm:$0xff]
    %1470 = vset.pattern.permute.xlu0 0
    %1471 = vperm.xlu0 %1470, %v1468
    %v1472 = vpop.permute.xlu0 %1471
    %v1474 = vadd.f32 %v1463, %v1472
    %v1475 = vadd.f32 %v1464, %v1472
    %v1476 = vadd.f32 %v1465, %v1472
    %v1477 = vadd.f32 %v1466, %v1472
    %v1478 = vadd.f32 %v183, %v1474
    %v1479 = vadd.f32 %v185, %v1475
    %v1480 = vadd.f32 %v254, %v1476
    %v1481 = vadd.f32 %v256, %v1477
    %v1482 = vmax.f32 %v1478, 0.0
    %v1483 = vmax.f32 %v1479, 0.0
    %v1484 = vmax.f32 %v1480, 0.0
    %v1485 = vmax.f32 %v1481, 0.0
    %1486 = vrot.lane.b32.xlu0 %v1482, 17
    %v1487 = vpop.permute.xlu0 %1486
    %1488 = vrot.lane.b32.xlu0 %v1483, 17
    %v1489 = vpop.permute.xlu0 %1488
    %1490 = vrot.lane.b32.xlu0 %v1484, 17
    %v1491 = vpop.permute.xlu0 %1490
    %1492 = vrot.lane.b32.xlu0 %v1485, 17
    %v1493 = vpop.permute.xlu0 %1492
    %v1494 = vsel %vm268, %v1491, %v1493
    %v1495 = vsel %vm268, %v1489, %v1491
    %v1496 = vsel %vm268, %v1487, %v1489
    %v1497 = vsel %vm268, %v1493, %v1487
    %v1498 = vmul.f32 %v273, %v1497
    %v1499 = vmul.f32 %v274, %v1496
    %v1500 = vmul.f32 %v275, %v1495
    %v1501 = vmul.f32 %v276, %v1494
    %1502 = vrot.lane.b32.xlu0 %v1482, 16
    %v1503 = vpop.permute.xlu0 %1502
    %1504 = vrot.lane.b32.xlu0 %v1483, 16
    %v1505 = vpop.permute.xlu0 %1504
    %1506 = vrot.lane.b32.xlu0 %v1484, 16
    %v1507 = vpop.permute.xlu0 %1506
    %1508 = vrot.lane.b32.xlu0 %v1485, 16
    %v1509 = vpop.permute.xlu0 %1508
    %v1510 = vsel %vm289, %v1507, %v1509
    %v1511 = vsel %vm289, %v1505, %v1507
    %v1512 = vsel %vm289, %v1503, %v1505
    %v1513 = vsel %vm289, %v1509, %v1503
    %v1514 = vmul.f32 %v295, %v1513
    %v1515 = vmul.f32 %v296, %v1512
    %v1516 = vmul.f32 %v297, %v1511
    %v1517 = vmul.f32 %v298, %v1510
    %1518 = vrot.lane.b32.xlu0 %v1482, 15
    %v1519 = vpop.permute.xlu0 %1518
    %1520 = vrot.lane.b32.xlu0 %v1483, 15
    %v1521 = vpop.permute.xlu0 %1520
    %1522 = vrot.lane.b32.xlu0 %v1484, 15
    %v1523 = vpop.permute.xlu0 %1522
    %1524 = vrot.lane.b32.xlu0 %v1485, 15
    %v1525 = vpop.permute.xlu0 %1524
    %v1526 = vsel %vm311, %v1523, %v1525
    %v1527 = vsel %vm311, %v1521, %v1523
    %v1528 = vsel %vm311, %v1519, %v1521
    %v1529 = vsel %vm311, %v1525, %v1519
    %v1530 = vmul.f32 %v317, %v1529
    %v1531 = vmul.f32 %v318, %v1528
    %v1532 = vmul.f32 %v319, %v1527
    %v1533 = vmul.f32 %v320, %v1526
    %s1534 = scalar_lea.vmem %s5, 48
    %v1535 = vld [vmem:[%s1534] sm:$0xff]
    %1536 = vrot.lane.b32.xlu0 %v1482, 1
    %v1537 = vpop.permute.xlu0 %1536
    %1538 = vrot.lane.b32.xlu0 %v1483, 1
    %v1539 = vpop.permute.xlu0 %1538
    %1540 = vrot.lane.b32.xlu0 %v1484, 1
    %v1541 = vpop.permute.xlu0 %1540
    %1542 = vrot.lane.b32.xlu0 %v1485, 1
    %v1543 = vpop.permute.xlu0 %1542
    %v1544 = vsel %vm334, %v1541, %v1543
    %v1545 = vsel %vm334, %v1539, %v1541
    %v1546 = vsel %vm334, %v1537, %v1539
    %v1547 = vsel %vm334, %v1543, %v1537
    %v1548 = vmul.f32 %v340, %v1547
    %v1549 = vmul.f32 %v341, %v1546
    %v1550 = vmul.f32 %v342, %v1545
    %v1551 = vmul.f32 %v343, %v1544
    %1552 = vrot.lane.b32.xlu0 %v1482, 127
    %v1553 = vpop.permute.xlu0 %1552
    %1554 = vrot.lane.b32.xlu0 %v1483, 127
    %v1555 = vpop.permute.xlu0 %1554
    %1556 = vrot.lane.b32.xlu0 %v1484, 127
    %v1557 = vpop.permute.xlu0 %1556
    %1558 = vrot.lane.b32.xlu0 %v1485, 127
    %v1559 = vpop.permute.xlu0 %1558
    %v1560 = vsel %vm356, %v1557, %v1559
    %v1561 = vsel %vm356, %v1555, %v1557
    %v1562 = vsel %vm356, %v1553, %v1555
    %v1563 = vsel %vm356, %v1559, %v1553
    %v1564 = vmul.f32 %v362, %v1562
    %v1565 = vmul.f32 %v363, %v1561
    %v1566 = vmul.f32 %v364, %v1560
    %v1567 = vmul.f32 %v365, %v1563
    %s1568 = scalar_lea.vmem %s5, 56
    %v1569 = vld [vmem:[%s1568] sm:$0xff]
    %v1571 = vsel %vm372, %v1569, 0
    %1573 = vmatprep.subr.mxu0 %v1549
    %1574 = vmatpush1.msra.mxu0 %v1548
    %1575 = vmatprep.subr.mxu0 %v1483
    %1576 = vmatpush1.msra.mxu0 %v1482
    %1577 = vmatprep.subr.mxu0 %v1565
    %1578 = vmatpush1.msra.mxu0 %v1564
    %1579 = vmatprep.subr.mxu0 0.0
    %1580 = vmatpush1.msra.mxu0 0.0
    %1581 = vmatprep.subr.mxu0 0.0
    %1582 = vmatpush1.msra.mxu0 0.0
    %1583 = vmatprep.subr.mxu0 0.0
    %1584 = vmatpush1.msra.mxu0 0.0
    %1585 = vmatprep.subr.mxu0 0.0
    %1586 = vmatpush1.msra.mxu0 0.0
    %1587 = vmatprep.subr.mxu0 0.0
    %1588 = vmatpush1.msra.mxu0 0.0
    %1589 = vmatprep.subr.mxu0 0.0
    %1590 = vmatpush1.msra.mxu0 0.0
    %1591 = vmatprep.subr.mxu0 0.0
    %1592 = vmatpush1.msra.mxu0 0.0
    %1593 = vmatprep.subr.mxu0 0.0
    %1594 = vmatpush1.msra.mxu0 0.0
    %1595 = vmatprep.subr.mxu0 0.0
    %1596 = vmatpush1.msra.mxu0 0.0
    %1597 = vmatprep.subr.mxu0 0.0
    %1598 = vmatpush1.msra.mxu0 0.0
    %1599 = vmatprep.subr.mxu0 0.0
    %1600 = vmatpush1.msra.mxu0 0.0
    %1601 = vmatprep.subr.mxu0 0.0
    %1602 = vmatpush1.msra.mxu0 0.0
    %1603 = vmatprep.subr.mxu0 0.0
    %1604 = vmatpush1.msra.mxu0 0.0
    %1605 = vmatprep.subr.mxu0 0.0
    %1606 = vmatpush1.msra.mxu0 0.0
    %1607 = vmatprep.subr.mxu0 0.0
    %1608 = vmatpush1.msra.mxu0 0.0
    %1609 = vmatprep.subr.mxu0 0.0
    %1610 = vmatpush1.msra.mxu0 0.0
    %1611 = vmatprep.subr.mxu0 0.0
    %1612 = vmatpush1.msra.mxu0 0.0
    %1613 = vmatprep.subr.mxu0 0.0
    %1614 = vmatpush1.msra.mxu0 0.0
    %1615 = vmatprep.subr.mxu0 0.0
    %1616 = vmatpush1.msra.mxu0 0.0
    %1617 = vmatprep.subr.mxu0 0.0
    %1618 = vmatpush1.msra.mxu0 0.0
    %1619 = vmatprep.subr.mxu0 0.0
    %1620 = vmatpush1.msra.mxu0 0.0
    %1621 = vmatprep.subr.mxu0 0.0
    %1622 = vmatpush1.msra.mxu0 0.0
    %1623 = vmatprep.subr.mxu0 0.0
    %1624 = vmatpush1.msra.mxu0 0.0
    %1625 = vmatprep.subr.mxu0 0.0
    %1626 = vmatpush1.msra.mxu0 0.0
    %1627 = vmatprep.subr.mxu0 0.0
    %1628 = vmatpush1.msra.mxu0 0.0
    %1629 = vmatprep.subr.mxu0 0.0
    %1630 = vmatpush1.msra.mxu0 0.0
    %1631 = vmatprep.subr.mxu0 0.0
    %1632 = vmatpush1.msra.mxu0 0.0
    %1633 = vmatprep.subr.mxu0 0.0
    %1634 = vmatpush1.msra.mxu0 0.0
    %1635 = vmatprep.subr.mxu0 0.0
    %1636 = vmatpush1.msra.mxu0 0.0
    %1637 = vmatprep.mubr.f32.mxu0 0.0
    %1638 = vmatmul.mubr.f32.gmra.mrb[0].mxu0 %v1571
    %v1639 = vpop.f32.mrb[0].mxu0
    %v1640 = vadd.f32 0.0, %v1639
    %v1641 = vpop.f32.mrb[0].mxu0
    %v1642 = vadd.f32 0.0, %v1641
    %1643 = vdwg.mxu0
    %1644 = vmatprep.subr.mxu0 %v1551
    %1645 = vmatpush1.msra.mxu0 %v1550
    %1646 = vmatprep.subr.mxu0 %v1485
    %1647 = vmatpush1.msra.mxu0 %v1484
    %1648 = vmatprep.subr.mxu0 %v1567
    %1649 = vmatpush1.msra.mxu0 %v1566
    %1650 = vmatprep.subr.mxu0 0.0
    %1651 = vmatpush1.msra.mxu0 0.0
    %1652 = vmatprep.subr.mxu0 0.0
    %1653 = vmatpush1.msra.mxu0 0.0
    %1654 = vmatprep.subr.mxu0 0.0
    %1655 = vmatpush1.msra.mxu0 0.0
    %1656 = vmatprep.subr.mxu0 0.0
    %1657 = vmatpush1.msra.mxu0 0.0
    %1658 = vmatprep.subr.mxu0 0.0
    %1659 = vmatpush1.msra.mxu0 0.0
    %1660 = vmatprep.subr.mxu0 0.0
    %1661 = vmatpush1.msra.mxu0 0.0
    %1662 = vmatprep.subr.mxu0 0.0
    %1663 = vmatpush1.msra.mxu0 0.0
    %1664 = vmatprep.subr.mxu0 0.0
    %1665 = vmatpush1.msra.mxu0 0.0
    %1666 = vmatprep.subr.mxu0 0.0
    %1667 = vmatpush1.msra.mxu0 0.0
    %1668 = vmatprep.subr.mxu0 0.0
    %1669 = vmatpush1.msra.mxu0 0.0
    %1670 = vmatprep.subr.mxu0 0.0
    %1671 = vmatpush1.msra.mxu0 0.0
    %1672 = vmatprep.subr.mxu0 0.0
    %1673 = vmatpush1.msra.mxu0 0.0
    %1674 = vmatprep.subr.mxu0 0.0
    %1675 = vmatpush1.msra.mxu0 0.0
    %1676 = vmatprep.subr.mxu0 0.0
    %1677 = vmatpush1.msra.mxu0 0.0
    %1678 = vmatprep.subr.mxu0 0.0
    %1679 = vmatpush1.msra.mxu0 0.0
    %1680 = vmatprep.subr.mxu0 0.0
    %1681 = vmatpush1.msra.mxu0 0.0
    %1682 = vmatprep.subr.mxu0 0.0
    %1683 = vmatpush1.msra.mxu0 0.0
    %1684 = vmatprep.subr.mxu0 0.0
    %1685 = vmatpush1.msra.mxu0 0.0
    %1686 = vmatprep.subr.mxu0 0.0
    %1687 = vmatpush1.msra.mxu0 0.0
    %1688 = vmatprep.subr.mxu0 0.0
    %1689 = vmatpush1.msra.mxu0 0.0
    %1690 = vmatprep.subr.mxu0 0.0
    %1691 = vmatpush1.msra.mxu0 0.0
    %1692 = vmatprep.subr.mxu0 0.0
    %1693 = vmatpush1.msra.mxu0 0.0
    %1694 = vmatprep.subr.mxu0 0.0
    %1695 = vmatpush1.msra.mxu0 0.0
    %1696 = vmatprep.subr.mxu0 0.0
    %1697 = vmatpush1.msra.mxu0 0.0
    %1698 = vmatprep.subr.mxu0 0.0
    %1699 = vmatpush1.msra.mxu0 0.0
    %1700 = vmatprep.subr.mxu0 0.0
    %1701 = vmatpush1.msra.mxu0 0.0
    %1702 = vmatprep.subr.mxu0 0.0
    %1703 = vmatpush1.msra.mxu0 0.0
    %1704 = vmatprep.subr.mxu0 0.0
    %1705 = vmatpush1.msra.mxu0 0.0
    %1706 = vmatprep.subr.mxu0 0.0
    %1707 = vmatpush1.msra.mxu0 0.0
    %1708 = vmatprep.mubr.f32.mxu0 0.0
    %1709 = vmatmul.mubr.f32.gmra.mrb[0].mxu0 %v1571
    %v1710 = vpop.f32.mrb[0].mxu0
    %v1711 = vadd.f32 0.0, %v1710
    %v1712 = vpop.f32.mrb[0].mxu0
    %v1713 = vadd.f32 0.0, %v1712
    %1714 = vdwg.mxu0
    %v1716 = vsel %vm372, %v1535, 0
    %1718 = vmatprep.subr.mxu0 %v1499
    %1719 = vmatpush1.msra.mxu0 %v1498
    %1720 = vmatprep.subr.mxu0 %v1515
    %1721 = vmatpush1.msra.mxu0 %v1514
    %1722 = vmatprep.subr.mxu0 %v1531
    %1723 = vmatpush1.msra.mxu0 %v1530
    %1724 = vmatprep.subr.mxu0 0.0
    %1725 = vmatpush1.msra.mxu0 0.0
    %1726 = vmatprep.subr.mxu0 0.0
    %1727 = vmatpush1.msra.mxu0 0.0
    %1728 = vmatprep.subr.mxu0 0.0
    %1729 = vmatpush1.msra.mxu0 0.0
    %1730 = vmatprep.subr.mxu0 0.0
    %1731 = vmatpush1.msra.mxu0 0.0
    %1732 = vmatprep.subr.mxu0 0.0
    %1733 = vmatpush1.msra.mxu0 0.0
    %1734 = vmatprep.subr.mxu0 0.0
    %1735 = vmatpush1.msra.mxu0 0.0
    %1736 = vmatprep.subr.mxu0 0.0
    %1737 = vmatpush1.msra.mxu0 0.0
    %1738 = vmatprep.subr.mxu0 0.0
    %1739 = vmatpush1.msra.mxu0 0.0
    %1740 = vmatprep.subr.mxu0 0.0
    %1741 = vmatpush1.msra.mxu0 0.0
    %1742 = vmatprep.subr.mxu0 0.0
    %1743 = vmatpush1.msra.mxu0 0.0
    %1744 = vmatprep.subr.mxu0 0.0
    %1745 = vmatpush1.msra.mxu0 0.0
    %1746 = vmatprep.subr.mxu0 0.0
    %1747 = vmatpush1.msra.mxu0 0.0
    %1748 = vmatprep.subr.mxu0 0.0
    %1749 = vmatpush1.msra.mxu0 0.0
    %1750 = vmatprep.subr.mxu0 0.0
    %1751 = vmatpush1.msra.mxu0 0.0
    %1752 = vmatprep.subr.mxu0 0.0
    %1753 = vmatpush1.msra.mxu0 0.0
    %1754 = vmatprep.subr.mxu0 0.0
    %1755 = vmatpush1.msra.mxu0 0.0
    %1756 = vmatprep.subr.mxu0 0.0
    %1757 = vmatpush1.msra.mxu0 0.0
    %1758 = vmatprep.subr.mxu0 0.0
    %1759 = vmatpush1.msra.mxu0 0.0
    %1760 = vmatprep.subr.mxu0 0.0
    %1761 = vmatpush1.msra.mxu0 0.0
    %1762 = vmatprep.subr.mxu0 0.0
    %1763 = vmatpush1.msra.mxu0 0.0
    %1764 = vmatprep.subr.mxu0 0.0
    %1765 = vmatpush1.msra.mxu0 0.0
    %1766 = vmatprep.subr.mxu0 0.0
    %1767 = vmatpush1.msra.mxu0 0.0
    %1768 = vmatprep.subr.mxu0 0.0
    %1769 = vmatpush1.msra.mxu0 0.0
    %1770 = vmatprep.subr.mxu0 0.0
    %1771 = vmatpush1.msra.mxu0 0.0
    %1772 = vmatprep.subr.mxu0 0.0
    %1773 = vmatpush1.msra.mxu0 0.0
    %1774 = vmatprep.subr.mxu0 0.0
    %1775 = vmatpush1.msra.mxu0 0.0
    %1776 = vmatprep.subr.mxu0 0.0
    %1777 = vmatpush1.msra.mxu0 0.0
    %1778 = vmatprep.subr.mxu0 0.0
    %1779 = vmatpush1.msra.mxu0 0.0
    %1780 = vmatprep.subr.mxu0 0.0
    %1781 = vmatpush1.msra.mxu0 0.0
    %1782 = vmatprep.mubr.f32.mxu0 0.0
    %1783 = vmatmul.mubr.f32.gmra.mrb[0].mxu0 %v1716
    %v1784 = vpop.f32.mrb[0].mxu0
    %v1785 = vadd.f32 %v1640, %v1784
    %v1786 = vpop.f32.mrb[0].mxu0
    %v1787 = vadd.f32 %v1642, %v1786
    %1788 = vdwg.mxu0
    %1789 = vmatprep.subr.mxu0 %v1501
    %1790 = vmatpush1.msra.mxu0 %v1500
    %1791 = vmatprep.subr.mxu0 %v1517
    %1792 = vmatpush1.msra.mxu0 %v1516
    %1793 = vmatprep.subr.mxu0 %v1533
    %1794 = vmatpush1.msra.mxu0 %v1532
    %1795 = vmatprep.subr.mxu0 0.0
    %1796 = vmatpush1.msra.mxu0 0.0
    %1797 = vmatprep.subr.mxu0 0.0
    %1798 = vmatpush1.msra.mxu0 0.0
    %1799 = vmatprep.subr.mxu0 0.0
    %1800 = vmatpush1.msra.mxu0 0.0
    %1801 = vmatprep.subr.mxu0 0.0
    %1802 = vmatpush1.msra.mxu0 0.0
    %1803 = vmatprep.subr.mxu0 0.0
    %1804 = vmatpush1.msra.mxu0 0.0
    %1805 = vmatprep.subr.mxu0 0.0
    %1806 = vmatpush1.msra.mxu0 0.0
    %1807 = vmatprep.subr.mxu0 0.0
    %1808 = vmatpush1.msra.mxu0 0.0
    %1809 = vmatprep.subr.mxu0 0.0
    %1810 = vmatpush1.msra.mxu0 0.0
    %1811 = vmatprep.subr.mxu0 0.0
    %1812 = vmatpush1.msra.mxu0 0.0
    %1813 = vmatprep.subr.mxu0 0.0
    %1814 = vmatpush1.msra.mxu0 0.0
    %1815 = vmatprep.subr.mxu0 0.0
    %1816 = vmatpush1.msra.mxu0 0.0
    %1817 = vmatprep.subr.mxu0 0.0
    %1818 = vmatpush1.msra.mxu0 0.0
    %1819 = vmatprep.subr.mxu0 0.0
    %1820 = vmatpush1.msra.mxu0 0.0
    %1821 = vmatprep.subr.mxu0 0.0
    %1822 = vmatpush1.msra.mxu0 0.0
    %1823 = vmatprep.subr.mxu0 0.0
    %1824 = vmatpush1.msra.mxu0 0.0
    %1825 = vmatprep.subr.mxu0 0.0
    %1826 = vmatpush1.msra.mxu0 0.0
    %1827 = vmatprep.subr.mxu0 0.0
    %1828 = vmatpush1.msra.mxu0 0.0
    %1829 = vmatprep.subr.mxu0 0.0
    %1830 = vmatpush1.msra.mxu0 0.0
    %1831 = vmatprep.subr.mxu0 0.0
    %1832 = vmatpush1.msra.mxu0 0.0
    %1833 = vmatprep.subr.mxu0 0.0
    %1834 = vmatpush1.msra.mxu0 0.0
    %1835 = vmatprep.subr.mxu0 0.0
    %1836 = vmatpush1.msra.mxu0 0.0
    %1837 = vmatprep.subr.mxu0 0.0
    %1838 = vmatpush1.msra.mxu0 0.0
    %1839 = vmatprep.subr.mxu0 0.0
    %1840 = vmatpush1.msra.mxu0 0.0
    %1841 = vmatprep.subr.mxu0 0.0
    %1842 = vmatpush1.msra.mxu0 0.0
    %1843 = vmatprep.subr.mxu0 0.0
    %1844 = vmatpush1.msra.mxu0 0.0
    %1845 = vmatprep.subr.mxu0 0.0
    %1846 = vmatpush1.msra.mxu0 0.0
    %1847 = vmatprep.subr.mxu0 0.0
    %1848 = vmatpush1.msra.mxu0 0.0
    %1849 = vmatprep.subr.mxu0 0.0
    %1850 = vmatpush1.msra.mxu0 0.0
    %1851 = vmatprep.subr.mxu0 0.0
    %1852 = vmatpush1.msra.mxu0 0.0
    %1853 = vmatprep.mubr.f32.mxu0 0.0
    %1854 = vmatmul.mubr.f32.gmra.mrb[0].mxu0 %v1716
    %v1855 = vpop.f32.mrb[0].mxu0
    %v1856 = vadd.f32 %v1711, %v1855
    %v1857 = vpop.f32.mrb[0].mxu0
    %v1858 = vadd.f32 %v1713, %v1857
    %1859 = vdwg.mxu0
    %1860 = vrot.lane.b32.xlu0 %v1482, 113
    %v1861 = vpop.permute.xlu0 %1860
    %1862 = vrot.lane.b32.xlu0 %v1483, 113
    %v1863 = vpop.permute.xlu0 %1862
    %1864 = vrot.lane.b32.xlu0 %v1484, 113
    %v1865 = vpop.permute.xlu0 %1864
    %1866 = vrot.lane.b32.xlu0 %v1485, 113
    %v1867 = vpop.permute.xlu0 %1866
    %v1868 = vsel %vm671, %v1865, %v1867
    %v1869 = vsel %vm671, %v1863, %v1865
    %v1870 = vsel %vm671, %v1861, %v1863
    %v1871 = vsel %vm671, %v1867, %v1861
    %v1872 = vmul.f32 %v677, %v1870
    %v1873 = vmul.f32 %v678, %v1869
    %v1874 = vmul.f32 %v679, %v1868
    %v1875 = vmul.f32 %v680, %v1871
    %1876 = vrot.lane.b32.xlu0 %v1482, 112
    %v1877 = vpop.permute.xlu0 %1876
    %1878 = vrot.lane.b32.xlu0 %v1483, 112
    %v1879 = vpop.permute.xlu0 %1878
    %1880 = vrot.lane.b32.xlu0 %v1484, 112
    %v1881 = vpop.permute.xlu0 %1880
    %1882 = vrot.lane.b32.xlu0 %v1485, 112
    %v1883 = vpop.permute.xlu0 %1882
    %v1884 = vsel %vm693, %v1881, %v1883
    %v1885 = vsel %vm693, %v1879, %v1881
    %v1886 = vsel %vm693, %v1877, %v1879
    %v1887 = vsel %vm693, %v1883, %v1877
    %v1888 = vmul.f32 %v699, %v1886
    %v1889 = vmul.f32 %v700, %v1885
    %v1890 = vmul.f32 %v701, %v1884
    %v1891 = vmul.f32 %v702, %v1887
    %1892 = vrot.lane.b32.xlu0 %v1482, 111
    %v1893 = vpop.permute.xlu0 %1892
    %1894 = vrot.lane.b32.xlu0 %v1483, 111
    %v1895 = vpop.permute.xlu0 %1894
    %1896 = vrot.lane.b32.xlu0 %v1484, 111
    %v1897 = vpop.permute.xlu0 %1896
    %1898 = vrot.lane.b32.xlu0 %v1485, 111
    %v1899 = vpop.permute.xlu0 %1898
    %v1900 = vsel %vm715, %v1897, %v1899
    %v1901 = vsel %vm715, %v1895, %v1897
    %v1902 = vsel %vm715, %v1893, %v1895
    %v1903 = vsel %vm715, %v1899, %v1893
    %v1904 = vmul.f32 %v721, %v1902
    %v1905 = vmul.f32 %v722, %v1901
    %v1906 = vmul.f32 %v723, %v1900
    %v1907 = vmul.f32 %v724, %v1903
    %s1908 = scalar_lea.vmem %s5, 64
    %v1909 = vld [vmem:[%s1908] sm:$0xff]
    %v1911 = vsel %vm372, %v1909, 0
    %1913 = vmatprep.subr.mxu0 %v1873
    %1914 = vmatpush1.msra.mxu0 %v1872
    %1915 = vmatprep.subr.mxu0 %v1889
    %1916 = vmatpush1.msra.mxu0 %v1888
    %1917 = vmatprep.subr.mxu0 %v1905
    %1918 = vmatpush1.msra.mxu0 %v1904
    %1919 = vmatprep.subr.mxu0 0.0
    %1920 = vmatpush1.msra.mxu0 0.0
    %1921 = vmatprep.subr.mxu0 0.0
    %1922 = vmatpush1.msra.mxu0 0.0
    %1923 = vmatprep.subr.mxu0 0.0
    %1924 = vmatpush1.msra.mxu0 0.0
    %1925 = vmatprep.subr.mxu0 0.0
    %1926 = vmatpush1.msra.mxu0 0.0
    %1927 = vmatprep.subr.mxu0 0.0
    %1928 = vmatpush1.msra.mxu0 0.0
    %1929 = vmatprep.subr.mxu0 0.0
    %1930 = vmatpush1.msra.mxu0 0.0
    %1931 = vmatprep.subr.mxu0 0.0
    %1932 = vmatpush1.msra.mxu0 0.0
    %1933 = vmatprep.subr.mxu0 0.0
    %1934 = vmatpush1.msra.mxu0 0.0
    %1935 = vmatprep.subr.mxu0 0.0
    %1936 = vmatpush1.msra.mxu0 0.0
    %1937 = vmatprep.subr.mxu0 0.0
    %1938 = vmatpush1.msra.mxu0 0.0
    %1939 = vmatprep.subr.mxu0 0.0
    %1940 = vmatpush1.msra.mxu0 0.0
    %1941 = vmatprep.subr.mxu0 0.0
    %1942 = vmatpush1.msra.mxu0 0.0
    %1943 = vmatprep.subr.mxu0 0.0
    %1944 = vmatpush1.msra.mxu0 0.0
    %1945 = vmatprep.subr.mxu0 0.0
    %1946 = vmatpush1.msra.mxu0 0.0
    %1947 = vmatprep.subr.mxu0 0.0
    %1948 = vmatpush1.msra.mxu0 0.0
    %1949 = vmatprep.subr.mxu0 0.0
    %1950 = vmatpush1.msra.mxu0 0.0
    %1951 = vmatprep.subr.mxu0 0.0
    %1952 = vmatpush1.msra.mxu0 0.0
    %1953 = vmatprep.subr.mxu0 0.0
    %1954 = vmatpush1.msra.mxu0 0.0
    %1955 = vmatprep.subr.mxu0 0.0
    %1956 = vmatpush1.msra.mxu0 0.0
    %1957 = vmatprep.subr.mxu0 0.0
    %1958 = vmatpush1.msra.mxu0 0.0
    %1959 = vmatprep.subr.mxu0 0.0
    %1960 = vmatpush1.msra.mxu0 0.0
    %1961 = vmatprep.subr.mxu0 0.0
    %1962 = vmatpush1.msra.mxu0 0.0
    %1963 = vmatprep.subr.mxu0 0.0
    %1964 = vmatpush1.msra.mxu0 0.0
    %1965 = vmatprep.subr.mxu0 0.0
    %1966 = vmatpush1.msra.mxu0 0.0
    %1967 = vmatprep.subr.mxu0 0.0
    %1968 = vmatpush1.msra.mxu0 0.0
    %1969 = vmatprep.subr.mxu0 0.0
    %1970 = vmatpush1.msra.mxu0 0.0
    %1971 = vmatprep.subr.mxu0 0.0
    %1972 = vmatpush1.msra.mxu0 0.0
    %1973 = vmatprep.subr.mxu0 0.0
    %1974 = vmatpush1.msra.mxu0 0.0
    %1975 = vmatprep.subr.mxu0 0.0
    %1976 = vmatpush1.msra.mxu0 0.0
    %1977 = vmatprep.mubr.f32.mxu0 0.0
    %1978 = vmatmul.mubr.f32.gmra.mrb[0].mxu0 %v1911
    %v1979 = vpop.f32.mrb[0].mxu0
    %v1980 = vadd.f32 0.0, %v1979
    %v1981 = vpop.f32.mrb[0].mxu0
    %v1982 = vadd.f32 0.0, %v1981
    %1983 = vdwg.mxu0
    %1984 = vmatprep.subr.mxu0 %v1875
    %1985 = vmatpush1.msra.mxu0 %v1874
    %1986 = vmatprep.subr.mxu0 %v1891
    %1987 = vmatpush1.msra.mxu0 %v1890
    %1988 = vmatprep.subr.mxu0 %v1907
    %1989 = vmatpush1.msra.mxu0 %v1906
    %1990 = vmatprep.subr.mxu0 0.0
    %1991 = vmatpush1.msra.mxu0 0.0
    %1992 = vmatprep.subr.mxu0 0.0
    %1993 = vmatpush1.msra.mxu0 0.0
    %1994 = vmatprep.subr.mxu0 0.0
    %1995 = vmatpush1.msra.mxu0 0.0
    %1996 = vmatprep.subr.mxu0 0.0
    %1997 = vmatpush1.msra.mxu0 0.0
    %1998 = vmatprep.subr.mxu0 0.0
    %1999 = vmatpush1.msra.mxu0 0.0
    %2000 = vmatprep.subr.mxu0 0.0
    %2001 = vmatpush1.msra.mxu0 0.0
    %2002 = vmatprep.subr.mxu0 0.0
    %2003 = vmatpush1.msra.mxu0 0.0
    %2004 = vmatprep.subr.mxu0 0.0
    %2005 = vmatpush1.msra.mxu0 0.0
    %2006 = vmatprep.subr.mxu0 0.0
    %2007 = vmatpush1.msra.mxu0 0.0
    %2008 = vmatprep.subr.mxu0 0.0
    %2009 = vmatpush1.msra.mxu0 0.0
    %2010 = vmatprep.subr.mxu0 0.0
    %2011 = vmatpush1.msra.mxu0 0.0
    %2012 = vmatprep.subr.mxu0 0.0
    %2013 = vmatpush1.msra.mxu0 0.0
    %2014 = vmatprep.subr.mxu0 0.0
    %2015 = vmatpush1.msra.mxu0 0.0
    %2016 = vmatprep.subr.mxu0 0.0
    %2017 = vmatpush1.msra.mxu0 0.0
    %2018 = vmatprep.subr.mxu0 0.0
    %2019 = vmatpush1.msra.mxu0 0.0
    %2020 = vmatprep.subr.mxu0 0.0
    %2021 = vmatpush1.msra.mxu0 0.0
    %2022 = vmatprep.subr.mxu0 0.0
    %2023 = vmatpush1.msra.mxu0 0.0
    %2024 = vmatprep.subr.mxu0 0.0
    %2025 = vmatpush1.msra.mxu0 0.0
    %2026 = vmatprep.subr.mxu0 0.0
    %2027 = vmatpush1.msra.mxu0 0.0
    %2028 = vmatprep.subr.mxu0 0.0
    %2029 = vmatpush1.msra.mxu0 0.0
    %2030 = vmatprep.subr.mxu0 0.0
    %2031 = vmatpush1.msra.mxu0 0.0
    %2032 = vmatprep.subr.mxu0 0.0
    %2033 = vmatpush1.msra.mxu0 0.0
    %2034 = vmatprep.subr.mxu0 0.0
    %2035 = vmatpush1.msra.mxu0 0.0
    %2036 = vmatprep.subr.mxu0 0.0
    %2037 = vmatpush1.msra.mxu0 0.0
    %2038 = vmatprep.subr.mxu0 0.0
    %2039 = vmatpush1.msra.mxu0 0.0
    %2040 = vmatprep.subr.mxu0 0.0
    %2041 = vmatpush1.msra.mxu0 0.0
    %2042 = vmatprep.subr.mxu0 0.0
    %2043 = vmatpush1.msra.mxu0 0.0
    %2044 = vmatprep.subr.mxu0 0.0
    %2045 = vmatpush1.msra.mxu0 0.0
    %2046 = vmatprep.subr.mxu0 0.0
    %2047 = vmatpush1.msra.mxu0 0.0
    %2048 = vmatprep.mubr.f32.mxu0 0.0
    %2049 = vmatmul.mubr.f32.gmra.mrb[0].mxu0 %v1911
    %v2050 = vpop.f32.mrb[0].mxu0
    %v2051 = vadd.f32 0.0, %v2050
    %v2052 = vpop.f32.mrb[0].mxu0
    %v2053 = vadd.f32 0.0, %v2052
    %2054 = vdwg.mxu0
    %v2055 = vadd.f32 %v1785, %v1980
    %v2056 = vadd.f32 %v1787, %v1982
    %v2057 = vadd.f32 %v1856, %v2051
    %v2058 = vadd.f32 %v1858, %v2053
    %s2059 = scalar_lea.vmem %s6, 16
    %v2060 = vld [vmem:[%s2059] sm:$0xff]
    %2062 = vset.pattern.permute.xlu0 0
    %2063 = vperm.xlu0 %2062, %v2060
    %v2064 = vpop.permute.xlu0 %2063
    %v2066 = vadd.f32 %v2055, %v2064
    %v2067 = vadd.f32 %v2056, %v2064
    %v2068 = vadd.f32 %v2057, %v2064
    %v2069 = vadd.f32 %v2058, %v2064
    %v2070 = vmax.f32 %v2066, 0.0
    %v2071 = vmax.f32 %v2067, 0.0
    %v2072 = vmax.f32 %v2068, 0.0
    %v2073 = vmax.f32 %v2069, 0.0
    %2074 = vrot.lane.b32.xlu0 %v2070, 17
    %v2075 = vpop.permute.xlu0 %2074
    %2076 = vrot.lane.b32.xlu0 %v2071, 17
    %v2077 = vpop.permute.xlu0 %2076
    %2078 = vrot.lane.b32.xlu0 %v2072, 17
    %v2079 = vpop.permute.xlu0 %2078
    %2080 = vrot.lane.b32.xlu0 %v2073, 17
    %v2081 = vpop.permute.xlu0 %2080
    %v2082 = vsel %vm268, %v2079, %v2081
    %v2083 = vsel %vm268, %v2077, %v2079
    %v2084 = vsel %vm268, %v2075, %v2077
    %v2085 = vsel %vm268, %v2081, %v2075
    %v2086 = vmul.f32 %v273, %v2085
    %v2087 = vmul.f32 %v274, %v2084
    %v2088 = vmul.f32 %v275, %v2083
    %v2089 = vmul.f32 %v276, %v2082
    %2090 = vrot.lane.b32.xlu0 %v2070, 16
    %v2091 = vpop.permute.xlu0 %2090
    %2092 = vrot.lane.b32.xlu0 %v2071, 16
    %v2093 = vpop.permute.xlu0 %2092
    %2094 = vrot.lane.b32.xlu0 %v2072, 16
    %v2095 = vpop.permute.xlu0 %2094
    %2096 = vrot.lane.b32.xlu0 %v2073, 16
    %v2097 = vpop.permute.xlu0 %2096
    %v2098 = vsel %vm289, %v2095, %v2097
    %v2099 = vsel %vm289, %v2093, %v2095
    %v2100 = vsel %vm289, %v2091, %v2093
    %v2101 = vsel %vm289, %v2097, %v2091
    %v2102 = vmul.f32 %v295, %v2101
    %v2103 = vmul.f32 %v296, %v2100
    %v2104 = vmul.f32 %v297, %v2099
    %v2105 = vmul.f32 %v298, %v2098
    %2106 = vrot.lane.b32.xlu0 %v2070, 15
    %v2107 = vpop.permute.xlu0 %2106
    %2108 = vrot.lane.b32.xlu0 %v2071, 15
    %v2109 = vpop.permute.xlu0 %2108
    %2110 = vrot.lane.b32.xlu0 %v2072, 15
    %v2111 = vpop.permute.xlu0 %2110
    %2112 = vrot.lane.b32.xlu0 %v2073, 15
    %v2113 = vpop.permute.xlu0 %2112
    %v2114 = vsel %vm311, %v2111, %v2113
    %v2115 = vsel %vm311, %v2109, %v2111
    %v2116 = vsel %vm311, %v2107, %v2109
    %v2117 = vsel %vm311, %v2113, %v2107
    %v2118 = vmul.f32 %v317, %v2117
    %v2119 = vmul.f32 %v318, %v2116
    %v2120 = vmul.f32 %v319, %v2115
    %v2121 = vmul.f32 %v320, %v2114
    %s2122 = scalar_lea.vmem %s5, 72
    %v2123 = vld [vmem:[%s2122] sm:$0xff]
    %2124 = vrot.lane.b32.xlu0 %v2070, 1
    %v2125 = vpop.permute.xlu0 %2124
    %2126 = vrot.lane.b32.xlu0 %v2071, 1
    %v2127 = vpop.permute.xlu0 %2126
    %2128 = vrot.lane.b32.xlu0 %v2072, 1
    %v2129 = vpop.permute.xlu0 %2128
    %2130 = vrot.lane.b32.xlu0 %v2073, 1
    %v2131 = vpop.permute.xlu0 %2130
    %v2132 = vsel %vm334, %v2129, %v2131
    %v2133 = vsel %vm334, %v2127, %v2129
    %v2134 = vsel %vm334, %v2125, %v2127
    %v2135 = vsel %vm334, %v2131, %v2125
    %v2136 = vmul.f32 %v340, %v2135
    %v2137 = vmul.f32 %v341, %v2134
    %v2138 = vmul.f32 %v342, %v2133
    %v2139 = vmul.f32 %v343, %v2132
    %2140 = vrot.lane.b32.xlu0 %v2070, 127
    %v2141 = vpop.permute.xlu0 %2140
    %2142 = vrot.lane.b32.xlu0 %v2071, 127
    %v2143 = vpop.permute.xlu0 %2142
    %2144 = vrot.lane.b32.xlu0 %v2072, 127
    %v2145 = vpop.permute.xlu0 %2144
    %2146 = vrot.lane.b32.xlu0 %v2073, 127
    %v2147 = vpop.permute.xlu0 %2146
    %v2148 = vsel %vm356, %v2145, %v2147
    %v2149 = vsel %vm356, %v2143, %v2145
    %v2150 = vsel %vm356, %v2141, %v2143
    %v2151 = vsel %vm356, %v2147, %v2141
    %v2152 = vmul.f32 %v362, %v2150
    %v2153 = vmul.f32 %v363, %v2149
    %v2154 = vmul.f32 %v364, %v2148
    %v2155 = vmul.f32 %v365, %v2151
    %s2156 = scalar_lea.vmem %s5, 80
    %v2157 = vld [vmem:[%s2156] sm:$0xff]
    %v2159 = vsel %vm372, %v2157, 0
    %2161 = vmatprep.subr.mxu0 %v2137
    %2162 = vmatpush1.msra.mxu0 %v2136
    %2163 = vmatprep.subr.mxu0 %v2071
    %2164 = vmatpush1.msra.mxu0 %v2070
    %2165 = vmatprep.subr.mxu0 %v2153
    %2166 = vmatpush1.msra.mxu0 %v2152
    %2167 = vmatprep.subr.mxu0 0.0
    %2168 = vmatpush1.msra.mxu0 0.0
    %2169 = vmatprep.subr.mxu0 0.0
    %2170 = vmatpush1.msra.mxu0 0.0
    %2171 = vmatprep.subr.mxu0 0.0
    %2172 = vmatpush1.msra.mxu0 0.0
    %2173 = vmatprep.subr.mxu0 0.0
    %2174 = vmatpush1.msra.mxu0 0.0
    %2175 = vmatprep.subr.mxu0 0.0
    %2176 = vmatpush1.msra.mxu0 0.0
    %2177 = vmatprep.subr.mxu0 0.0
    %2178 = vmatpush1.msra.mxu0 0.0
    %2179 = vmatprep.subr.mxu0 0.0
    %2180 = vmatpush1.msra.mxu0 0.0
    %2181 = vmatprep.subr.mxu0 0.0
    %2182 = vmatpush1.msra.mxu0 0.0
    %2183 = vmatprep.subr.mxu0 0.0
    %2184 = vmatpush1.msra.mxu0 0.0
    %2185 = vmatprep.subr.mxu0 0.0
    %2186 = vmatpush1.msra.mxu0 0.0
    %2187 = vmatprep.subr.mxu0 0.0
    %2188 = vmatpush1.msra.mxu0 0.0
    %2189 = vmatprep.subr.mxu0 0.0
    %2190 = vmatpush1.msra.mxu0 0.0
    %2191 = vmatprep.subr.mxu0 0.0
    %2192 = vmatpush1.msra.mxu0 0.0
    %2193 = vmatprep.subr.mxu0 0.0
    %2194 = vmatpush1.msra.mxu0 0.0
    %2195 = vmatprep.subr.mxu0 0.0
    %2196 = vmatpush1.msra.mxu0 0.0
    %2197 = vmatprep.subr.mxu0 0.0
    %2198 = vmatpush1.msra.mxu0 0.0
    %2199 = vmatprep.subr.mxu0 0.0
    %2200 = vmatpush1.msra.mxu0 0.0
    %2201 = vmatprep.subr.mxu0 0.0
    %2202 = vmatpush1.msra.mxu0 0.0
    %2203 = vmatprep.subr.mxu0 0.0
    %2204 = vmatpush1.msra.mxu0 0.0
    %2205 = vmatprep.subr.mxu0 0.0
    %2206 = vmatpush1.msra.mxu0 0.0
    %2207 = vmatprep.subr.mxu0 0.0
    %2208 = vmatpush1.msra.mxu0 0.0
    %2209 = vmatprep.subr.mxu0 0.0
    %2210 = vmatpush1.msra.mxu0 0.0
    %2211 = vmatprep.subr.mxu0 0.0
    %2212 = vmatpush1.msra.mxu0 0.0
    %2213 = vmatprep.subr.mxu0 0.0
    %2214 = vmatpush1.msra.mxu0 0.0
    %2215 = vmatprep.subr.mxu0 0.0
    %2216 = vmatpush1.msra.mxu0 0.0
    %2217 = vmatprep.subr.mxu0 0.0
    %2218 = vmatpush1.msra.mxu0 0.0
    %2219 = vmatprep.subr.mxu0 0.0
    %2220 = vmatpush1.msra.mxu0 0.0
    %2221 = vmatprep.subr.mxu0 0.0
    %2222 = vmatpush1.msra.mxu0 0.0
    %2223 = vmatprep.subr.mxu0 0.0
    %2224 = vmatpush1.msra.mxu0 0.0
    %2225 = vmatprep.mubr.f32.mxu0 0.0
    %2226 = vmatmul.mubr.f32.gmra.mrb[0].mxu0 %v2159
    %v2227 = vpop.f32.mrb[0].mxu0
    %v2228 = vadd.f32 0.0, %v2227
    %v2229 = vpop.f32.mrb[0].mxu0
    %v2230 = vadd.f32 0.0, %v2229
    %2231 = vdwg.mxu0
    %2232 = vmatprep.subr.mxu0 %v2139
    %2233 = vmatpush1.msra.mxu0 %v2138
    %2234 = vmatprep.subr.mxu0 %v2073
    %2235 = vmatpush1.msra.mxu0 %v2072
    %2236 = vmatprep.subr.mxu0 %v2155
    %2237 = vmatpush1.msra.mxu0 %v2154
    %2238 = vmatprep.subr.mxu0 0.0
    %2239 = vmatpush1.msra.mxu0 0.0
    %2240 = vmatprep.subr.mxu0 0.0
    %2241 = vmatpush1.msra.mxu0 0.0
    %2242 = vmatprep.subr.mxu0 0.0
    %2243 = vmatpush1.msra.mxu0 0.0
    %2244 = vmatprep.subr.mxu0 0.0
    %2245 = vmatpush1.msra.mxu0 0.0
    %2246 = vmatprep.subr.mxu0 0.0
    %2247 = vmatpush1.msra.mxu0 0.0
    %2248 = vmatprep.subr.mxu0 0.0
    %2249 = vmatpush1.msra.mxu0 0.0
    %2250 = vmatprep.subr.mxu0 0.0
    %2251 = vmatpush1.msra.mxu0 0.0
    %2252 = vmatprep.subr.mxu0 0.0
    %2253 = vmatpush1.msra.mxu0 0.0
    %2254 = vmatprep.subr.mxu0 0.0
    %2255 = vmatpush1.msra.mxu0 0.0
    %2256 = vmatprep.subr.mxu0 0.0
    %2257 = vmatpush1.msra.mxu0 0.0
    %2258 = vmatprep.subr.mxu0 0.0
    %2259 = vmatpush1.msra.mxu0 0.0
    %2260 = vmatprep.subr.mxu0 0.0
    %2261 = vmatpush1.msra.mxu0 0.0
    %2262 = vmatprep.subr.mxu0 0.0
    %2263 = vmatpush1.msra.mxu0 0.0
    %2264 = vmatprep.subr.mxu0 0.0
    %2265 = vmatpush1.msra.mxu0 0.0
    %2266 = vmatprep.subr.mxu0 0.0
    %2267 = vmatpush1.msra.mxu0 0.0
    %2268 = vmatprep.subr.mxu0 0.0
    %2269 = vmatpush1.msra.mxu0 0.0
    %2270 = vmatprep.subr.mxu0 0.0
    %2271 = vmatpush1.msra.mxu0 0.0
    %2272 = vmatprep.subr.mxu0 0.0
    %2273 = vmatpush1.msra.mxu0 0.0
    %2274 = vmatprep.subr.mxu0 0.0
    %2275 = vmatpush1.msra.mxu0 0.0
    %2276 = vmatprep.subr.mxu0 0.0
    %2277 = vmatpush1.msra.mxu0 0.0
    %2278 = vmatprep.subr.mxu0 0.0
    %2279 = vmatpush1.msra.mxu0 0.0
    %2280 = vmatprep.subr.mxu0 0.0
    %2281 = vmatpush1.msra.mxu0 0.0
    %2282 = vmatprep.subr.mxu0 0.0
    %2283 = vmatpush1.msra.mxu0 0.0
    %2284 = vmatprep.subr.mxu0 0.0
    %2285 = vmatpush1.msra.mxu0 0.0
    %2286 = vmatprep.subr.mxu0 0.0
    %2287 = vmatpush1.msra.mxu0 0.0
    %2288 = vmatprep.subr.mxu0 0.0
    %2289 = vmatpush1.msra.mxu0 0.0
    %2290 = vmatprep.subr.mxu0 0.0
    %2291 = vmatpush1.msra.mxu0 0.0
    %2292 = vmatprep.subr.mxu0 0.0
    %2293 = vmatpush1.msra.mxu0 0.0
    %2294 = vmatprep.subr.mxu0 0.0
    %2295 = vmatpush1.msra.mxu0 0.0
    %2296 = vmatprep.mubr.f32.mxu0 0.0
    %2297 = vmatmul.mubr.f32.gmra.mrb[0].mxu0 %v2159
    %v2298 = vpop.f32.mrb[0].mxu0
    %v2299 = vadd.f32 0.0, %v2298
    %v2300 = vpop.f32.mrb[0].mxu0
    %v2301 = vadd.f32 0.0, %v2300
    %2302 = vdwg.mxu0
    %v2304 = vsel %vm372, %v2123, 0
    %2306 = vmatprep.subr.mxu0 %v2087
    %2307 = vmatpush1.msra.mxu0 %v2086
    %2308 = vmatprep.subr.mxu0 %v2103
    %2309 = vmatpush1.msra.mxu0 %v2102
    %2310 = vmatprep.subr.mxu0 %v2119
    %2311 = vmatpush1.msra.mxu0 %v2118
    %2312 = vmatprep.subr.mxu0 0.0
    %2313 = vmatpush1.msra.mxu0 0.0
    %2314 = vmatprep.subr.mxu0 0.0
    %2315 = vmatpush1.msra.mxu0 0.0
    %2316 = vmatprep.subr.mxu0 0.0
    %2317 = vmatpush1.msra.mxu0 0.0
    %2318 = vmatprep.subr.mxu0 0.0
    %2319 = vmatpush1.msra.mxu0 0.0
    %2320 = vmatprep.subr.mxu0 0.0
    %2321 = vmatpush1.msra.mxu0 0.0
    %2322 = vmatprep.subr.mxu0 0.0
    %2323 = vmatpush1.msra.mxu0 0.0
    %2324 = vmatprep.subr.mxu0 0.0
    %2325 = vmatpush1.msra.mxu0 0.0
    %2326 = vmatprep.subr.mxu0 0.0
    %2327 = vmatpush1.msra.mxu0 0.0
    %2328 = vmatprep.subr.mxu0 0.0
    %2329 = vmatpush1.msra.mxu0 0.0
    %2330 = vmatprep.subr.mxu0 0.0
    %2331 = vmatpush1.msra.mxu0 0.0
    %2332 = vmatprep.subr.mxu0 0.0
    %2333 = vmatpush1.msra.mxu0 0.0
    %2334 = vmatprep.subr.mxu0 0.0
    %2335 = vmatpush1.msra.mxu0 0.0
    %2336 = vmatprep.subr.mxu0 0.0
    %2337 = vmatpush1.msra.mxu0 0.0
    %2338 = vmatprep.subr.mxu0 0.0
    %2339 = vmatpush1.msra.mxu0 0.0
    %2340 = vmatprep.subr.mxu0 0.0
    %2341 = vmatpush1.msra.mxu0 0.0
    %2342 = vmatprep.subr.mxu0 0.0
    %2343 = vmatpush1.msra.mxu0 0.0
    %2344 = vmatprep.subr.mxu0 0.0
    %2345 = vmatpush1.msra.mxu0 0.0
    %2346 = vmatprep.subr.mxu0 0.0
    %2347 = vmatpush1.msra.mxu0 0.0
    %2348 = vmatprep.subr.mxu0 0.0
    %2349 = vmatpush1.msra.mxu0 0.0
    %2350 = vmatprep.subr.mxu0 0.0
    %2351 = vmatpush1.msra.mxu0 0.0
    %2352 = vmatprep.subr.mxu0 0.0
    %2353 = vmatpush1.msra.mxu0 0.0
    %2354 = vmatprep.subr.mxu0 0.0
    %2355 = vmatpush1.msra.mxu0 0.0
    %2356 = vmatprep.subr.mxu0 0.0
    %2357 = vmatpush1.msra.mxu0 0.0
    %2358 = vmatprep.subr.mxu0 0.0
    %2359 = vmatpush1.msra.mxu0 0.0
    %2360 = vmatprep.subr.mxu0 0.0
    %2361 = vmatpush1.msra.mxu0 0.0
    %2362 = vmatprep.subr.mxu0 0.0
    %2363 = vmatpush1.msra.mxu0 0.0
    %2364 = vmatprep.subr.mxu0 0.0
    %2365 = vmatpush1.msra.mxu0 0.0
    %2366 = vmatprep.subr.mxu0 0.0
    %2367 = vmatpush1.msra.mxu0 0.0
    %2368 = vmatprep.subr.mxu0 0.0
    %2369 = vmatpush1.msra.mxu0 0.0
    %2370 = vmatprep.mubr.f32.mxu0 0.0
    %2371 = vmatmul.mubr.f32.gmra.mrb[0].mxu0 %v2304
    %v2372 = vpop.f32.mrb[0].mxu0
    %v2373 = vadd.f32 %v2228, %v2372
    %v2374 = vpop.f32.mrb[0].mxu0
    %v2375 = vadd.f32 %v2230, %v2374
    %2376 = vdwg.mxu0
    %2377 = vmatprep.subr.mxu0 %v2089
    %2378 = vmatpush1.msra.mxu0 %v2088
    %2379 = vmatprep.subr.mxu0 %v2105
    %2380 = vmatpush1.msra.mxu0 %v2104
    %2381 = vmatprep.subr.mxu0 %v2121
    %2382 = vmatpush1.msra.mxu0 %v2120
    %2383 = vmatprep.subr.mxu0 0.0
    %2384 = vmatpush1.msra.mxu0 0.0
    %2385 = vmatprep.subr.mxu0 0.0
    %2386 = vmatpush1.msra.mxu0 0.0
    %2387 = vmatprep.subr.mxu0 0.0
    %2388 = vmatpush1.msra.mxu0 0.0
    %2389 = vmatprep.subr.mxu0 0.0
    %2390 = vmatpush1.msra.mxu0 0.0
    %2391 = vmatprep.subr.mxu0 0.0
    %2392 = vmatpush1.msra.mxu0 0.0
    %2393 = vmatprep.subr.mxu0 0.0
    %2394 = vmatpush1.msra.mxu0 0.0
    %2395 = vmatprep.subr.mxu0 0.0
    %2396 = vmatpush1.msra.mxu0 0.0
    %2397 = vmatprep.subr.mxu0 0.0
    %2398 = vmatpush1.msra.mxu0 0.0
    %2399 = vmatprep.subr.mxu0 0.0
    %2400 = vmatpush1.msra.mxu0 0.0
    %2401 = vmatprep.subr.mxu0 0.0
    %2402 = vmatpush1.msra.mxu0 0.0
    %2403 = vmatprep.subr.mxu0 0.0
    %2404 = vmatpush1.msra.mxu0 0.0
    %2405 = vmatprep.subr.mxu0 0.0
    %2406 = vmatpush1.msra.mxu0 0.0
    %2407 = vmatprep.subr.mxu0 0.0
    %2408 = vmatpush1.msra.mxu0 0.0
    %2409 = vmatprep.subr.mxu0 0.0
    %2410 = vmatpush1.msra.mxu0 0.0
    %2411 = vmatprep.subr.mxu0 0.0
    %2412 = vmatpush1.msra.mxu0 0.0
    %2413 = vmatprep.subr.mxu0 0.0
    %2414 = vmatpush1.msra.mxu0 0.0
    %2415 = vmatprep.subr.mxu0 0.0
    %2416 = vmatpush1.msra.mxu0 0.0
    %2417 = vmatprep.subr.mxu0 0.0
    %2418 = vmatpush1.msra.mxu0 0.0
    %2419 = vmatprep.subr.mxu0 0.0
    %2420 = vmatpush1.msra.mxu0 0.0
    %2421 = vmatprep.subr.mxu0 0.0
    %2422 = vmatpush1.msra.mxu0 0.0
    %2423 = vmatprep.subr.mxu0 0.0
    %2424 = vmatpush1.msra.mxu0 0.0
    %2425 = vmatprep.subr.mxu0 0.0
    %2426 = vmatpush1.msra.mxu0 0.0
    %2427 = vmatprep.subr.mxu0 0.0
    %2428 = vmatpush1.msra.mxu0 0.0
    %2429 = vmatprep.subr.mxu0 0.0
    %2430 = vmatpush1.msra.mxu0 0.0
    %2431 = vmatprep.subr.mxu0 0.0
    %2432 = vmatpush1.msra.mxu0 0.0
    %2433 = vmatprep.subr.mxu0 0.0
    %2434 = vmatpush1.msra.mxu0 0.0
    %2435 = vmatprep.subr.mxu0 0.0
    %2436 = vmatpush1.msra.mxu0 0.0
    %2437 = vmatprep.subr.mxu0 0.0
    %2438 = vmatpush1.msra.mxu0 0.0
    %2439 = vmatprep.subr.mxu0 0.0
    %2440 = vmatpush1.msra.mxu0 0.0
    %2441 = vmatprep.mubr.f32.mxu0 0.0
    %2442 = vmatmul.mubr.f32.gmra.mrb[0].mxu0 %v2304
    %v2443 = vpop.f32.mrb[0].mxu0
    %v2444 = vadd.f32 %v2299, %v2443
    %v2445 = vpop.f32.mrb[0].mxu0
    %v2446 = vadd.f32 %v2301, %v2445
    %2447 = vdwg.mxu0
    %2448 = vrot.lane.b32.xlu0 %v2070, 113
    %v2449 = vpop.permute.xlu0 %2448
    %2450 = vrot.lane.b32.xlu0 %v2071, 113
    %v2451 = vpop.permute.xlu0 %2450
    %2452 = vrot.lane.b32.xlu0 %v2072, 113
    %v2453 = vpop.permute.xlu0 %2452
    %2454 = vrot.lane.b32.xlu0 %v2073, 113
    %v2455 = vpop.permute.xlu0 %2454
    %v2456 = vsel %vm671, %v2453, %v2455
    %v2457 = vsel %vm671, %v2451, %v2453
    %v2458 = vsel %vm671, %v2449, %v2451
    %v2459 = vsel %vm671, %v2455, %v2449
    %v2460 = vmul.f32 %v677, %v2458
    %v2461 = vmul.f32 %v678, %v2457
    %v2462 = vmul.f32 %v679, %v2456
    %v2463 = vmul.f32 %v680, %v2459
    %2464 = vrot.lane.b32.xlu0 %v2070, 112
    %v2465 = vpop.permute.xlu0 %2464
    %2466 = vrot.lane.b32.xlu0 %v2071, 112
    %v2467 = vpop.permute.xlu0 %2466
    %2468 = vrot.lane.b32.xlu0 %v2072, 112
    %v2469 = vpop.permute.xlu0 %2468
    %2470 = vrot.lane.b32.xlu0 %v2073, 112
    %v2471 = vpop.permute.xlu0 %2470
    %v2472 = vsel %vm693, %v2469, %v2471
    %v2473 = vsel %vm693, %v2467, %v2469
    %v2474 = vsel %vm693, %v2465, %v2467
    %v2475 = vsel %vm693, %v2471, %v2465
    %v2476 = vmul.f32 %v699, %v2474
    %v2477 = vmul.f32 %v700, %v2473
    %v2478 = vmul.f32 %v701, %v2472
    %v2479 = vmul.f32 %v702, %v2475
    %2480 = vrot.lane.b32.xlu0 %v2070, 111
    %v2481 = vpop.permute.xlu0 %2480
    %2482 = vrot.lane.b32.xlu0 %v2071, 111
    %v2483 = vpop.permute.xlu0 %2482
    %2484 = vrot.lane.b32.xlu0 %v2072, 111
    %v2485 = vpop.permute.xlu0 %2484
    %2486 = vrot.lane.b32.xlu0 %v2073, 111
    %v2487 = vpop.permute.xlu0 %2486
    %v2488 = vsel %vm715, %v2485, %v2487
    %v2489 = vsel %vm715, %v2483, %v2485
    %v2490 = vsel %vm715, %v2481, %v2483
    %v2491 = vsel %vm715, %v2487, %v2481
    %v2492 = vmul.f32 %v721, %v2490
    %v2493 = vmul.f32 %v722, %v2489
    %v2494 = vmul.f32 %v723, %v2488
    %v2495 = vmul.f32 %v724, %v2491
    %s2496 = scalar_lea.vmem %s5, 88
    %v2497 = vld [vmem:[%s2496] sm:$0xff]
    %v2499 = vsel %vm372, %v2497, 0
    %2501 = vmatprep.subr.mxu0 %v2461
    %2502 = vmatpush1.msra.mxu0 %v2460
    %2503 = vmatprep.subr.mxu0 %v2477
    %2504 = vmatpush1.msra.mxu0 %v2476
    %2505 = vmatprep.subr.mxu0 %v2493
    %2506 = vmatpush1.msra.mxu0 %v2492
    %2507 = vmatprep.subr.mxu0 0.0
    %2508 = vmatpush1.msra.mxu0 0.0
    %2509 = vmatprep.subr.mxu0 0.0
    %2510 = vmatpush1.msra.mxu0 0.0
    %2511 = vmatprep.subr.mxu0 0.0
    %2512 = vmatpush1.msra.mxu0 0.0
    %2513 = vmatprep.subr.mxu0 0.0
    %2514 = vmatpush1.msra.mxu0 0.0
    %2515 = vmatprep.subr.mxu0 0.0
    %2516 = vmatpush1.msra.mxu0 0.0
    %2517 = vmatprep.subr.mxu0 0.0
    %2518 = vmatpush1.msra.mxu0 0.0
    %2519 = vmatprep.subr.mxu0 0.0
    %2520 = vmatpush1.msra.mxu0 0.0
    %2521 = vmatprep.subr.mxu0 0.0
    %2522 = vmatpush1.msra.mxu0 0.0
    %2523 = vmatprep.subr.mxu0 0.0
    %2524 = vmatpush1.msra.mxu0 0.0
    %2525 = vmatprep.subr.mxu0 0.0
    %2526 = vmatpush1.msra.mxu0 0.0
    %2527 = vmatprep.subr.mxu0 0.0
    %2528 = vmatpush1.msra.mxu0 0.0
    %2529 = vmatprep.subr.mxu0 0.0
    %2530 = vmatpush1.msra.mxu0 0.0
    %2531 = vmatprep.subr.mxu0 0.0
    %2532 = vmatpush1.msra.mxu0 0.0
    %2533 = vmatprep.subr.mxu0 0.0
    %2534 = vmatpush1.msra.mxu0 0.0
    %2535 = vmatprep.subr.mxu0 0.0
    %2536 = vmatpush1.msra.mxu0 0.0
    %2537 = vmatprep.subr.mxu0 0.0
    %2538 = vmatpush1.msra.mxu0 0.0
    %2539 = vmatprep.subr.mxu0 0.0
    %2540 = vmatpush1.msra.mxu0 0.0
    %2541 = vmatprep.subr.mxu0 0.0
    %2542 = vmatpush1.msra.mxu0 0.0
    %2543 = vmatprep.subr.mxu0 0.0
    %2544 = vmatpush1.msra.mxu0 0.0
    %2545 = vmatprep.subr.mxu0 0.0
    %2546 = vmatpush1.msra.mxu0 0.0
    %2547 = vmatprep.subr.mxu0 0.0
    %2548 = vmatpush1.msra.mxu0 0.0
    %2549 = vmatprep.subr.mxu0 0.0
    %2550 = vmatpush1.msra.mxu0 0.0
    %2551 = vmatprep.subr.mxu0 0.0
    %2552 = vmatpush1.msra.mxu0 0.0
    %2553 = vmatprep.subr.mxu0 0.0
    %2554 = vmatpush1.msra.mxu0 0.0
    %2555 = vmatprep.subr.mxu0 0.0
    %2556 = vmatpush1.msra.mxu0 0.0
    %2557 = vmatprep.subr.mxu0 0.0
    %2558 = vmatpush1.msra.mxu0 0.0
    %2559 = vmatprep.subr.mxu0 0.0
    %2560 = vmatpush1.msra.mxu0 0.0
    %2561 = vmatprep.subr.mxu0 0.0
    %2562 = vmatpush1.msra.mxu0 0.0
    %2563 = vmatprep.subr.mxu0 0.0
    %2564 = vmatpush1.msra.mxu0 0.0
    %2565 = vmatprep.mubr.f32.mxu0 0.0
    %2566 = vmatmul.mubr.f32.gmra.mrb[0].mxu0 %v2499
    %v2567 = vpop.f32.mrb[0].mxu0
    %v2568 = vadd.f32 0.0, %v2567
    %v2569 = vpop.f32.mrb[0].mxu0
    %v2570 = vadd.f32 0.0, %v2569
    %2571 = vdwg.mxu0
    %2572 = vmatprep.subr.mxu0 %v2463
    %2573 = vmatpush1.msra.mxu0 %v2462
    %2574 = vmatprep.subr.mxu0 %v2479
    %2575 = vmatpush1.msra.mxu0 %v2478
    %2576 = vmatprep.subr.mxu0 %v2495
    %2577 = vmatpush1.msra.mxu0 %v2494
    %2578 = vmatprep.subr.mxu0 0.0
    %2579 = vmatpush1.msra.mxu0 0.0
    %2580 = vmatprep.subr.mxu0 0.0
    %2581 = vmatpush1.msra.mxu0 0.0
    %2582 = vmatprep.subr.mxu0 0.0
    %2583 = vmatpush1.msra.mxu0 0.0
    %2584 = vmatprep.subr.mxu0 0.0
    %2585 = vmatpush1.msra.mxu0 0.0
    %2586 = vmatprep.subr.mxu0 0.0
    %2587 = vmatpush1.msra.mxu0 0.0
    %2588 = vmatprep.subr.mxu0 0.0
    %2589 = vmatpush1.msra.mxu0 0.0
    %2590 = vmatprep.subr.mxu0 0.0
    %2591 = vmatpush1.msra.mxu0 0.0
    %2592 = vmatprep.subr.mxu0 0.0
    %2593 = vmatpush1.msra.mxu0 0.0
    %2594 = vmatprep.subr.mxu0 0.0
    %2595 = vmatpush1.msra.mxu0 0.0
    %2596 = vmatprep.subr.mxu0 0.0
    %2597 = vmatpush1.msra.mxu0 0.0
    %2598 = vmatprep.subr.mxu0 0.0
    %2599 = vmatpush1.msra.mxu0 0.0
    %2600 = vmatprep.subr.mxu0 0.0
    %2601 = vmatpush1.msra.mxu0 0.0
    %2602 = vmatprep.subr.mxu0 0.0
    %2603 = vmatpush1.msra.mxu0 0.0
    %2604 = vmatprep.subr.mxu0 0.0
    %2605 = vmatpush1.msra.mxu0 0.0
    %2606 = vmatprep.subr.mxu0 0.0
    %2607 = vmatpush1.msra.mxu0 0.0
    %2608 = vmatprep.subr.mxu0 0.0
    %2609 = vmatpush1.msra.mxu0 0.0
    %2610 = vmatprep.subr.mxu0 0.0
    %2611 = vmatpush1.msra.mxu0 0.0
    %2612 = vmatprep.subr.mxu0 0.0
    %2613 = vmatpush1.msra.mxu0 0.0
    %2614 = vmatprep.subr.mxu0 0.0
    %2615 = vmatpush1.msra.mxu0 0.0
    %2616 = vmatprep.subr.mxu0 0.0
    %2617 = vmatpush1.msra.mxu0 0.0
    %2618 = vmatprep.subr.mxu0 0.0
    %2619 = vmatpush1.msra.mxu0 0.0
    %2620 = vmatprep.subr.mxu0 0.0
    %2621 = vmatpush1.msra.mxu0 0.0
    %2622 = vmatprep.subr.mxu0 0.0
    %2623 = vmatpush1.msra.mxu0 0.0
    %2624 = vmatprep.subr.mxu0 0.0
    %2625 = vmatpush1.msra.mxu0 0.0
    %2626 = vmatprep.subr.mxu0 0.0
    %2627 = vmatpush1.msra.mxu0 0.0
    %2628 = vmatprep.subr.mxu0 0.0
    %2629 = vmatpush1.msra.mxu0 0.0
    %2630 = vmatprep.subr.mxu0 0.0
    %2631 = vmatpush1.msra.mxu0 0.0
    %2632 = vmatprep.subr.mxu0 0.0
    %2633 = vmatpush1.msra.mxu0 0.0
    %2634 = vmatprep.subr.mxu0 0.0
    %2635 = vmatpush1.msra.mxu0 0.0
    %2636 = vmatprep.mubr.f32.mxu0 0.0
    %2637 = vmatmul.mubr.f32.gmra.mrb[0].mxu0 %v2499
    %v2638 = vpop.f32.mrb[0].mxu0
    %v2639 = vadd.f32 0.0, %v2638
    %v2640 = vpop.f32.mrb[0].mxu0
    %v2641 = vadd.f32 0.0, %v2640
    %2642 = vdwg.mxu0
    %v2643 = vadd.f32 %v2373, %v2568
    %v2644 = vadd.f32 %v2375, %v2570
    %v2645 = vadd.f32 %v2444, %v2639
    %v2646 = vadd.f32 %v2446, %v2641
    %s2647 = scalar_lea.vmem %s6, 24
    %v2648 = vld [vmem:[%s2647] sm:$0xff]
    %2650 = vset.pattern.permute.xlu0 0
    %2651 = vperm.xlu0 %2650, %v2648
    %v2652 = vpop.permute.xlu0 %2651
    %v2654 = vadd.f32 %v2643, %v2652
    %v2655 = vadd.f32 %v2644, %v2652
    %v2656 = vadd.f32 %v2645, %v2652
    %v2657 = vadd.f32 %v2646, %v2652
    %v2658 = vadd.f32 %v1482, %v2654
    %v2659 = vadd.f32 %v1483, %v2655
    %v2660 = vadd.f32 %v1484, %v2656
    %v2661 = vadd.f32 %v1485, %v2657
    %v2662 = vmax.f32 %v2658, 0.0
    %v2663 = vmax.f32 %v2659, 0.0
    %v2664 = vmax.f32 %v2660, 0.0
    %v2665 = vmax.f32 %v2661, 0.0
    %v2666 = vld [vmem:[%s7] sm:$0x1]
    %v2667 = vld [vmem:[#allocation2] sm:$0x1]
    %2669 = vset.pattern.permute.xlu0 0
    %2670 = vperm.xlu0 %2669, %v2667
    %v2671 = vpop.permute.xlu0 %2670
    %v2673 = vlaneseq
    %v2674 = vshrl.u32 %v2673, 7
    %v2675 = vsub.s32 0, %v2674
    %v2676 = vrot.slane %v2671, %v2675
    %v2678 = vsel %vm112, %v2666, 0
    %2680 = vmatprep.subr.mxu0 %v2663
    %2681 = vmatpush1.msra.mxu0 %v2662
    %2682 = vmatprep.subr.mxu0 0.0
    %2683 = vmatpush1.msra.mxu0 0.0
    %2684 = vmatprep.subr.mxu0 0.0
    %2685 = vmatpush1.msra.mxu0 0.0
    %2686 = vmatprep.subr.mxu0 0.0
    %2687 = vmatpush1.msra.mxu0 0.0
    %2688 = vmatprep.subr.mxu0 0.0
    %2689 = vmatpush1.msra.mxu0 0.0
    %2690 = vmatprep.subr.mxu0 0.0
    %2691 = vmatpush1.msra.mxu0 0.0
    %2692 = vmatprep.subr.mxu0 0.0
    %2693 = vmatpush1.msra.mxu0 0.0
    %2694 = vmatprep.subr.mxu0 0.0
    %2695 = vmatpush1.msra.mxu0 0.0
    %2696 = vmatprep.subr.mxu0 0.0
    %2697 = vmatpush1.msra.mxu0 0.0
    %2698 = vmatprep.subr.mxu0 0.0
    %2699 = vmatpush1.msra.mxu0 0.0
    %2700 = vmatprep.subr.mxu0 0.0
    %2701 = vmatpush1.msra.mxu0 0.0
    %2702 = vmatprep.subr.mxu0 0.0
    %2703 = vmatpush1.msra.mxu0 0.0
    %2704 = vmatprep.subr.mxu0 0.0
    %2705 = vmatpush1.msra.mxu0 0.0
    %2706 = vmatprep.subr.mxu0 0.0
    %2707 = vmatpush1.msra.mxu0 0.0
    %2708 = vmatprep.subr.mxu0 0.0
    %2709 = vmatpush1.msra.mxu0 0.0
    %2710 = vmatprep.subr.mxu0 0.0
    %2711 = vmatpush1.msra.mxu0 0.0
    %2712 = vmatprep.subr.mxu0 0.0
    %2713 = vmatpush1.msra.mxu0 0.0
    %2714 = vmatprep.subr.mxu0 0.0
    %2715 = vmatpush1.msra.mxu0 0.0
    %2716 = vmatprep.subr.mxu0 0.0
    %2717 = vmatpush1.msra.mxu0 0.0
    %2718 = vmatprep.subr.mxu0 0.0
    %2719 = vmatpush1.msra.mxu0 0.0
    %2720 = vmatprep.subr.mxu0 0.0
    %2721 = vmatpush1.msra.mxu0 0.0
    %2722 = vmatprep.subr.mxu0 0.0
    %2723 = vmatpush1.msra.mxu0 0.0
    %2724 = vmatprep.subr.mxu0 0.0
    %2725 = vmatpush1.msra.mxu0 0.0
    %2726 = vmatprep.subr.mxu0 0.0
    %2727 = vmatpush1.msra.mxu0 0.0
    %2728 = vmatprep.subr.mxu0 0.0
    %2729 = vmatpush1.msra.mxu0 0.0
    %2730 = vmatprep.subr.mxu0 0.0
    %2731 = vmatpush1.msra.mxu0 0.0
    %2732 = vmatprep.subr.mxu0 0.0
    %2733 = vmatpush1.msra.mxu0 0.0
    %2734 = vmatprep.subr.mxu0 0.0
    %2735 = vmatpush1.msra.mxu0 0.0
    %2736 = vmatprep.subr.mxu0 0.0
    %2737 = vmatpush1.msra.mxu0 0.0
    %2738 = vmatprep.subr.mxu0 0.0
    %2739 = vmatpush1.msra.mxu0 0.0
    %2740 = vmatprep.subr.mxu0 0.0
    %2741 = vmatpush1.msra.mxu0 0.0
    %2742 = vmatprep.subr.mxu0 0.0
    %2743 = vmatpush1.msra.mxu0 0.0
    %2744 = vmatprep.mubr.f32.mxu0 0.0
    %2745 = vmatmul.mubr.f32.gmra.mrb[0].mxu0 %v2678
    %v2746 = vpop.f32.mrb[0].mxu0
    %v2747 = vadd.f32 %v2676, %v2746
    %v2748 = vpop.f32.mrb[0].mxu0
    %v2749 = vadd.f32 %v2676, %v2748
    %2750 = vdwg.mxu0
    %2751 = vmatprep.subr.mxu0 %v2665
    %2752 = vmatpush1.msra.mxu0 %v2664
    %2753 = vmatprep.subr.mxu0 0.0
    %2754 = vmatpush1.msra.mxu0 0.0
    %2755 = vmatprep.subr.mxu0 0.0
    %2756 = vmatpush1.msra.mxu0 0.0
    %2757 = vmatprep.subr.mxu0 0.0
    %2758 = vmatpush1.msra.mxu0 0.0
    %2759 = vmatprep.subr.mxu0 0.0
    %2760 = vmatpush1.msra.mxu0 0.0
    %2761 = vmatprep.subr.mxu0 0.0
    %2762 = vmatpush1.msra.mxu0 0.0
    %2763 = vmatprep.subr.mxu0 0.0
    %2764 = vmatpush1.msra.mxu0 0.0
    %2765 = vmatprep.subr.mxu0 0.0
    %2766 = vmatpush1.msra.mxu0 0.0
    %2767 = vmatprep.subr.mxu0 0.0
    %2768 = vmatpush1.msra.mxu0 0.0
    %2769 = vmatprep.subr.mxu0 0.0
    %2770 = vmatpush1.msra.mxu0 0.0
    %2771 = vmatprep.subr.mxu0 0.0
    %2772 = vmatpush1.msra.mxu0 0.0
    %2773 = vmatprep.subr.mxu0 0.0
    %2774 = vmatpush1.msra.mxu0 0.0
    %2775 = vmatprep.subr.mxu0 0.0
    %2776 = vmatpush1.msra.mxu0 0.0
    %2777 = vmatprep.subr.mxu0 0.0
    %2778 = vmatpush1.msra.mxu0 0.0
    %2779 = vmatprep.subr.mxu0 0.0
    %2780 = vmatpush1.msra.mxu0 0.0
    %2781 = vmatprep.subr.mxu0 0.0
    %2782 = vmatpush1.msra.mxu0 0.0
    %2783 = vmatprep.subr.mxu0 0.0
    %2784 = vmatpush1.msra.mxu0 0.0
    %2785 = vmatprep.subr.mxu0 0.0
    %2786 = vmatpush1.msra.mxu0 0.0
    %2787 = vmatprep.subr.mxu0 0.0
    %2788 = vmatpush1.msra.mxu0 0.0
    %2789 = vmatprep.subr.mxu0 0.0
    %2790 = vmatpush1.msra.mxu0 0.0
    %2791 = vmatprep.subr.mxu0 0.0
    %2792 = vmatpush1.msra.mxu0 0.0
    %2793 = vmatprep.subr.mxu0 0.0
    %2794 = vmatpush1.msra.mxu0 0.0
    %2795 = vmatprep.subr.mxu0 0.0
    %2796 = vmatpush1.msra.mxu0 0.0
    %2797 = vmatprep.subr.mxu0 0.0
    %2798 = vmatpush1.msra.mxu0 0.0
    %2799 = vmatprep.subr.mxu0 0.0
    %2800 = vmatpush1.msra.mxu0 0.0
    %2801 = vmatprep.subr.mxu0 0.0
    %2802 = vmatpush1.msra.mxu0 0.0
    %2803 = vmatprep.subr.mxu0 0.0
    %2804 = vmatpush1.msra.mxu0 0.0
    %2805 = vmatprep.subr.mxu0 0.0
    %2806 = vmatpush1.msra.mxu0 0.0
    %2807 = vmatprep.subr.mxu0 0.0
    %2808 = vmatpush1.msra.mxu0 0.0
    %2809 = vmatprep.subr.mxu0 0.0
    %2810 = vmatpush1.msra.mxu0 0.0
    %2811 = vmatprep.subr.mxu0 0.0
    %2812 = vmatpush1.msra.mxu0 0.0
    %2813 = vmatprep.subr.mxu0 0.0
    %2814 = vmatpush1.msra.mxu0 0.0
    %2815 = vmatprep.mubr.f32.mxu0 0.0
    %2816 = vmatmul.mubr.f32.gmra.mrb[0].mxu0 %v2678
    %v2817 = vpop.f32.mrb[0].mxu0
    %v2818 = vadd.f32 %v2676, %v2817
    %v2819 = vpop.f32.mrb[0].mxu0
    %v2820 = vadd.f32 %v2676, %v2819
    %2821 = vdwg.mxu0
    %v2822 = vxor.u32 %v2747, 2147483648
    %v2823 = vxor.u32 %v2749, 2147483648
    %v2824 = vxor.u32 %v2818, 2147483648
    %v2825 = vxor.u32 %v2820, 2147483648
    %v2826 = vmul.f32 %v2822, 1.442695
    %v2827 = vpow.pop %v2826
    %v2828 = vmul.f32 %v2823, 1.442695
    %v2829 = vpow.pop %v2828
    %v2830 = vmul.f32 %v2824, 1.442695
    %v2831 = vpow.pop %v2830
    %v2832 = vmul.f32 %v2825, 1.442695
    %v2833 = vpow.pop %v2832
    %v2834 = vadd.f32 %v2827, 1.0
    %v2835 = vadd.f32 %v2829, 1.0
    %v2836 = vadd.f32 %v2831, 1.0
    %v2837 = vadd.f32 %v2833, 1.0
    %v2838 = vrcp.pop %v2834
    %v2839 = vmul.f32 1.0, %v2838
    %v2840 = vrcp.pop %v2835
    %v2841 = vmul.f32 1.0, %v2840
    %v2842 = vrcp.pop %v2836
    %v2843 = vmul.f32 1.0, %v2842
    %v2844 = vrcp.pop %v2837
    %v2845 = vmul.f32 1.0, %v2844
    %v2846 = vld [vmem:[%s10] sm:$0xff]
    %v2847 = vld [vmem:[%s10 + $0x8] sm:$0xff]
    %v2848 = vld [vmem:[%s10 + $0x10] sm:$0xff]
    %v2849 = vld [vmem:[%s10 + $0x18] sm:$0xff]
    %v2850 = vld [vmem:[%s10 + $0x20] sm:$0xff]
    %v2851 = vld [vmem:[%s10 + $0x28] sm:$0xff]
    %v2852 = vld [vmem:[%s10 + $0x30] sm:$0xff]
    %v2853 = vld [vmem:[%s10 + $0x38] sm:$0xff]
    %v2854 = vld [vmem:[%s10 + $0x40] sm:$0xff]
    %v2855 = vld [vmem:[%s10 + $0x48] sm:$0xff]
    %v2856 = vld [vmem:[%s10 + $0x50] sm:$0xff]
    %v2857 = vld [vmem:[%s10 + $0x58] sm:$0xff]
    %v2858 = vld [vmem:[%s10 + $0x60] sm:$0xff]
    %v2859 = vld [vmem:[%s10 + $0x68] sm:$0xff]
    %v2860 = vld [vmem:[%s10 + $0x70] sm:$0xff]
    %v2861 = vld [vmem:[%s10 + $0x78] sm:$0xff]
    %v2862 = vlaneseq
    %v2863 = vshrl.u32 %v2862, 7
    %v2864 = vsub.s32 0, %v2863
    %v2865 = vrot.slane %v2839, %v2864
    %v2866 = vlaneseq
    %v2867 = vshrl.u32 %v2866, 7
    %v2868 = vsub.s32 0, %v2867
    %v2869 = vrot.slane %v2841, %v2868
    %v2870 = vlaneseq
    %v2871 = vshrl.u32 %v2870, 7
    %v2872 = vsub.s32 0, %v2871
    %v2873 = vrot.slane %v2843, %v2872
    %v2874 = vlaneseq
    %v2875 = vshrl.u32 %v2874, 7
    %v2876 = vsub.s32 0, %v2875
    %v2877 = vrot.slane %v2845, %v2876
    %v2878 = vmul.f32 %v2846, %v2865
    %v2879 = vmul.f32 %v2847, %v2869
    %v2880 = vmul.f32 %v2848, %v2873
    %v2881 = vmul.f32 %v2849, %v2877
    %v2882 = vmul.f32 %v2850, %v2865
    %v2883 = vmul.f32 %v2851, %v2869
    %v2884 = vmul.f32 %v2852, %v2873
    %v2885 = vmul.f32 %v2853, %v2877
    %v2886 = vmul.f32 %v2854, %v2865
    %v2887 = vmul.f32 %v2855, %v2869
    %v2888 = vmul.f32 %v2856, %v2873
    %v2889 = vmul.f32 %v2857, %v2877
    %v2890 = vmul.f32 %v2858, %v2865
    %v2891 = vmul.f32 %v2859, %v2869
    %v2892 = vmul.f32 %v2860, %v2873
    %v2893 = vmul.f32 %v2861, %v2877
    %v2894 = vld [vmem:[%s11] sm:$0xff]
    %v2895 = vld [vmem:[%s11 + $0x8] sm:$0xff]
    %v2896 = vld [vmem:[%s11 + $0x10] sm:$0xff]
    %v2897 = vld [vmem:[%s11 + $0x18] sm:$0xff]
    %v2898 = vld [vmem:[%s11 + $0x20] sm:$0xff]
    %v2899 = vld [vmem:[%s11 + $0x28] sm:$0xff]
    %v2900 = vld [vmem:[%s11 + $0x30] sm:$0xff]
    %v2901 = vld [vmem:[%s11 + $0x38] sm:$0xff]
    %v2902 = vld [vmem:[%s11 + $0x40] sm:$0xff]
    %v2903 = vld [vmem:[%s11 + $0x48] sm:$0xff]
    %v2904 = vld [vmem:[%s11 + $0x50] sm:$0xff]
    %v2905 = vld [vmem:[%s11 + $0x58] sm:$0xff]
    %v2906 = vld [vmem:[%s11 + $0x60] sm:$0xff]
    %v2907 = vld [vmem:[%s11 + $0x68] sm:$0xff]
    %v2908 = vld [vmem:[%s11 + $0x70] sm:$0xff]
    %v2909 = vld [vmem:[%s11 + $0x78] sm:$0xff]
    %v2910 = vld [vmem:[%s11 + $0x80] sm:$0xff]
    %v2911 = vld [vmem:[%s11 + $0x88] sm:$0xff]
    %v2912 = vld [vmem:[%s11 + $0x90] sm:$0xff]
    %v2913 = vld [vmem:[%s11 + $0x98] sm:$0xff]
    %v2914 = vld [vmem:[%s11 + $0xa0] sm:$0xff]
    %v2915 = vld [vmem:[%s11 + $0xa8] sm:$0xff]
    %v2916 = vld [vmem:[%s11 + $0xb0] sm:$0xff]
    %v2917 = vld [vmem:[%s11 + $0xb8] sm:$0xff]
    %v2918 = vld [vmem:[%s11 + $0xc0] sm:$0xff]
    %v2919 = vld [vmem:[%s11 + $0xc8] sm:$0xff]
    %v2920 = vld [vmem:[%s11 + $0xd0] sm:$0xff]
    %v2921 = vld [vmem:[%s11 + $0xd8] sm:$0xff]
    %v2922 = vld [vmem:[%s11 + $0xe0] sm:$0xff]
    %v2923 = vld [vmem:[%s11 + $0xe8] sm:$0xff]
    %v2924 = vld [vmem:[%s11 + $0xf0] sm:$0xff]
    %v2925 = vld [vmem:[%s11 + $0xf8] sm:$0xff]
    %v2926 = vld [vmem:[%s11 + $0x100] sm:$0xff]
    %v2927 = vld [vmem:[%s11 + $0x108] sm:$0xff]
    %v2928 = vld [vmem:[%s11 + $0x110] sm:$0xff]
    %v2929 = vld [vmem:[%s11 + $0x118] sm:$0xff]
    %v2930 = vld [vmem:[%s11 + $0x120] sm:$0xff]
    %v2931 = vld [vmem:[%s11 + $0x128] sm:$0xff]
    %v2932 = vld [vmem:[%s11 + $0x130] sm:$0xff]
    %v2933 = vld [vmem:[%s11 + $0x138] sm:$0xff]
    %v2934 = vld [vmem:[%s11 + $0x140] sm:$0xff]
    %v2935 = vld [vmem:[%s11 + $0x148] sm:$0xff]
    %v2936 = vld [vmem:[%s11 + $0x150] sm:$0xff]
    %v2937 = vld [vmem:[%s11 + $0x158] sm:$0xff]
    %v2938 = vld [vmem:[%s11 + $0x160] sm:$0xff]
    %v2939 = vld [vmem:[%s11 + $0x168] sm:$0xff]
    %v2940 = vld [vmem:[%s11 + $0x170] sm:$0xff]
    %v2941 = vld [vmem:[%s11 + $0x178] sm:$0xff]
    %v2942 = vld [vmem:[%s11 + $0x180] sm:$0xff]
    %v2943 = vld [vmem:[%s11 + $0x188] sm:$0xff]
    %v2944 = vld [vmem:[%s11 + $0x190] sm:$0xff]
    %v2945 = vld [vmem:[%s11 + $0x198] sm:$0xff]
    %v2946 = vld [vmem:[%s11 + $0x1a0] sm:$0xff]
    %v2947 = vld [vmem:[%s11 + $0x1a8] sm:$0xff]
    %v2948 = vld [vmem:[%s11 + $0x1b0] sm:$0xff]
    %v2949 = vld [vmem:[%s11 + $0x1b8] sm:$0xff]
    %v2950 = vld [vmem:[%s11 + $0x1c0] sm:$0xff]
    %v2951 = vld [vmem:[%s11 + $0x1c8] sm:$0xff]
    %v2952 = vld [vmem:[%s11 + $0x1d0] sm:$0xff]
    %v2953 = vld [vmem:[%s11 + $0x1d8] sm:$0xff]
    %v2954 = vld [vmem:[%s11 + $0x1e0] sm:$0xff]
    %v2955 = vld [vmem:[%s11 + $0x1e8] sm:$0xff]
    %v2956 = vld [vmem:[%s11 + $0x1f0] sm:$0xff]
    %v2957 = vld [vmem:[%s11 + $0x1f8] sm:$0xff]
    %2958 = vmatprep.subr.mxu0 0.0
    %2959 = vmatpush1.msra.mxu0 %v2894
    %2960 = vmatprep.subr.mxu0 0.0
    %2961 = vmatpush1.msra.mxu0 %v2895
    %2962 = vmatprep.subr.mxu0 0.0
    %2963 = vmatpush1.msra.mxu0 %v2896
    %2964 = vmatprep.subr.mxu0 0.0
    %2965 = vmatpush1.msra.mxu0 %v2897
    %2966 = vmatprep.subr.mxu0 0.0
    %2967 = vmatpush1.msra.mxu0 %v2898
    %2968 = vmatprep.subr.mxu0 0.0
    %2969 = vmatpush1.msra.mxu0 %v2899
    %2970 = vmatprep.subr.mxu0 0.0
    %2971 = vmatpush1.msra.mxu0 %v2900
    %2972 = vmatprep.subr.mxu0 0.0
    %2973 = vmatpush1.msra.mxu0 %v2901
    %2974 = vmatprep.subr.mxu0 0.0
    %2975 = vmatpush1.msra.mxu0 %v2902
    %2976 = vmatprep.subr.mxu0 0.0
    %2977 = vmatpush1.msra.mxu0 %v2903
    %2978 = vmatprep.subr.mxu0 0.0
    %2979 = vmatpush1.msra.mxu0 %v2904
    %2980 = vmatprep.subr.mxu0 0.0
    %2981 = vmatpush1.msra.mxu0 %v2905
    %2982 = vmatprep.subr.mxu0 0.0
    %2983 = vmatpush1.msra.mxu0 %v2906
    %2984 = vmatprep.subr.mxu0 0.0
    %2985 = vmatpush1.msra.mxu0 %v2907
    %2986 = vmatprep.subr.mxu0 0.0
    %2987 = vmatpush1.msra.mxu0 %v2908
    %2988 = vmatprep.subr.mxu0 0.0
    %2989 = vmatpush1.msra.mxu0 %v2909
    %2990 = vmatprep.subr.mxu0 0.0
    %2991 = vmatpush1.msra.mxu0 %v2910
    %2992 = vmatprep.subr.mxu0 0.0
    %2993 = vmatpush1.msra.mxu0 %v2911
    %2994 = vmatprep.subr.mxu0 0.0
    %2995 = vmatpush1.msra.mxu0 %v2912
    %2996 = vmatprep.subr.mxu0 0.0
    %2997 = vmatpush1.msra.mxu0 %v2913
    %2998 = vmatprep.subr.mxu0 0.0
    %2999 = vmatpush1.msra.mxu0 %v2914
    %3000 = vmatprep.subr.mxu0 0.0
    %3001 = vmatpush1.msra.mxu0 %v2915
    %3002 = vmatprep.subr.mxu0 0.0
    %3003 = vmatpush1.msra.mxu0 %v2916
    %3004 = vmatprep.subr.mxu0 0.0
    %3005 = vmatpush1.msra.mxu0 %v2917
    %3006 = vmatprep.subr.mxu0 0.0
    %3007 = vmatpush1.msra.mxu0 %v2918
    %3008 = vmatprep.subr.mxu0 0.0
    %3009 = vmatpush1.msra.mxu0 %v2919
    %3010 = vmatprep.subr.mxu0 0.0
    %3011 = vmatpush1.msra.mxu0 %v2920
    %3012 = vmatprep.subr.mxu0 0.0
    %3013 = vmatpush1.msra.mxu0 %v2921
    %3014 = vmatprep.subr.mxu0 0.0
    %3015 = vmatpush1.msra.mxu0 %v2922
    %3016 = vmatprep.subr.mxu0 0.0
    %3017 = vmatpush1.msra.mxu0 %v2923
    %3018 = vmatprep.subr.mxu0 0.0
    %3019 = vmatpush1.msra.mxu0 %v2924
    %3020 = vmatprep.subr.mxu0 0.0
    %3021 = vmatpush1.msra.mxu0 %v2925
    %3022 = vmatprep.mubr.f32.mxu0 %v2879
    %3023 = vmatmul.mubr.f32.gmra.mrb[0].mxu0 %v2878
    %v3024 = vpop.f32.mrb[0].mxu0
    %v3025 = vadd.f32 0.0, %v3024
    %v3026 = vpop.f32.mrb[0].mxu0
    %3027 = vmatprep.mubr.f32.mxu0 %v2883
    %3028 = vmatmul.mubr.f32.gmra.mrb[0].mxu0 %v2882
    %v3029 = vpop.f32.mrb[0].mxu0
    %v3030 = vadd.f32 0.0, %v3029
    %v3031 = vpop.f32.mrb[0].mxu0
    %3032 = vmatprep.mubr.f32.mxu0 %v2887
    %3033 = vmatmul.mubr.f32.gmra.mrb[0].mxu0 %v2886
    %v3034 = vpop.f32.mrb[0].mxu0
    %v3035 = vadd.f32 0.0, %v3034
    %v3036 = vpop.f32.mrb[0].mxu0
    %3037 = vmatprep.mubr.f32.mxu0 %v2891
    %3038 = vmatmul.mubr.f32.gmra.mrb[0].mxu0 %v2890
    %v3039 = vpop.f32.mrb[0].mxu0
    %v3040 = vadd.f32 0.0, %v3039
    %v3041 = vpop.f32.mrb[0].mxu0
    %3042 = vdwg.mxu0
    %3043 = vmatprep.subr.mxu0 0.0
    %3044 = vmatpush1.msra.mxu0 %v2926
    %3045 = vmatprep.subr.mxu0 0.0
    %3046 = vmatpush1.msra.mxu0 %v2927
    %3047 = vmatprep.subr.mxu0 0.0
    %3048 = vmatpush1.msra.mxu0 %v2928
    %3049 = vmatprep.subr.mxu0 0.0
    %3050 = vmatpush1.msra.mxu0 %v2929
    %3051 = vmatprep.subr.mxu0 0.0
    %3052 = vmatpush1.msra.mxu0 %v2930
    %3053 = vmatprep.subr.mxu0 0.0
    %3054 = vmatpush1.msra.mxu0 %v2931
    %3055 = vmatprep.subr.mxu0 0.0
    %3056 = vmatpush1.msra.mxu0 %v2932
    %3057 = vmatprep.subr.mxu0 0.0
    %3058 = vmatpush1.msra.mxu0 %v2933
    %3059 = vmatprep.subr.mxu0 0.0
    %3060 = vmatpush1.msra.mxu0 %v2934
    %3061 = vmatprep.subr.mxu0 0.0
    %3062 = vmatpush1.msra.mxu0 %v2935
    %3063 = vmatprep.subr.mxu0 0.0
    %3064 = vmatpush1.msra.mxu0 %v2936
    %3065 = vmatprep.subr.mxu0 0.0
    %3066 = vmatpush1.msra.mxu0 %v2937
    %3067 = vmatprep.subr.mxu0 0.0
    %3068 = vmatpush1.msra.mxu0 %v2938
    %3069 = vmatprep.subr.mxu0 0.0
    %3070 = vmatpush1.msra.mxu0 %v2939
    %3071 = vmatprep.subr.mxu0 0.0
    %3072 = vmatpush1.msra.mxu0 %v2940
    %3073 = vmatprep.subr.mxu0 0.0
    %3074 = vmatpush1.msra.mxu0 %v2941
    %3075 = vmatprep.subr.mxu0 0.0
    %3076 = vmatpush1.msra.mxu0 %v2942
    %3077 = vmatprep.subr.mxu0 0.0
    %3078 = vmatpush1.msra.mxu0 %v2943
    %3079 = vmatprep.subr.mxu0 0.0
    %3080 = vmatpush1.msra.mxu0 %v2944
    %3081 = vmatprep.subr.mxu0 0.0
    %3082 = vmatpush1.msra.mxu0 %v2945
    %3083 = vmatprep.subr.mxu0 0.0
    %3084 = vmatpush1.msra.mxu0 %v2946
    %3085 = vmatprep.subr.mxu0 0.0
    %3086 = vmatpush1.msra.mxu0 %v2947
    %3087 = vmatprep.subr.mxu0 0.0
    %3088 = vmatpush1.msra.mxu0 %v2948
    %3089 = vmatprep.subr.mxu0 0.0
    %3090 = vmatpush1.msra.mxu0 %v2949
    %3091 = vmatprep.subr.mxu0 0.0
    %3092 = vmatpush1.msra.mxu0 %v2950
    %3093 = vmatprep.subr.mxu0 0.0
    %3094 = vmatpush1.msra.mxu0 %v2951
    %3095 = vmatprep.subr.mxu0 0.0
    %3096 = vmatpush1.msra.mxu0 %v2952
    %3097 = vmatprep.subr.mxu0 0.0
    %3098 = vmatpush1.msra.mxu0 %v2953
    %3099 = vmatprep.subr.mxu0 0.0
    %3100 = vmatpush1.msra.mxu0 %v2954
    %3101 = vmatprep.subr.mxu0 0.0
    %3102 = vmatpush1.msra.mxu0 %v2955
    %3103 = vmatprep.subr.mxu0 0.0
    %3104 = vmatpush1.msra.mxu0 %v2956
    %3105 = vmatprep.subr.mxu0 0.0
    %3106 = vmatpush1.msra.mxu0 %v2957
    %3107 = vmatprep.mubr.f32.mxu0 %v2881
    %3108 = vmatmul.mubr.f32.gmra.mrb[0].mxu0 %v2880
    %v3109 = vpop.f32.mrb[0].mxu0
    %v3110 = vadd.f32 %v3025, %v3109
    %v3111 = vpop.f32.mrb[0].mxu0
    %3112 = vmatprep.mubr.f32.mxu0 %v2885
    %3113 = vmatmul.mubr.f32.gmra.mrb[0].mxu0 %v2884
    %v3114 = vpop.f32.mrb[0].mxu0
    %v3115 = vadd.f32 %v3030, %v3114
    %v3116 = vpop.f32.mrb[0].mxu0
    %3117 = vmatprep.mubr.f32.mxu0 %v2889
    %3118 = vmatmul.mubr.f32.gmra.mrb[0].mxu0 %v2888
    %v3119 = vpop.f32.mrb[0].mxu0
    %v3120 = vadd.f32 %v3035, %v3119
    %v3121 = vpop.f32.mrb[0].mxu0
    %3122 = vmatprep.mubr.f32.mxu0 %v2893
    %3123 = vmatmul.mubr.f32.gmra.mrb[0].mxu0 %v2892
    %v3124 = vpop.f32.mrb[0].mxu0
    %v3125 = vadd.f32 %v3040, %v3124
    %v3126 = vpop.f32.mrb[0].mxu0
    %3127 = vdwg.mxu0
    %v3128 = vld [vmem:[#allocation6] sm:$0xff]
    %v3129 = vld [vmem:[#allocation6 + $0x8] sm:$0xff]
    %v3130 = vld [vmem:[#allocation6 + $0x10] sm:$0xff]
    %v3131 = vld [vmem:[#allocation6 + $0x18] sm:$0xff]
    %v3132 = vld [vmem:[%s12] sm:$0xff]
    %v3133 = vld [vmem:[%s12 + $0x8] sm:$0xff]
    %v3134 = vld [vmem:[%s12 + $0x10] sm:$0xff]
    %v3135 = vld [vmem:[%s12 + $0x18] sm:$0xff]
    %v3136 = vld [vmem:[%s12 + $0x20] sm:$0xff]
    %v3137 = vld [vmem:[%s12 + $0x28] sm:$0xff]
    %v3138 = vld [vmem:[%s12 + $0x30] sm:$0xff]
    %v3139 = vld [vmem:[%s12 + $0x38] sm:$0xff]
    %vm3140 = vcmask 523264
    %v3142 = vsel %vm3140, %v3128, 0
    %v3145 = vsel %vm3140, %v3129, 0
    %v3148 = vsel %vm3140, %v3130, 0
    %v3151 = vsel %vm3140, %v3131, 0
    %3153 = vmatprep.subr.mxu0 0.0
    %3154 = vmatpush1.msra.mxu0 %v3132
    %3155 = vmatprep.subr.mxu0 0.0
    %3156 = vmatpush1.msra.mxu0 %v3133
    %3157 = vmatprep.subr.mxu0 0.0
    %3158 = vmatpush1.msra.mxu0 %v3134
    %3159 = vmatprep.subr.mxu0 0.0
    %3160 = vmatpush1.msra.mxu0 %v3135
    %3161 = vmatprep.subr.mxu0 0.0
    %3162 = vmatpush1.msra.mxu0 %v3136
    %3163 = vmatprep.subr.mxu0 0.0
    %3164 = vmatpush1.msra.mxu0 %v3137
    %3165 = vmatprep.subr.mxu0 0.0
    %3166 = vmatpush1.msra.mxu0 %v3138
    %3167 = vmatprep.subr.mxu0 0.0
    %3168 = vmatpush1.msra.mxu0 %v3139
    %3169 = vmatprep.subr.mxu0 0.0
    %3170 = vmatpush1.msra.mxu0 0.0
    %3171 = vmatprep.subr.mxu0 0.0
    %3172 = vmatpush1.msra.mxu0 0.0
    %3173 = vmatprep.subr.mxu0 0.0
    %3174 = vmatpush1.msra.mxu0 0.0
    %3175 = vmatprep.subr.mxu0 0.0
    %3176 = vmatpush1.msra.mxu0 0.0
    %3177 = vmatprep.subr.mxu0 0.0
    %3178 = vmatpush1.msra.mxu0 0.0
    %3179 = vmatprep.subr.mxu0 0.0
    %3180 = vmatpush1.msra.mxu0 0.0
    %3181 = vmatprep.subr.mxu0 0.0
    %3182 = vmatpush1.msra.mxu0 0.0
    %3183 = vmatprep.subr.mxu0 0.0
    %3184 = vmatpush1.msra.mxu0 0.0
    %3185 = vmatprep.subr.mxu0 0.0
    %3186 = vmatpush1.msra.mxu0 0.0
    %3187 = vmatprep.subr.mxu0 0.0
    %3188 = vmatpush1.msra.mxu0 0.0
    %3189 = vmatprep.subr.mxu0 0.0
    %3190 = vmatpush1.msra.mxu0 0.0
    %3191 = vmatprep.subr.mxu0 0.0
    %3192 = vmatpush1.msra.mxu0 0.0
    %3193 = vmatprep.subr.mxu0 0.0
    %3194 = vmatpush1.msra.mxu0 0.0
    %3195 = vmatprep.subr.mxu0 0.0
    %3196 = vmatpush1.msra.mxu0 0.0
    %3197 = vmatprep.subr.mxu0 0.0
    %3198 = vmatpush1.msra.mxu0 0.0
    %3199 = vmatprep.subr.mxu0 0.0
    %3200 = vmatpush1.msra.mxu0 0.0
    %3201 = vmatprep.subr.mxu0 0.0
    %3202 = vmatpush1.msra.mxu0 0.0
    %3203 = vmatprep.subr.mxu0 0.0
    %3204 = vmatpush1.msra.mxu0 0.0
    %3205 = vmatprep.subr.mxu0 0.0
    %3206 = vmatpush1.msra.mxu0 0.0
    %3207 = vmatprep.subr.mxu0 0.0
    %3208 = vmatpush1.msra.mxu0 0.0
    %3209 = vmatprep.subr.mxu0 0.0
    %3210 = vmatpush1.msra.mxu0 0.0
    %3211 = vmatprep.subr.mxu0 0.0
    %3212 = vmatpush1.msra.mxu0 0.0
    %3213 = vmatprep.subr.mxu0 0.0
    %3214 = vmatpush1.msra.mxu0 0.0
    %3215 = vmatprep.subr.mxu0 0.0
    %3216 = vmatpush1.msra.mxu0 0.0
    %3217 = vmatprep.mubr.f32.mxu0 0.0
    %3218 = vmatmul.mubr.f32.gmra.mrb[0].mxu0 %v3142
    %v3219 = vpop.f32.mrb[0].mxu0
    %v3220 = vadd.f32 0.0, %v3219
    %v3221 = vpop.f32.mrb[0].mxu0
    %3222 = vmatprep.mubr.f32.mxu0 0.0
    %3223 = vmatmul.mubr.f32.gmra.mrb[0].mxu0 %v3145
    %v3224 = vpop.f32.mrb[0].mxu0
    %v3225 = vadd.f32 0.0, %v3224
    %v3226 = vpop.f32.mrb[0].mxu0
    %3227 = vmatprep.mubr.f32.mxu0 0.0
    %3228 = vmatmul.mubr.f32.gmra.mrb[0].mxu0 %v3148
    %v3229 = vpop.f32.mrb[0].mxu0
    %v3230 = vadd.f32 0.0, %v3229
    %v3231 = vpop.f32.mrb[0].mxu0
    %3232 = vmatprep.mubr.f32.mxu0 0.0
    %3233 = vmatmul.mubr.f32.gmra.mrb[0].mxu0 %v3151
    %v3234 = vpop.f32.mrb[0].mxu0
    %v3235 = vadd.f32 0.0, %v3234
    %v3236 = vpop.f32.mrb[0].mxu0
    %3237 = vdwg.mxu0
    %s3238 = scalar_lea.vmem %s12, 64
    %v3239 = vld [vmem:[%s3238] sm:$0xff]
    %v3240 = vld [vmem:[%s3238 + $0x8] sm:$0xff]
    %v3241 = vld [vmem:[%s3238 + $0x10] sm:$0xff]
    %v3242 = vld [vmem:[%s3238 + $0x18] sm:$0xff]
    %v3243 = vld [vmem:[%s3238 + $0x20] sm:$0xff]
    %v3244 = vld [vmem:[%s3238 + $0x28] sm:$0xff]
    %v3245 = vld [vmem:[%s3238 + $0x30] sm:$0xff]
    %v3246 = vld [vmem:[%s3238 + $0x38] sm:$0xff]
    %3247 = vmatprep.subr.mxu0 0.0
    %3248 = vmatpush1.msra.mxu0 %v3239
    %3249 = vmatprep.subr.mxu0 0.0
    %3250 = vmatpush1.msra.mxu0 %v3240
    %3251 = vmatprep.subr.mxu0 0.0
    %3252 = vmatpush1.msra.mxu0 %v3241
    %3253 = vmatprep.subr.mxu0 0.0
    %3254 = vmatpush1.msra.mxu0 %v3242
    %3255 = vmatprep.subr.mxu0 0.0
    %3256 = vmatpush1.msra.mxu0 %v3243
    %3257 = vmatprep.subr.mxu0 0.0
    %3258 = vmatpush1.msra.mxu0 %v3244
    %3259 = vmatprep.subr.mxu0 0.0
    %3260 = vmatpush1.msra.mxu0 %v3245
    %3261 = vmatprep.subr.mxu0 0.0
    %3262 = vmatpush1.msra.mxu0 %v3246
    %3263 = vmatprep.subr.mxu0 0.0
    %3264 = vmatpush1.msra.mxu0 0.0
    %3265 = vmatprep.subr.mxu0 0.0
    %3266 = vmatpush1.msra.mxu0 0.0
    %3267 = vmatprep.subr.mxu0 0.0
    %3268 = vmatpush1.msra.mxu0 0.0
    %3269 = vmatprep.subr.mxu0 0.0
    %3270 = vmatpush1.msra.mxu0 0.0
    %3271 = vmatprep.subr.mxu0 0.0
    %3272 = vmatpush1.msra.mxu0 0.0
    %3273 = vmatprep.subr.mxu0 0.0
    %3274 = vmatpush1.msra.mxu0 0.0
    %3275 = vmatprep.subr.mxu0 0.0
    %3276 = vmatpush1.msra.mxu0 0.0
    %3277 = vmatprep.subr.mxu0 0.0
    %3278 = vmatpush1.msra.mxu0 0.0
    %3279 = vmatprep.subr.mxu0 0.0
    %3280 = vmatpush1.msra.mxu0 0.0
    %3281 = vmatprep.subr.mxu0 0.0
    %3282 = vmatpush1.msra.mxu0 0.0
    %3283 = vmatprep.subr.mxu0 0.0
    %3284 = vmatpush1.msra.mxu0 0.0
    %3285 = vmatprep.subr.mxu0 0.0
    %3286 = vmatpush1.msra.mxu0 0.0
    %3287 = vmatprep.subr.mxu0 0.0
    %3288 = vmatpush1.msra.mxu0 0.0
    %3289 = vmatprep.subr.mxu0 0.0
    %3290 = vmatpush1.msra.mxu0 0.0
    %3291 = vmatprep.subr.mxu0 0.0
    %3292 = vmatpush1.msra.mxu0 0.0
    %3293 = vmatprep.subr.mxu0 0.0
    %3294 = vmatpush1.msra.mxu0 0.0
    %3295 = vmatprep.subr.mxu0 0.0
    %3296 = vmatpush1.msra.mxu0 0.0
    %3297 = vmatprep.subr.mxu0 0.0
    %3298 = vmatpush1.msra.mxu0 0.0
    %3299 = vmatprep.subr.mxu0 0.0
    %3300 = vmatpush1.msra.mxu0 0.0
    %3301 = vmatprep.subr.mxu0 0.0
    %3302 = vmatpush1.msra.mxu0 0.0
    %3303 = vmatprep.subr.mxu0 0.0
    %3304 = vmatpush1.msra.mxu0 0.0
    %3305 = vmatprep.subr.mxu0 0.0
    %3306 = vmatpush1.msra.mxu0 0.0
    %3307 = vmatprep.subr.mxu0 0.0
    %3308 = vmatpush1.msra.mxu0 0.0
    %3309 = vmatprep.subr.mxu0 0.0
    %3310 = vmatpush1.msra.mxu0 0.0
    %3311 = vmatprep.mubr.f32.mxu0 0.0
    %3312 = vmatmul.mubr.f32.gmra.mrb[0].mxu0 %v3142
    %v3313 = vpop.f32.mrb[0].mxu0
    %v3314 = vadd.f32 0.0, %v3313
    %v3315 = vpop.f32.mrb[0].mxu0
    %3316 = vmatprep.mubr.f32.mxu0 0.0
    %3317 = vmatmul.mubr.f32.gmra.mrb[0].mxu0 %v3145
    %v3318 = vpop.f32.mrb[0].mxu0
    %v3319 = vadd.f32 0.0, %v3318
    %v3320 = vpop.f32.mrb[0].mxu0
    %3321 = vmatprep.mubr.f32.mxu0 0.0
    %3322 = vmatmul.mubr.f32.gmra.mrb[0].mxu0 %v3148
    %v3323 = vpop.f32.mrb[0].mxu0
    %v3324 = vadd.f32 0.0, %v3323
    %v3325 = vpop.f32.mrb[0].mxu0
    %3326 = vmatprep.mubr.f32.mxu0 0.0
    %3327 = vmatmul.mubr.f32.gmra.mrb[0].mxu0 %v3151
    %v3328 = vpop.f32.mrb[0].mxu0
    %v3329 = vadd.f32 0.0, %v3328
    %v3330 = vpop.f32.mrb[0].mxu0
    %3331 = vdwg.mxu0
    %v3332 = vmax.f32 %v3220, %v3314
    %v3333 = vmax.f32 %v3225, %v3319
    %v3334 = vmax.f32 %v3230, %v3324
    %v3335 = vmax.f32 %v3235, %v3329
    %v3336 = vld [vmem:[%s13] sm:$0xff]
    %v3337 = vld [vmem:[%s13 + $0x8] sm:$0xff]
    %v3338 = vld [vmem:[%s13 + $0x10] sm:$0xff]
    %v3339 = vld [vmem:[%s13 + $0x18] sm:$0xff]
    %vm3340 = vcmask 261120
    %v3342 = vsel %vm3340, %v3336, 0
    %v3345 = vsel %vm3340, %v3337, 0
    %v3348 = vsel %vm3340, %v3338, 0
    %v3351 = vsel %vm3340, %v3339, 0
    %3353 = vmatprep.subr.mxu0 0.0
    %3354 = vmatpush1.msra.mxu0 %v3332
    %3355 = vmatprep.subr.mxu0 0.0
    %3356 = vmatpush1.msra.mxu0 %v3333
    %3357 = vmatprep.subr.mxu0 0.0
    %3358 = vmatpush1.msra.mxu0 %v3334
    %3359 = vmatprep.subr.mxu0 0.0
    %3360 = vmatpush1.msra.mxu0 %v3335
    %3361 = vmatprep.subr.mxu0 0.0
    %3362 = vmatpush1.msra.mxu0 0.0
    %3363 = vmatprep.subr.mxu0 0.0
    %3364 = vmatpush1.msra.mxu0 0.0
    %3365 = vmatprep.subr.mxu0 0.0
    %3366 = vmatpush1.msra.mxu0 0.0
    %3367 = vmatprep.subr.mxu0 0.0
    %3368 = vmatpush1.msra.mxu0 0.0
    %3369 = vmatprep.subr.mxu0 0.0
    %3370 = vmatpush1.msra.mxu0 0.0
    %3371 = vmatprep.subr.mxu0 0.0
    %3372 = vmatpush1.msra.mxu0 0.0
    %3373 = vmatprep.subr.mxu0 0.0
    %3374 = vmatpush1.msra.mxu0 0.0
    %3375 = vmatprep.subr.mxu0 0.0
    %3376 = vmatpush1.msra.mxu0 0.0
    %3377 = vmatprep.subr.mxu0 0.0
    %3378 = vmatpush1.msra.mxu0 0.0
    %3379 = vmatprep.subr.mxu0 0.0
    %3380 = vmatpush1.msra.mxu0 0.0
    %3381 = vmatprep.subr.mxu0 0.0
    %3382 = vmatpush1.msra.mxu0 0.0
    %3383 = vmatprep.subr.mxu0 0.0
    %3384 = vmatpush1.msra.mxu0 0.0
    %3385 = vmatprep.subr.mxu0 0.0
    %3386 = vmatpush1.msra.mxu0 0.0
    %3387 = vmatprep.subr.mxu0 0.0
    %3388 = vmatpush1.msra.mxu0 0.0
    %3389 = vmatprep.subr.mxu0 0.0
    %3390 = vmatpush1.msra.mxu0 0.0
    %3391 = vmatprep.subr.mxu0 0.0
    %3392 = vmatpush1.msra.mxu0 0.0
    %3393 = vmatprep.subr.mxu0 0.0
    %3394 = vmatpush1.msra.mxu0 0.0
    %3395 = vmatprep.subr.mxu0 0.0
    %3396 = vmatpush1.msra.mxu0 0.0
    %3397 = vmatprep.subr.mxu0 0.0
    %3398 = vmatpush1.msra.mxu0 0.0
    %3399 = vmatprep.subr.mxu0 0.0
    %3400 = vmatpush1.msra.mxu0 0.0
    %3401 = vmatprep.subr.mxu0 0.0
    %3402 = vmatpush1.msra.mxu0 0.0
    %3403 = vmatprep.subr.mxu0 0.0
    %3404 = vmatpush1.msra.mxu0 0.0
    %3405 = vmatprep.subr.mxu0 0.0
    %3406 = vmatpush1.msra.mxu0 0.0
    %3407 = vmatprep.subr.mxu0 0.0
    %3408 = vmatpush1.msra.mxu0 0.0
    %3409 = vmatprep.subr.mxu0 0.0
    %3410 = vmatpush1.msra.mxu0 0.0
    %3411 = vmatprep.subr.mxu0 0.0
    %3412 = vmatpush1.msra.mxu0 0.0
    %3413 = vmatprep.subr.mxu0 0.0
    %3414 = vmatpush1.msra.mxu0 0.0
    %3415 = vmatprep.subr.mxu0 0.0
    %3416 = vmatpush1.msra.mxu0 0.0
    %3417 = vmatprep.mubr.f32.mxu0 0.0
    %3418 = vmatmul.mubr.f32.gmra.mrb[0].mxu0 %v3342
    %v3419 = vpop.f32.mrb[0].mxu0
    %v3420 = vadd.f32 0.0, %v3419
    %v3421 = vpop.f32.mrb[0].mxu0
    %3422 = vmatprep.mubr.f32.mxu0 0.0
    %3423 = vmatmul.mubr.f32.gmra.mrb[0].mxu0 %v3345
    %v3424 = vpop.f32.mrb[0].mxu0
    %v3425 = vadd.f32 0.0, %v3424
    %v3426 = vpop.f32.mrb[0].mxu0
    %3427 = vmatprep.mubr.f32.mxu0 0.0
    %3428 = vmatmul.mubr.f32.gmra.mrb[0].mxu0 %v3348
    %v3429 = vpop.f32.mrb[0].mxu0
    %v3430 = vadd.f32 0.0, %v3429
    %v3431 = vpop.f32.mrb[0].mxu0
    %3432 = vmatprep.mubr.f32.mxu0 0.0
    %3433 = vmatmul.mubr.f32.gmra.mrb[0].mxu0 %v3351
    %v3434 = vpop.f32.mrb[0].mxu0
    %v3435 = vadd.f32 0.0, %v3434
    %v3436 = vpop.f32.mrb[0].mxu0
    %3437 = vdwg.mxu0
    %s3438 = scalar_lea.vmem %s13, 32
    %v3439 = vld [vmem:[%s3438] sm:$0xff]
    %v3440 = vld [vmem:[%s3438 + $0x8] sm:$0xff]
    %v3441 = vld [vmem:[%s3438 + $0x10] sm:$0xff]
    %v3442 = vld [vmem:[%s3438 + $0x18] sm:$0xff]
    %v3444 = vsel %vm3340, %v3439, 0
    %v3447 = vsel %vm3340, %v3440, 0
    %v3450 = vsel %vm3340, %v3441, 0
    %v3453 = vsel %vm3340, %v3442, 0
    %3455 = vmatprep.subr.mxu0 0.0
    %3456 = vmatpush1.msra.mxu0 %v3332
    %3457 = vmatprep.subr.mxu0 0.0
    %3458 = vmatpush1.msra.mxu0 %v3333
    %3459 = vmatprep.subr.mxu0 0.0
    %3460 = vmatpush1.msra.mxu0 %v3334
    %3461 = vmatprep.subr.mxu0 0.0
    %3462 = vmatpush1.msra.mxu0 %v3335
    %3463 = vmatprep.subr.mxu0 0.0
    %3464 = vmatpush1.msra.mxu0 0.0
    %3465 = vmatprep.subr.mxu0 0.0
    %3466 = vmatpush1.msra.mxu0 0.0
    %3467 = vmatprep.subr.mxu0 0.0
    %3468 = vmatpush1.msra.mxu0 0.0
    %3469 = vmatprep.subr.mxu0 0.0
    %3470 = vmatpush1.msra.mxu0 0.0
    %3471 = vmatprep.subr.mxu0 0.0
    %3472 = vmatpush1.msra.mxu0 0.0
    %3473 = vmatprep.subr.mxu0 0.0
    %3474 = vmatpush1.msra.mxu0 0.0
    %3475 = vmatprep.subr.mxu0 0.0
    %3476 = vmatpush1.msra.mxu0 0.0
    %3477 = vmatprep.subr.mxu0 0.0
    %3478 = vmatpush1.msra.mxu0 0.0
    %3479 = vmatprep.subr.mxu0 0.0
    %3480 = vmatpush1.msra.mxu0 0.0
    %3481 = vmatprep.subr.mxu0 0.0
    %3482 = vmatpush1.msra.mxu0 0.0
    %3483 = vmatprep.subr.mxu0 0.0
    %3484 = vmatpush1.msra.mxu0 0.0
    %3485 = vmatprep.subr.mxu0 0.0
    %3486 = vmatpush1.msra.mxu0 0.0
    %3487 = vmatprep.subr.mxu0 0.0
    %3488 = vmatpush1.msra.mxu0 0.0
    %3489 = vmatprep.subr.mxu0 0.0
    %3490 = vmatpush1.msra.mxu0 0.0
    %3491 = vmatprep.subr.mxu0 0.0
    %3492 = vmatpush1.msra.mxu0 0.0
    %3493 = vmatprep.subr.mxu0 0.0
    %3494 = vmatpush1.msra.mxu0 0.0
    %3495 = vmatprep.subr.mxu0 0.0
    %3496 = vmatpush1.msra.mxu0 0.0
    %3497 = vmatprep.subr.mxu0 0.0
    %3498 = vmatpush1.msra.mxu0 0.0
    %3499 = vmatprep.subr.mxu0 0.0
    %3500 = vmatpush1.msra.mxu0 0.0
    %3501 = vmatprep.subr.mxu0 0.0
    %3502 = vmatpush1.msra.mxu0 0.0
    %3503 = vmatprep.subr.mxu0 0.0
    %3504 = vmatpush1.msra.mxu0 0.0
    %3505 = vmatprep.subr.mxu0 0.0
    %3506 = vmatpush1.msra.mxu0 0.0
    %3507 = vmatprep.subr.mxu0 0.0
    %3508 = vmatpush1.msra.mxu0 0.0
    %3509 = vmatprep.subr.mxu0 0.0
    %3510 = vmatpush1.msra.mxu0 0.0
    %3511 = vmatprep.subr.mxu0 0.0
    %3512 = vmatpush1.msra.mxu0 0.0
    %3513 = vmatprep.subr.mxu0 0.0
    %3514 = vmatpush1.msra.mxu0 0.0
    %3515 = vmatprep.subr.mxu0 0.0
    %3516 = vmatpush1.msra.mxu0 0.0
    %3517 = vmatprep.subr.mxu0 0.0
    %3518 = vmatpush1.msra.mxu0 0.0
    %3519 = vmatprep.mubr.f32.mxu0 0.0
    %3520 = vmatmul.mubr.f32.gmra.mrb[0].mxu0 %v3444
    %v3521 = vpop.f32.mrb[0].mxu0
    %v3522 = vadd.f32 0.0, %v3521
    %v3523 = vpop.f32.mrb[0].mxu0
    %3524 = vmatprep.mubr.f32.mxu0 0.0
    %3525 = vmatmul.mubr.f32.gmra.mrb[0].mxu0 %v3447
    %v3526 = vpop.f32.mrb[0].mxu0
    %v3527 = vadd.f32 0.0, %v3526
    %v3528 = vpop.f32.mrb[0].mxu0
    %3529 = vmatprep.mubr.f32.mxu0 0.0
    %3530 = vmatmul.mubr.f32.gmra.mrb[0].mxu0 %v3450
    %v3531 = vpop.f32.mrb[0].mxu0
    %v3532 = vadd.f32 0.0, %v3531
    %v3533 = vpop.f32.mrb[0].mxu0
    %3534 = vmatprep.mubr.f32.mxu0 0.0
    %3535 = vmatmul.mubr.f32.gmra.mrb[0].mxu0 %v3453
    %v3536 = vpop.f32.mrb[0].mxu0
    %v3537 = vadd.f32 0.0, %v3536
    %v3538 = vpop.f32.mrb[0].mxu0
    %3539 = vdwg.mxu0
    %v3540 = vmax.f32 %v3420, %v3522
    %v3541 = vmax.f32 %v3425, %v3527
    %v3542 = vmax.f32 %v3430, %v3532
    %v3543 = vmax.f32 %v3435, %v3537
    %v3544 = vld [vmem:[#allocation8] sm:$0xff]
    %v3545 = vld [vmem:[#allocation8 + $0x8] sm:$0xff]
    %v3546 = vld [vmem:[#allocation8 + $0x10] sm:$0xff]
    %v3547 = vld [vmem:[#allocation8 + $0x18] sm:$0xff]
    %v3548 = vsub.f32 %v3544, %v3540
    %v3549 = vsub.f32 %v3545, %v3541
    %v3550 = vsub.f32 %v3546, %v3542
    %v3551 = vsub.f32 %v3547, %v3543
    %v3553 = vsel %vm3340, %v3110, 0
    %v3556 = vsel %vm3340, %v3115, 0
    %v3559 = vsel %vm3340, %v3120, 0
    %v3562 = vsel %vm3340, %v3125, 0
    %3564 = vmatprep.subr.mxu0 0.0
    %3565 = vmatpush1.msra.mxu0 %v3548
    %3566 = vmatprep.subr.mxu0 0.0
    %3567 = vmatpush1.msra.mxu0 %v3549
    %3568 = vmatprep.subr.mxu0 0.0
    %3569 = vmatpush1.msra.mxu0 %v3550
    %3570 = vmatprep.subr.mxu0 0.0
    %3571 = vmatpush1.msra.mxu0 %v3551
    %3572 = vmatprep.subr.mxu0 0.0
    %3573 = vmatpush1.msra.mxu0 0.0
    %3574 = vmatprep.subr.mxu0 0.0
    %3575 = vmatpush1.msra.mxu0 0.0
    %3576 = vmatprep.subr.mxu0 0.0
    %3577 = vmatpush1.msra.mxu0 0.0
    %3578 = vmatprep.subr.mxu0 0.0
    %3579 = vmatpush1.msra.mxu0 0.0
    %3580 = vmatprep.subr.mxu0 0.0
    %3581 = vmatpush1.msra.mxu0 0.0
    %3582 = vmatprep.subr.mxu0 0.0
    %3583 = vmatpush1.msra.mxu0 0.0
    %3584 = vmatprep.subr.mxu0 0.0
    %3585 = vmatpush1.msra.mxu0 0.0
    %3586 = vmatprep.subr.mxu0 0.0
    %3587 = vmatpush1.msra.mxu0 0.0
    %3588 = vmatprep.subr.mxu0 0.0
    %3589 = vmatpush1.msra.mxu0 0.0
    %3590 = vmatprep.subr.mxu0 0.0
    %3591 = vmatpush1.msra.mxu0 0.0
    %3592 = vmatprep.subr.mxu0 0.0
    %3593 = vmatpush1.msra.mxu0 0.0
    %3594 = vmatprep.subr.mxu0 0.0
    %3595 = vmatpush1.msra.mxu0 0.0
    %3596 = vmatprep.subr.mxu0 0.0
    %3597 = vmatpush1.msra.mxu0 0.0
    %3598 = vmatprep.subr.mxu0 0.0
    %3599 = vmatpush1.msra.mxu0 0.0
    %3600 = vmatprep.subr.mxu0 0.0
    %3601 = vmatpush1.msra.mxu0 0.0
    %3602 = vmatprep.subr.mxu0 0.0
    %3603 = vmatpush1.msra.mxu0 0.0
    %3604 = vmatprep.subr.mxu0 0.0
    %3605 = vmatpush1.msra.mxu0 0.0
    %3606 = vmatprep.subr.mxu0 0.0
    %3607 = vmatpush1.msra.mxu0 0.0
    %3608 = vmatprep.subr.mxu0 0.0
    %3609 = vmatpush1.msra.mxu0 0.0
    %3610 = vmatprep.subr.mxu0 0.0
    %3611 = vmatpush1.msra.mxu0 0.0
    %3612 = vmatprep.subr.mxu0 0.0
    %3613 = vmatpush1.msra.mxu0 0.0
    %3614 = vmatprep.subr.mxu0 0.0
    %3615 = vmatpush1.msra.mxu0 0.0
    %3616 = vmatprep.subr.mxu0 0.0
    %3617 = vmatpush1.msra.mxu0 0.0
    %3618 = vmatprep.subr.mxu0 0.0
    %3619 = vmatpush1.msra.mxu0 0.0
    %3620 = vmatprep.subr.mxu0 0.0
    %3621 = vmatpush1.msra.mxu0 0.0
    %3622 = vmatprep.subr.mxu0 0.0
    %3623 = vmatpush1.msra.mxu0 0.0
    %3624 = vmatprep.subr.mxu0 0.0
    %3625 = vmatpush1.msra.mxu0 0.0
    %3626 = vmatprep.subr.mxu0 0.0
    %3627 = vmatpush1.msra.mxu0 0.0
    %3628 = vmatprep.mubr.f32.mxu0 0.0
    %3629 = vmatmul.mubr.f32.gmra.mrb[0].mxu0 %v3553
    %v3630 = vpop.f32.mrb[0].mxu0
    %v3631 = vadd.f32 0.0, %v3630
    %v3632 = vpop.f32.mrb[0].mxu0
    %3633 = vmatprep.mubr.f32.mxu0 0.0
    %3634 = vmatmul.mubr.f32.gmra.mrb[0].mxu0 %v3556
    %v3635 = vpop.f32.mrb[0].mxu0
    %v3636 = vadd.f32 0.0, %v3635
    %v3637 = vpop.f32.mrb[0].mxu0
    %3638 = vmatprep.mubr.f32.mxu0 0.0
    %3639 = vmatmul.mubr.f32.gmra.mrb[0].mxu0 %v3559
    %v3640 = vpop.f32.mrb[0].mxu0
    %v3641 = vadd.f32 0.0, %v3640
    %v3642 = vpop.f32.mrb[0].mxu0
    %3643 = vmatprep.mubr.f32.mxu0 0.0
    %3644 = vmatmul.mubr.f32.gmra.mrb[0].mxu0 %v3562
    %v3645 = vpop.f32.mrb[0].mxu0
    %v3646 = vadd.f32 0.0, %v3645
    %v3647 = vpop.f32.mrb[0].mxu0
    %3648 = vdwg.mxu0
    %v3649 = vadd.f32 %v3128, %v3631
    %v3650 = vadd.f32 %v3129, %v3636
    %v3651 = vadd.f32 %v3130, %v3641
    %v3652 = vadd.f32 %v3131, %v3646
    %3653 = vst.msk [vmem:[#allocation11] sm:$0xff] %vm3140, %v3649
    %3654 = vst.msk [vmem:[#allocation11 + $0x8] sm:$0xff] %vm3140, %v3650
    %3655 = vst.msk [vmem:[#allocation11 + $0x10] sm:$0xff] %vm3140, %v3651
    %3656 = vst.msk [vmem:[#allocation11 + $0x18] sm:$0xff] %vm3140, %v3652
    // Predicated region
    $region74: #{tpu_custom_call.1} parent=1 // pred_check
      _
    $region75: #{tpu_custom_call.1} parent=1 // pred_check_branch
      %3658 = sbr.rel (0) target = $region77
    $region76: #{tpu_custom_call.1} parent=1 // pred_region
      %s3660 = ssub.s32 512, 512
      %3661 = vsyncadd [#allocation5], %s3660
      %s3662 = sshll.u32 [#allocation11], 4
      %s3663 = int_to_ptr.vmem [resolvable:$true] %s3662
      %3668 = dma.vmem_to_hbm [thread:$0]  %s3663, 512, %s14, [#allocation5], 128, 128, 8
    $region77: #{tpu_custom_call.1} parent=1 // pred_fallthru
      _
    // Predicated region
    $region78: #{tpu_custom_call.1} parent=1 // pred_check
      _
    $region79: #{tpu_custom_call.1} parent=1 // pred_check_branch
      %3670 = sbr.rel (0) target = $region81
    $region80: #{tpu_custom_call.1} parent=1 // pred_region
      %3671 = dma.done [#allocation5], 512
    $region81: #{tpu_custom_call.1} parent=1 // pred_fallthru
      _
    %3672 = vsyncpa [#allocation4], 1
    %3673 = vsyncpa [#allocation7], 1
    %3674 = vsyncpa [#allocation10], 1
    %3675 = vsyncpa [#allocation5], 1

</llo_original>
